<compile_context>
chip_gen: v7x
topology: tpu7x:2x2x1
jax: 0.10.0
libtpu: 0.0.40
codegen_flags: <defaults>
</compile_context>

<pallas_src>
import jax
import jax.numpy as jnp
from jax import lax
from jax.experimental import pallas as pl
from jax.experimental.pallas import tpu as pltpu


ACOUSTIC_DIM = 2048
SEMANTIC_DIM = 768
PROJ_DIM = 512
FUSE_DIM = 2 * PROJ_DIM  # 1024
CLASSES = 2


def _fuse_orth_kernel(a_ref, s_ref, wa_ref, ws_ref, wc_ref, bc_ref,
                      logits_ref, loss_ref):
    """Fusion head of Fuse_Learning_Orth — single block, no K tiling.

    a_ref   : (B, 2048)    f32  acoustic embedding (Cnn14 output)
    s_ref   : (B, 768)     f32  semantic CLS hidden state (RoBERTa output, pos 0)
    wa_ref  : (2048, 512)  bf16 acoustic_linear.weight.T  (bias=False)
    ws_ref  : (768, 512)   bf16 semantic_linear.weight.T  (bias=False)
    wc_ref  : (1024, C)    bf16 classifier.weight.T
    bc_ref  : (1, C)       f32  classifier.bias
    logits  : (B, C)       f32
    loss    : (1, 1)       f32  scalar orth loss in SMEM
    """
    # In-kernel bf16 cast (VPU) -> native bf16 x bf16 -> f32 MXU projections.
    a = a_ref[...].astype(jnp.bfloat16)                       # (B, 2048)
    s = s_ref[...].astype(jnp.bfloat16)                       # (B, 768)
    acoustic = jnp.dot(a, wa_ref[...],
                       preferred_element_type=jnp.float32)    # (B, 512) f32
    semantic = jnp.dot(s, ws_ref[...],
                       preferred_element_type=jnp.float32)    # (B, 512) f32

    # orth_0 = diag(A @ S^T) == rowwise dot; orth_1/2 = row L2 norms.
    dot_as = jnp.sum(acoustic * semantic, axis=1, keepdims=True)   # (B, 1)
    sq_a = jnp.sum(acoustic * acoustic, axis=1, keepdims=True)     # (B, 1)
    sq_s = jnp.sum(semantic * semantic, axis=1, keepdims=True)     # (B, 1)
    # sum(|cos|) with a single EUP rsqrt instead of 2x sqrt + divide.
    loss_ref[0, 0] = jnp.sum(jnp.abs(dot_as) * lax.rsqrt(sq_a * sq_s))

    # fuse = concat([semantic, acoustic], -1); logits = fuse @ Wc^T + bc.
    # Split the classifier weight instead of materializing the concat, and
    # keep the matmul in bf16 (single-pass MXU) with f32 accumulation.
    sem_bf = semantic.astype(jnp.bfloat16)
    acu_bf = acoustic.astype(jnp.bfloat16)
    logits = (jnp.dot(sem_bf, wc_ref[:PROJ_DIM, :],
                      preferred_element_type=jnp.float32)
              + jnp.dot(acu_bf, wc_ref[PROJ_DIM:, :],
                        preferred_element_type=jnp.float32)
              + bc_ref[...])
    logits_ref[...] = logits.astype(logits_ref.dtype)


def prepare_params(w_acoustic, w_semantic, w_classifier, b_classifier):
    """One-time parameter prep (hoisted out of the per-call path):
    PyTorch nn.Linear (out, in) -> MXU-friendly (in, out), stored in bf16."""
    return {
        "wa_t": jnp.transpose(w_acoustic).astype(jnp.bfloat16),    # (2048, 512)
        "ws_t": jnp.transpose(w_semantic).astype(jnp.bfloat16),    # (768, 512)
        "wc_t": jnp.transpose(w_classifier).astype(jnp.bfloat16),  # (1024, C)
        "bc": b_classifier.reshape(1, CLASSES).astype(jnp.float32),
    }


def fuse_learning_orth_head(acoustic_feat, semantic_hidden, params):
    """Mirrors Fuse_Learning_Orth.forward after the backbones.

    acoustic_feat   : (B, 2048)    'embedding' from Cnn14 (f32)
    semantic_hidden : (B, S, 768)  last_hidden_state from RoBERTa (f32)
    params          : dict from prepare_params() (pre-transposed bf16 weights)
    """
    B = acoustic_feat.shape[0]

    # semantic_linear is position-wise, so slicing CLS before projecting is
    # exact. The bf16 cast happens inside the kernel.
    a_in = acoustic_feat.astype(jnp.float32)                     # (B, 2048)
    s_cls = semantic_hidden[:, 0, :].astype(jnp.float32)         # (B, 768)

    logits, loss = pl.pallas_call(
        _fuse_orth_kernel,
        out_shape=(
            jax.ShapeDtypeStruct((B, CLASSES), jnp.float32),
            jax.ShapeDtypeStruct((1, 1), jnp.float32),
        ),
        grid_spec=pltpu.PrefetchScalarGridSpec(
            num_scalar_prefetch=0,
            grid=(1,),
            in_specs=[
                pl.BlockSpec((B, ACOUSTIC_DIM), lambda k: (0, 0)),        # a_feat
                pl.BlockSpec((B, SEMANTIC_DIM), lambda k: (0, 0)),        # s_cls
                pl.BlockSpec((ACOUSTIC_DIM, PROJ_DIM), lambda k: (0, 0)), # wa_t
                pl.BlockSpec((SEMANTIC_DIM, PROJ_DIM), lambda k: (0, 0)), # ws_t
                pl.BlockSpec((FUSE_DIM, CLASSES), lambda k: (0, 0)),      # wc_t
                pl.BlockSpec((1, CLASSES), lambda k: (0, 0)),             # bc
            ],
            out_specs=[
                pl.BlockSpec((B, CLASSES), lambda k: (0, 0)),             # logits
                pl.BlockSpec(memory_space=pltpu.MemorySpace.SMEM),        # loss
            ],
        ),
        compiler_params=pltpu.CompilerParams(
            dimension_semantics=("arbitrary",),
            vmem_limit_bytes=12 * 1024 * 1024,
        ),
    )(a_in, s_cls, params["wa_t"], params["ws_t"], params["wc_t"], params["bc"])

    return logits, loss[0, 0]


def _reference_bf16(acoustic_feat, semantic_hidden, w_a, w_s, w_c, b_c):
    """Pure-JAX reference with the same bf16 quantization the kernel uses
    (bf16 weights/activations, f32 accumulation; orth loss from f32 projections;
    classifier fed bf16 projections)."""
    a_in = acoustic_feat.astype(jnp.bfloat16)
    s_in = semantic_hidden[:, 0, :].astype(jnp.bfloat16)
    a = jnp.dot(a_in, w_a.T.astype(jnp.bfloat16),
                preferred_element_type=jnp.float32)              # (B, 512)
    s = jnp.dot(s_in, w_s.T.astype(jnp.bfloat16),
                preferred_element_type=jnp.float32)              # (B, 512)
    orth_0 = jnp.sum(a * s, axis=1)
    orth_1 = jnp.sqrt(jnp.sum(a ** 2, axis=1))
    orth_2 = jnp.sqrt(jnp.sum(s ** 2, axis=1))
    orth_loss = jnp.sum(jnp.abs(orth_0 / (orth_1 * orth_2)))
    fuse = jnp.concatenate([s, a], axis=-1).astype(jnp.bfloat16)
    logits = jnp.dot(fuse, w_c.T.astype(jnp.bfloat16),
                     preferred_element_type=jnp.float32) + b_c
    return logits, orth_loss


def _reference_f32(acoustic_feat, semantic_hidden, w_a, w_s, w_c, b_c):
    """Full-precision reference of the PyTorch forward (post-backbone)."""
    a = acoustic_feat @ w_a.T
    s = (semantic_hidden @ w_s.T)[:, 0, :]
    orth_0 = jnp.diag(a @ s.T)
    orth_1 = jnp.sqrt(jnp.sum(a ** 2, axis=1))
    orth_2 = jnp.sqrt(jnp.sum(s ** 2, axis=1))
    orth_loss = jnp.sum(jnp.abs(orth_0 / (orth_1 * orth_2)))
    fuse = jnp.concatenate([s, a], axis=-1)
    logits = fuse @ w_c.T + b_c
    return logits, orth_loss


if __name__ == "__main__":
    key = jax.random.PRNGKey(0)
    k_a, k_h, k_wa, k_ws, k_wc, k_bc = jax.random.split(key, 6)

    B, SEQ = 2, 8  # small test shapes

    # Synthetic backbone outputs (stand-ins for Cnn14 / RoBERTa features).
    acoustic_feat = jax.random.normal(k_a, (B, ACOUSTIC_DIM), jnp.float32)
    semantic_hidden = jax.random.normal(k_h, (B, SEQ, SEMANTIC_DIM), jnp.float32)

    # Deterministic parameter init (shapes from the module's __init__).
    w_acoustic = 0.02 * jax.random.normal(k_wa, (PROJ_DIM, ACOUSTIC_DIM), jnp.float32)
    w_semantic = 0.02 * jax.random.normal(k_ws, (PROJ_DIM, SEMANTIC_DIM), jnp.float32)
    w_classifier = 0.02 * jax.random.normal(k_wc, (CLASSES, FUSE_DIM), jnp.float32)
    b_classifier = 0.02 * jax.random.normal(k_bc, (CLASSES,), jnp.float32)

    # One-time weight prep (transpose + bf16) — hoisted out of the call path.
    params = prepare_params(w_acoustic, w_semantic, w_classifier, b_classifier)
    params = jax.tree_util.tree_map(jax.block_until_ready, params)

    logits, orth_loss = fuse_learning_orth_head(
        acoustic_feat, semantic_hidden, params)
    jax.block_until_ready((logits, orth_loss))

    # Tight check vs a reference using the same bf16 quantization.
    ref_logits, ref_loss = _reference_bf16(
        acoustic_feat, semantic_hidden,
        w_acoustic, w_semantic, w_classifier, b_classifier)
    assert logits.shape == (B, CLASSES)
    assert jnp.allclose(logits, ref_logits, atol=2e-3, rtol=2e-3)
    assert jnp.allclose(orth_loss, ref_loss, atol=1e-3, rtol=1e-3)

    # Loose check vs the full-f32 PyTorch-equivalent forward (bf16 weight error).
    f32_logits, f32_loss = _reference_f32(
        acoustic_feat, semantic_hidden,
        w_acoustic, w_semantic, w_classifier, b_classifier)
    assert jnp.allclose(logits, f32_logits, atol=5e-2, rtol=5e-2)
    assert jnp.allclose(orth_loss, f32_loss, atol=5e-2, rtol=5e-2)

    print("KERNEL_OK")
</pallas_src>

<mosaic_0001>
module attributes {stable_mosaic.version = 11 : i64} {
  func.func @_fuse_orth_kernel(%arg0: i32, %arg1: memref<2x2048xf32, #tpu.memory_space<vmem>>, %arg2: memref<2x768xf32, #tpu.memory_space<vmem>>, %arg3: memref<2048x512xbf16, #tpu.memory_space<vmem>>, %arg4: memref<768x512xbf16, #tpu.memory_space<vmem>>, %arg5: memref<1024x2xbf16, #tpu.memory_space<vmem>>, %arg6: memref<1x2xf32, #tpu.memory_space<vmem>>, %arg7: memref<2x2xf32, #tpu.memory_space<vmem>>, %arg8: memref<1x1xf32, #tpu.memory_space<smem>>) attributes {dimension_semantics = [#tpu.dimension_semantics<arbitrary>], iteration_bounds = array<i64: 1>, scalar_prefetch = 0 : i64, scratch_operands = 0 : i64, tpu.core_type = #tpu.core_type<tc>, window_params = [{pipeline_mode = #tpu.pipeline_mode<synchronous>, transform_indices = @transform_0, window_bounds = array<i64: 2, 2048>}, {pipeline_mode = #tpu.pipeline_mode<synchronous>, transform_indices = @transform_1, window_bounds = array<i64: 2, 768>}, {pipeline_mode = #tpu.pipeline_mode<synchronous>, transform_indices = @transform_2, window_bounds = array<i64: 2048, 512>}, {pipeline_mode = #tpu.pipeline_mode<synchronous>, transform_indices = @transform_3, window_bounds = array<i64: 768, 512>}, {pipeline_mode = #tpu.pipeline_mode<synchronous>, transform_indices = @transform_4, window_bounds = array<i64: 1024, 2>}, {pipeline_mode = #tpu.pipeline_mode<synchronous>, transform_indices = @transform_5, window_bounds = array<i64: 1, 2>}, {pipeline_mode = #tpu.pipeline_mode<synchronous>, transform_indices = @transform_6, window_bounds = array<i64: 2, 2>}, {transform_indices = @transform_7, window_bounds = array<i64: 1, 1>}]} {
    %c0 = arith.constant 0 : index
    %c0_0 = arith.constant 0 : index
    %0 = vector.load %arg1[%c0, %c0_0] : memref<2x2048xf32, #tpu.memory_space<vmem>>, vector<2x2048xf32>
    %1 = arith.truncf %0 : vector<2x2048xf32> to vector<2x2048xbf16>
    %c0_1 = arith.constant 0 : index
    %c0_2 = arith.constant 0 : index
    %2 = vector.load %arg2[%c0_1, %c0_2] : memref<2x768xf32, #tpu.memory_space<vmem>>, vector<2x768xf32>
    %3 = arith.truncf %2 : vector<2x768xf32> to vector<2x768xbf16>
    %c0_3 = arith.constant 0 : index
    %c0_4 = arith.constant 0 : index
    %4 = vector.load %arg3[%c0_3, %c0_4] : memref<2048x512xbf16, #tpu.memory_space<vmem>>, vector<2048x512xbf16>
    %cst = arith.constant dense<0.000000e+00> : vector<2x512xf32>
    %5 = tpu.matmul %1, %4, %cst {dimension_numbers = #tpu.dot_dimension_numbers<[1], [0], [0], [1], [0, 0, 1, 1], [], []>} : vector<2x2048xbf16>, vector<2048x512xbf16>, vector<2x512xf32> -> vector<2x512xf32>
    %c0_5 = arith.constant 0 : index
    %c0_6 = arith.constant 0 : index
    %6 = vector.load %arg4[%c0_5, %c0_6] : memref<768x512xbf16, #tpu.memory_space<vmem>>, vector<768x512xbf16>
    %cst_7 = arith.constant dense<0.000000e+00> : vector<2x512xf32>
    %7 = tpu.matmul %3, %6, %cst_7 {dimension_numbers = #tpu.dot_dimension_numbers<[1], [0], [0], [1], [0, 0, 1, 1], [], []>} : vector<2x768xbf16>, vector<768x512xbf16>, vector<2x512xf32> -> vector<2x512xf32>
    %8 = arith.mulf %5, %7 : vector<2x512xf32>
    %cst_8 = arith.constant dense<0.000000e+00> : vector<2xf32>
    %9 = vector.multi_reduction <add>, %8, %cst_8 [1] : vector<2x512xf32> to vector<2xf32>
    %10 = vector.shape_cast %9 : vector<2xf32> to vector<2x1xf32>
    %11 = arith.mulf %5, %5 : vector<2x512xf32>
    %cst_9 = arith.constant dense<0.000000e+00> : vector<2xf32>
    %12 = vector.multi_reduction <add>, %11, %cst_9 [1] : vector<2x512xf32> to vector<2xf32>
    %13 = vector.shape_cast %12 : vector<2xf32> to vector<2x1xf32>
    %14 = arith.mulf %7, %7 : vector<2x512xf32>
    %cst_10 = arith.constant dense<0.000000e+00> : vector<2xf32>
    %15 = vector.multi_reduction <add>, %14, %cst_10 [1] : vector<2x512xf32> to vector<2xf32>
    %16 = vector.shape_cast %15 : vector<2xf32> to vector<2x1xf32>
    %17 = math.absf %10 : vector<2x1xf32>
    %18 = arith.mulf %13, %16 : vector<2x1xf32>
    %19 = math.rsqrt %18 : vector<2x1xf32>
    %20 = arith.mulf %17, %19 : vector<2x1xf32>
    %21 = vector.shape_cast %20 : vector<2x1xf32> to vector<1x2x1xf32>
    %cst_11 = arith.constant dense<0.000000e+00> : vector<1xf32>
    %22 = vector.multi_reduction <add>, %21, %cst_11 [1, 2] : vector<1x2x1xf32> to vector<1xf32>
    %23 = vector.shape_cast %22 : vector<1xf32> to vector<1x1x1xf32>
    %24 = vector.extract %23[0, 0, 0] : f32 from vector<1x1x1xf32>
    %c0_12 = arith.constant 0 : index
    %c0_13 = arith.constant 0 : index
    %25 = memref.load %arg8[%c0_12, %c0_13] : memref<1x1xf32, #tpu.memory_space<smem>>
    memref.store %24, %arg8[%c0_12, %c0_13] : memref<1x1xf32, #tpu.memory_space<smem>>
    %26 = arith.truncf %7 : vector<2x512xf32> to vector<2x512xbf16>
    %27 = arith.truncf %5 : vector<2x512xf32> to vector<2x512xbf16>
    %c0_14 = arith.constant 0 : index
    %c0_15 = arith.constant 0 : index
    %28 = vector.load %arg5[%c0_14, %c0_15] : memref<1024x2xbf16, #tpu.memory_space<vmem>>, vector<512x2xbf16>
    %cst_16 = arith.constant dense<0.000000e+00> : vector<2x2xf32>
    %29 = tpu.matmul %26, %28, %cst_16 {dimension_numbers = #tpu.dot_dimension_numbers<[1], [0], [0], [1], [0, 0, 1, 1], [], []>} : vector<2x512xbf16>, vector<512x2xbf16>, vector<2x2xf32> -> vector<2x2xf32>
    %c512 = arith.constant 512 : index
    %c0_17 = arith.constant 0 : index
    %30 = vector.load %arg5[%c512, %c0_17] : memref<1024x2xbf16, #tpu.memory_space<vmem>>, vector<512x2xbf16>
    %cst_18 = arith.constant dense<0.000000e+00> : vector<2x2xf32>
    %31 = tpu.matmul %27, %30, %cst_18 {dimension_numbers = #tpu.dot_dimension_numbers<[1], [0], [0], [1], [0, 0, 1, 1], [], []>} : vector<2x512xbf16>, vector<512x2xbf16>, vector<2x2xf32> -> vector<2x2xf32>
    %32 = arith.addf %29, %31 : vector<2x2xf32>
    %c0_19 = arith.constant 0 : index
    %c0_20 = arith.constant 0 : index
    %33 = vector.load %arg6[%c0_19, %c0_20] : memref<1x2xf32, #tpu.memory_space<vmem>>, vector<1x2xf32>
    %34 = vector.broadcast %33 : vector<1x2xf32> to vector<2x2xf32>
    %35 = arith.addf %32, %34 : vector<2x2xf32>
    %c0_21 = arith.constant 0 : index
    %c0_22 = arith.constant 0 : index
    %36 = vector.load %arg7[%c0_21, %c0_22] : memref<2x2xf32, #tpu.memory_space<vmem>>, vector<2x2xf32>
    tpu.vector_store %arg7[%c0_21, %c0_22], %35 {strides = array<i32>} : memref<2x2xf32, #tpu.memory_space<vmem>>, vector<2x2xf32>,
    return
  }
  func.func @transform_0(%arg0: i32) -> (i32, i32) {
    %c0_i32 = arith.constant 0 : i32
    %c0_i32_0 = arith.constant 0 : i32
    %c0_i32_1 = arith.constant 0 : i32
    return %c0_i32, %c0_i32_0 : i32, i32
  }
  func.func @transform_1(%arg0: i32) -> (i32, i32) {
    %c0_i32 = arith.constant 0 : i32
    %c0_i32_0 = arith.constant 0 : i32
    %c0_i32_1 = arith.constant 0 : i32
    return %c0_i32, %c0_i32_0 : i32, i32
  }
  func.func @transform_2(%arg0: i32) -> (i32, i32) {
    %c0_i32 = arith.constant 0 : i32
    %c0_i32_0 = arith.constant 0 : i32
    %c0_i32_1 = arith.constant 0 : i32
    return %c0_i32, %c0_i32_0 : i32, i32
  }
  func.func @transform_3(%arg0: i32) -> (i32, i32) {
    %c0_i32 = arith.constant 0 : i32
    %c0_i32_0 = arith.constant 0 : i32
    %c0_i32_1 = arith.constant 0 : i32
    return %c0_i32, %c0_i32_0 : i32, i32
  }
  func.func @transform_4(%arg0: i32) -> (i32, i32) {
    %c0_i32 = arith.constant 0 : i32
    %c0_i32_0 = arith.constant 0 : i32
    %c0_i32_1 = arith.constant 0 : i32
    return %c0_i32, %c0_i32_0 : i32, i32
  }
  func.func @transform_5(%arg0: i32) -> (i32, i32) {
    %c0_i32 = arith.constant 0 : i32
    %c0_i32_0 = arith.constant 0 : i32
    %c0_i32_1 = arith.constant 0 : i32
    return %c0_i32, %c0_i32_0 : i32, i32
  }
  func.func @transform_6(%arg0: i32) -> (i32, i32) {
    %c0_i32 = arith.constant 0 : i32
    %c0_i32_0 = arith.constant 0 : i32
    %c0_i32_1 = arith.constant 0 : i32
    return %c0_i32, %c0_i32_0 : i32, i32
  }
  func.func @transform_7(%arg0: i32) -> (i32, i32) {
    %c0_i32 = arith.constant 0 : i32
    %c0_i32_0 = arith.constant 0 : i32
    %c0_i32_1 = arith.constant 0 : i32
    return %c0_i32, %c0_i32_0 : i32, i32
  }
}

</mosaic_0001>

<llo_original>
// kernel: tpu_custom_call.1
$region0: #{tpu_custom_call.1}
  #allocation0 [shape = 'u32[]', space=smem, size = 0x4, offset = 0x4, fixed_abs, tag = 'smem constant byte address 0x4 - core index']
  #allocation1 [shape = 'u32[144,128]{1,0:T(1,128)}', space=vmem, size = 0x12000, scoped, tag = 'internal scratch']
  %s0 = inlined_call_operand.hbm [shape: f32[2,2048], index: 0, kind: input, shape index: {}]
  %s1 = inlined_call_operand.hbm [shape: f32[2,768], index: 1, kind: input, shape index: {}]
  %s2 = inlined_call_operand.hbm [shape: bf16[2048,512], index: 2, kind: input, shape index: {}]
  %s3 = inlined_call_operand.hbm [shape: bf16[768,512], index: 3, kind: input, shape index: {}]
  %s4 = inlined_call_operand.vmem [shape: bf16[1024,2], index: 4, kind: input, shape index: {}]
  %s5 = inlined_call_operand.hbm [shape: f32[1,2], index: 5, kind: input, shape index: {}]
  %s6 = inlined_call_operand.hbm [shape: f32[2,2], index: 6, kind: output, shape index: {0}]
  %s7 = inlined_call_operand.hbm [shape: f32[1,1], index: 7, kind: output, shape index: {1}]
  %8 = xla_tuple %s6, %s7
  %s9 = sld [smem:[#allocation0]]
  $region62: #{tpu_custom_call.1} parent=0
    _
  %s11 = ssub.s32 1, %s9
  %s12 = scalar_select 0, %s11, %s9
  $region1: #{tpu_custom_call.1} parent=0
    #allocation2 [shape = 'u8[16384]{0}', space=vmem, size = 0x4000, scoped, tag = 'input window, operand 0, single buffered']
    #allocation3 [shape = 's32[1]{0}', space=sflag, size = 0x4, scoped, tag = 'scoped memory for tpu_custom_call.1']
    #allocation4 [shape = 's32[1]{0}', space=sflag, size = 0x4, scoped, tag = 'scoped memory for tpu_custom_call.1']
    #allocation5 [shape = 's32[1]{0}', space=sflag, size = 0x4, scoped, tag = 'scoped memory for tpu_custom_call.1']
    #allocation6 [shape = 'u8[6144]{0}', space=vmem, size = 0x1800, scoped, tag = 'input window, operand 1, single buffered']
    #allocation7 [shape = 's32[1]{0}', space=sflag, size = 0x4, scoped, tag = 'scoped memory for tpu_custom_call.1']
    #allocation8 [shape = 'u8[2097152]{0}', space=vmem, size = 0x200000, scoped, tag = 'input window, operand 2, single buffered']
    #allocation9 [shape = 'u8[786432]{0}', space=vmem, size = 0xc0000, scoped, tag = 'input window, operand 3, single buffered']
    #allocation10 [shape = 's32[1]{0}', space=sflag, size = 0x4, scoped, tag = 'scoped memory for tpu_custom_call.1']
    #allocation11 [shape = 'u8[512]{0}', space=vmem, size = 0x400, scoped, tag = 'input window, operand 5, single buffered']
    #allocation12 [shape = 'u8[1024]{0}', space=vmem, size = 0x400, scoped, tag = 'output window, operand 0, single buffered']
    #allocation13 [shape = 'u8[512]{0}', space=smem, size = 0x200, scoped, tag = 'output window, operand 1, single buffered']
    %13 = vsyncpa [#allocation3], 0
    %14 = vsyncpa [#allocation7], 0
    %15 = vsyncpa [#allocation10], 0
    %16 = vsyncpa [#allocation4], 0
    %17 = vsyncpa [#allocation5], 0
    // Predicated region
    $region2: #{tpu_custom_call.1} parent=1 // pred_check
      _
    $region3: #{tpu_custom_call.1} parent=1 // pred_check_branch
      %19 = sbr.rel (0) target = $region5
    $region4: #{tpu_custom_call.1} parent=1 // pred_region
      %s21 = ssub.s32 512, 512
      %22 = vsyncadd [#allocation3], %s21
      %s24 = sshll.u32 [#allocation2], 4
      %s25 = int_to_ptr.vmem [resolvable:$true] %s24
      %27 = dma.hbm_to_vmem [thread:$0]  %s0, 512, %s25, [#allocation3]
    $region5: #{tpu_custom_call.1} parent=1 // pred_fallthru
      _
    // Predicated region
    $region6: #{tpu_custom_call.1} parent=1 // pred_check
      _
    $region7: #{tpu_custom_call.1} parent=1 // pred_check_branch
      %29 = sbr.rel (0) target = $region9
    $region8: #{tpu_custom_call.1} parent=1 // pred_region
      %s31 = ssub.s32 192, 192
      %32 = vsyncadd [#allocation7], %s31
      %s34 = sshll.u32 [#allocation6], 4
      %s35 = int_to_ptr.vmem [resolvable:$true] %s34
      %37 = dma.hbm_to_vmem [thread:$0]  %s1, 192, %s35, [#allocation7]
    $region9: #{tpu_custom_call.1} parent=1 // pred_fallthru
      _
    // Predicated region
    $region10: #{tpu_custom_call.1} parent=1 // pred_check
      _
    $region11: #{tpu_custom_call.1} parent=1 // pred_check_branch
      %39 = sbr.rel (0) target = $region13
    $region12: #{tpu_custom_call.1} parent=1 // pred_region
      %s41 = ssub.s32 65536, 65536
      %42 = vsyncadd [#allocation7], %s41
      %s43 = sshll.u32 [#allocation8], 4
      %s44 = int_to_ptr.vmem [resolvable:$true] %s43
      %49 = dma.hbm_to_vmem [thread:$0]  %s2, 65536, %s44, [#allocation7], 256, 256, 16
    $region13: #{tpu_custom_call.1} parent=1 // pred_fallthru
      _
    // Predicated region
    $region14: #{tpu_custom_call.1} parent=1 // pred_check
      _
    $region15: #{tpu_custom_call.1} parent=1 // pred_check_branch
      %51 = sbr.rel (0) target = $region17
    $region16: #{tpu_custom_call.1} parent=1 // pred_region
      %s53 = ssub.s32 24576, 24576
      %54 = vsyncadd [#allocation10], %s53
      %s55 = sshll.u32 [#allocation9], 4
      %s56 = int_to_ptr.vmem [resolvable:$true] %s55
      %61 = dma.hbm_to_vmem [thread:$0]  %s3, 24576, %s56, [#allocation10], 256, 256, 16
    $region17: #{tpu_custom_call.1} parent=1 // pred_fallthru
      _
    // Predicated region
    $region18: #{tpu_custom_call.1} parent=1 // pred_check
      _
    $region19: #{tpu_custom_call.1} parent=1 // pred_check_branch
      %63 = sbr.rel (0) target = $region21
    $region20: #{tpu_custom_call.1} parent=1 // pred_region
      _
    $region21: #{tpu_custom_call.1} parent=1 // pred_fallthru
      _
    // Predicated region
    $region22: #{tpu_custom_call.1} parent=1 // pred_check
      _
    $region23: #{tpu_custom_call.1} parent=1 // pred_check_branch
      %65 = sbr.rel (0) target = $region25
    $region24: #{tpu_custom_call.1} parent=1 // pred_region
      %s67 = ssub.s32 16, 16
      %68 = vsyncadd [#allocation10], %s67
      %s70 = sshll.u32 [#allocation11], 4
      %s71 = int_to_ptr.vmem [resolvable:$true] %s70
      %73 = dma.hbm_to_vmem [thread:$0]  %s5, 16, %s71, [#allocation10]
    $region25: #{tpu_custom_call.1} parent=1 // pred_fallthru
      _
    // Predicated region
    $region26: #{tpu_custom_call.1} parent=1 // pred_check
      _
    $region27: #{tpu_custom_call.1} parent=1 // pred_check_branch
      %75 = sbr.rel (0) target = $region29
    $region28: #{tpu_custom_call.1} parent=1 // pred_region
      %76 = dma.done [#allocation3], 512
    $region29: #{tpu_custom_call.1} parent=1 // pred_fallthru
      _
    // Predicated region
    $region30: #{tpu_custom_call.1} parent=1 // pred_check
      _
    $region31: #{tpu_custom_call.1} parent=1 // pred_check_branch
      %78 = sbr.rel (0) target = $region33
    $region32: #{tpu_custom_call.1} parent=1 // pred_region
      %79 = dma.done [#allocation7], 192
    $region33: #{tpu_custom_call.1} parent=1 // pred_fallthru
      _
    // Predicated region
    $region34: #{tpu_custom_call.1} parent=1 // pred_check
      _
    $region35: #{tpu_custom_call.1} parent=1 // pred_check_branch
      %81 = sbr.rel (0) target = $region37
    $region36: #{tpu_custom_call.1} parent=1 // pred_region
      %82 = dma.done [#allocation7], 65536
    $region37: #{tpu_custom_call.1} parent=1 // pred_fallthru
      _
    // Predicated region
    $region38: #{tpu_custom_call.1} parent=1 // pred_check
      _
    $region39: #{tpu_custom_call.1} parent=1 // pred_check_branch
      %84 = sbr.rel (0) target = $region41
    $region40: #{tpu_custom_call.1} parent=1 // pred_region
      %85 = dma.done [#allocation10], 24576
    $region41: #{tpu_custom_call.1} parent=1 // pred_fallthru
      _
    // Predicated region
    $region42: #{tpu_custom_call.1} parent=1 // pred_check
      _
    $region43: #{tpu_custom_call.1} parent=1 // pred_check_branch
      %87 = sbr.rel (0) target = $region45
    $region44: #{tpu_custom_call.1} parent=1 // pred_region
      %88 = dma.done [#allocation10], 16
    $region45: #{tpu_custom_call.1} parent=1 // pred_fallthru
      _
    %v90 = vld [vmem:[#allocation2] sm:$0xff]
    %v91 = vld [vmem:[#allocation2 + $0x8] sm:$0xff]
    %v92 = vld [vmem:[#allocation2 + $0x10] sm:$0xff]
    %v93 = vld [vmem:[#allocation2 + $0x18] sm:$0xff]
    %v98 = vcombine.high %v90, %v90
    %v100 = vunpack.c.l.s4 1983009808
    %v101 = vunpack.c.0.s8 %v100
    %v102 = vlaneseq
    %v103 = vshrl.u32 %v102, 7
    %v104 = vsub.s32 %v101, %v103
    %v105 = vrot.slane %v90, %v104
    %v107 = vunpack.c.l.s4 1983009808
    %v108 = vunpack.c.0.s8 %v107
    %v109 = vlaneseq
    %v110 = vshrl.u32 %v109, 7
    %v111 = vsub.s32 %v108, %v110
    %v112 = vrot.slane %v98, %v111
    %v113 = vcombine.high %v105, %v105
    %v114 = vcombine.high %v112, %v112
    %v115 = vcombine.high %v91, %v91
    %v117 = vunpack.c.l.s4 1983009808
    %v118 = vunpack.c.0.s8 %v117
    %v119 = vlaneseq
    %v120 = vshrl.u32 %v119, 7
    %v121 = vsub.s32 %v118, %v120
    %v122 = vrot.slane %v91, %v121
    %v124 = vunpack.c.l.s4 1983009808
    %v125 = vunpack.c.0.s8 %v124
    %v126 = vlaneseq
    %v127 = vshrl.u32 %v126, 7
    %v128 = vsub.s32 %v125, %v127
    %v129 = vrot.slane %v115, %v128
    %v130 = vcombine.high %v122, %v122
    %v131 = vcombine.high %v129, %v129
    %v132 = vcombine.high %v92, %v92
    %v134 = vunpack.c.l.s4 1983009808
    %v135 = vunpack.c.0.s8 %v134
    %v136 = vlaneseq
    %v137 = vshrl.u32 %v136, 7
    %v138 = vsub.s32 %v135, %v137
    %v139 = vrot.slane %v92, %v138
    %v141 = vunpack.c.l.s4 1983009808
    %v142 = vunpack.c.0.s8 %v141
    %v143 = vlaneseq
    %v144 = vshrl.u32 %v143, 7
    %v145 = vsub.s32 %v142, %v144
    %v146 = vrot.slane %v132, %v145
    %v147 = vcombine.high %v139, %v139
    %v148 = vcombine.high %v146, %v146
    %v149 = vcombine.high %v93, %v93
    %v151 = vunpack.c.l.s4 1983009808
    %v152 = vunpack.c.0.s8 %v151
    %v153 = vlaneseq
    %v154 = vshrl.u32 %v153, 7
    %v155 = vsub.s32 %v152, %v154
    %v156 = vrot.slane %v93, %v155
    %v158 = vunpack.c.l.s4 1983009808
    %v159 = vunpack.c.0.s8 %v158
    %v160 = vlaneseq
    %v161 = vshrl.u32 %v160, 7
    %v162 = vsub.s32 %v159, %v161
    %v163 = vrot.slane %v149, %v162
    %v164 = vcombine.high %v156, %v156
    %v165 = vcombine.high %v163, %v163
    %v182 = vpack.c.bf16 %v105, %v105
    %v183 = vpack.c.bf16 %v113, %v113
    %v184 = vpack.c.bf16 %v112, %v112
    %v185 = vpack.c.bf16 %v114, %v114
    %v186 = vpack.c.bf16 %v122, %v122
    %v187 = vpack.c.bf16 %v130, %v130
    %v188 = vpack.c.bf16 %v129, %v129
    %v189 = vpack.c.bf16 %v131, %v131
    %v190 = vpack.c.bf16 %v139, %v139
    %v191 = vpack.c.bf16 %v147, %v147
    %v192 = vpack.c.bf16 %v146, %v146
    %v193 = vpack.c.bf16 %v148, %v148
    %v194 = vpack.c.bf16 %v156, %v156
    %v195 = vpack.c.bf16 %v164, %v164
    %v196 = vpack.c.bf16 %v163, %v163
    %v197 = vpack.c.bf16 %v165, %v165
    %v198 = vld [vmem:[#allocation6] sm:$0xff]
    %v199 = vld [vmem:[#allocation6 + $0x8] sm:$0xf]
    %v202 = vcombine.high %v198, %v198
    %v204 = vunpack.c.l.s4 1983009808
    %v205 = vunpack.c.0.s8 %v204
    %v206 = vlaneseq
    %v207 = vshrl.u32 %v206, 7
    %v208 = vsub.s32 %v205, %v207
    %v209 = vrot.slane %v198, %v208
    %v211 = vunpack.c.l.s4 1983009808
    %v212 = vunpack.c.0.s8 %v211
    %v213 = vlaneseq
    %v214 = vshrl.u32 %v213, 7
    %v215 = vsub.s32 %v212, %v214
    %v216 = vrot.slane %v202, %v215
    %v217 = vcombine.high %v209, %v209
    %v218 = vcombine.high %v216, %v216
    %v220 = vunpack.c.l.s4 1983009808
    %v221 = vunpack.c.0.s8 %v220
    %v222 = vlaneseq
    %v223 = vshrl.u32 %v222, 7
    %v224 = vsub.s32 %v221, %v223
    %v225 = vrot.slane %v199, %v224
    %v226 = vcombine.high %v225, %v225
    %v233 = vpack.c.bf16 %v209, %v209
    %v234 = vpack.c.bf16 %v217, %v217
    %v235 = vpack.c.bf16 %v216, %v216
    %v236 = vpack.c.bf16 %v218, %v218
    %v237 = vpack.c.bf16 %v225, %v225
    %v238 = vpack.c.bf16 %v226, %v226
    %v239 = vld [vmem:[#allocation8] sm:$0xff]
    %v240 = vld [vmem:[#allocation8 + $0x8] sm:$0xff]
    %v241 = vld [vmem:[#allocation8 + $0x10] sm:$0xff]
    %v242 = vld [vmem:[#allocation8 + $0x18] sm:$0xff]
    %v243 = vld [vmem:[#allocation8 + $0x20] sm:$0xff]
    %v244 = vld [vmem:[#allocation8 + $0x28] sm:$0xff]
    %v245 = vld [vmem:[#allocation8 + $0x30] sm:$0xff]
    %v246 = vld [vmem:[#allocation8 + $0x38] sm:$0xff]
    %v247 = vld [vmem:[#allocation8 + $0x40] sm:$0xff]
    %v248 = vld [vmem:[#allocation8 + $0x48] sm:$0xff]
    %v249 = vld [vmem:[#allocation8 + $0x50] sm:$0xff]
    %v250 = vld [vmem:[#allocation8 + $0x58] sm:$0xff]
    %v251 = vld [vmem:[#allocation8 + $0x60] sm:$0xff]
    %v252 = vld [vmem:[#allocation8 + $0x68] sm:$0xff]
    %v253 = vld [vmem:[#allocation8 + $0x70] sm:$0xff]
    %v254 = vld [vmem:[#allocation8 + $0x78] sm:$0xff]
    %v255 = vld [vmem:[#allocation8 + $0x80] sm:$0xff]
    %v256 = vld [vmem:[#allocation8 + $0x88] sm:$0xff]
    %v257 = vld [vmem:[#allocation8 + $0x90] sm:$0xff]
    %v258 = vld [vmem:[#allocation8 + $0x98] sm:$0xff]
    %v259 = vld [vmem:[#allocation8 + $0xa0] sm:$0xff]
    %v260 = vld [vmem:[#allocation8 + $0xa8] sm:$0xff]
    %v261 = vld [vmem:[#allocation8 + $0xb0] sm:$0xff]
    %v262 = vld [vmem:[#allocation8 + $0xb8] sm:$0xff]
    %v263 = vld [vmem:[#allocation8 + $0xc0] sm:$0xff]
    %v264 = vld [vmem:[#allocation8 + $0xc8] sm:$0xff]
    %v265 = vld [vmem:[#allocation8 + $0xd0] sm:$0xff]
    %v266 = vld [vmem:[#allocation8 + $0xd8] sm:$0xff]
    %v267 = vld [vmem:[#allocation8 + $0xe0] sm:$0xff]
    %v268 = vld [vmem:[#allocation8 + $0xe8] sm:$0xff]
    %v269 = vld [vmem:[#allocation8 + $0xf0] sm:$0xff]
    %v270 = vld [vmem:[#allocation8 + $0xf8] sm:$0xff]
    %v271 = vld [vmem:[#allocation8 + $0x100] sm:$0xff]
    %v272 = vld [vmem:[#allocation8 + $0x108] sm:$0xff]
    %v273 = vld [vmem:[#allocation8 + $0x110] sm:$0xff]
    %v274 = vld [vmem:[#allocation8 + $0x118] sm:$0xff]
    %v275 = vld [vmem:[#allocation8 + $0x120] sm:$0xff]
    %v276 = vld [vmem:[#allocation8 + $0x128] sm:$0xff]
    %v277 = vld [vmem:[#allocation8 + $0x130] sm:$0xff]
    %v278 = vld [vmem:[#allocation8 + $0x138] sm:$0xff]
    %v279 = vld [vmem:[#allocation8 + $0x140] sm:$0xff]
    %v280 = vld [vmem:[#allocation8 + $0x148] sm:$0xff]
    %v281 = vld [vmem:[#allocation8 + $0x150] sm:$0xff]
    %v282 = vld [vmem:[#allocation8 + $0x158] sm:$0xff]
    %v283 = vld [vmem:[#allocation8 + $0x160] sm:$0xff]
    %v284 = vld [vmem:[#allocation8 + $0x168] sm:$0xff]
    %v285 = vld [vmem:[#allocation8 + $0x170] sm:$0xff]
    %v286 = vld [vmem:[#allocation8 + $0x178] sm:$0xff]
    %v287 = vld [vmem:[#allocation8 + $0x180] sm:$0xff]
    %v288 = vld [vmem:[#allocation8 + $0x188] sm:$0xff]
    %v289 = vld [vmem:[#allocation8 + $0x190] sm:$0xff]
    %v290 = vld [vmem:[#allocation8 + $0x198] sm:$0xff]
    %v291 = vld [vmem:[#allocation8 + $0x1a0] sm:$0xff]
    %v292 = vld [vmem:[#allocation8 + $0x1a8] sm:$0xff]
    %v293 = vld [vmem:[#allocation8 + $0x1b0] sm:$0xff]
    %v294 = vld [vmem:[#allocation8 + $0x1b8] sm:$0xff]
    %v295 = vld [vmem:[#allocation8 + $0x1c0] sm:$0xff]
    %v296 = vld [vmem:[#allocation8 + $0x1c8] sm:$0xff]
    %v297 = vld [vmem:[#allocation8 + $0x1d0] sm:$0xff]
    %v298 = vld [vmem:[#allocation8 + $0x1d8] sm:$0xff]
    %v299 = vld [vmem:[#allocation8 + $0x1e0] sm:$0xff]
    %v300 = vld [vmem:[#allocation8 + $0x1e8] sm:$0xff]
    %v301 = vld [vmem:[#allocation8 + $0x1f0] sm:$0xff]
    %v302 = vld [vmem:[#allocation8 + $0x1f8] sm:$0xff]
    %v303 = vld [vmem:[#allocation8 + $0x200] sm:$0xff]
    %v304 = vld [vmem:[#allocation8 + $0x208] sm:$0xff]
    %v305 = vld [vmem:[#allocation8 + $0x210] sm:$0xff]
    %v306 = vld [vmem:[#allocation8 + $0x218] sm:$0xff]
    %v307 = vld [vmem:[#allocation8 + $0x220] sm:$0xff]
    %v308 = vld [vmem:[#allocation8 + $0x228] sm:$0xff]
    %v309 = vld [vmem:[#allocation8 + $0x230] sm:$0xff]
    %v310 = vld [vmem:[#allocation8 + $0x238] sm:$0xff]
    %v311 = vld [vmem:[#allocation8 + $0x240] sm:$0xff]
    %v312 = vld [vmem:[#allocation8 + $0x248] sm:$0xff]
    %v313 = vld [vmem:[#allocation8 + $0x250] sm:$0xff]
    %v314 = vld [vmem:[#allocation8 + $0x258] sm:$0xff]
    %v315 = vld [vmem:[#allocation8 + $0x260] sm:$0xff]
    %v316 = vld [vmem:[#allocation8 + $0x268] sm:$0xff]
    %v317 = vld [vmem:[#allocation8 + $0x270] sm:$0xff]
    %v318 = vld [vmem:[#allocation8 + $0x278] sm:$0xff]
    %v319 = vld [vmem:[#allocation8 + $0x280] sm:$0xff]
    %v320 = vld [vmem:[#allocation8 + $0x288] sm:$0xff]
    %v321 = vld [vmem:[#allocation8 + $0x290] sm:$0xff]
    %v322 = vld [vmem:[#allocation8 + $0x298] sm:$0xff]
    %v323 = vld [vmem:[#allocation8 + $0x2a0] sm:$0xff]
    %v324 = vld [vmem:[#allocation8 + $0x2a8] sm:$0xff]
    %v325 = vld [vmem:[#allocation8 + $0x2b0] sm:$0xff]
    %v326 = vld [vmem:[#allocation8 + $0x2b8] sm:$0xff]
    %v327 = vld [vmem:[#allocation8 + $0x2c0] sm:$0xff]
    %v328 = vld [vmem:[#allocation8 + $0x2c8] sm:$0xff]
    %v329 = vld [vmem:[#allocation8 + $0x2d0] sm:$0xff]
    %v330 = vld [vmem:[#allocation8 + $0x2d8] sm:$0xff]
    %v331 = vld [vmem:[#allocation8 + $0x2e0] sm:$0xff]
    %v332 = vld [vmem:[#allocation8 + $0x2e8] sm:$0xff]
    %v333 = vld [vmem:[#allocation8 + $0x2f0] sm:$0xff]
    %v334 = vld [vmem:[#allocation8 + $0x2f8] sm:$0xff]
    %v335 = vld [vmem:[#allocation8 + $0x300] sm:$0xff]
    %v336 = vld [vmem:[#allocation8 + $0x308] sm:$0xff]
    %v337 = vld [vmem:[#allocation8 + $0x310] sm:$0xff]
    %v338 = vld [vmem:[#allocation8 + $0x318] sm:$0xff]
    %v339 = vld [vmem:[#allocation8 + $0x320] sm:$0xff]
    %v340 = vld [vmem:[#allocation8 + $0x328] sm:$0xff]
    %v341 = vld [vmem:[#allocation8 + $0x330] sm:$0xff]
    %v342 = vld [vmem:[#allocation8 + $0x338] sm:$0xff]
    %v343 = vld [vmem:[#allocation8 + $0x340] sm:$0xff]
    %v344 = vld [vmem:[#allocation8 + $0x348] sm:$0xff]
    %v345 = vld [vmem:[#allocation8 + $0x350] sm:$0xff]
    %v346 = vld [vmem:[#allocation8 + $0x358] sm:$0xff]
    %v347 = vld [vmem:[#allocation8 + $0x360] sm:$0xff]
    %v348 = vld [vmem:[#allocation8 + $0x368] sm:$0xff]
    %v349 = vld [vmem:[#allocation8 + $0x370] sm:$0xff]
    %v350 = vld [vmem:[#allocation8 + $0x378] sm:$0xff]
    %v351 = vld [vmem:[#allocation8 + $0x380] sm:$0xff]
    %v352 = vld [vmem:[#allocation8 + $0x388] sm:$0xff]
    %v353 = vld [vmem:[#allocation8 + $0x390] sm:$0xff]
    %v354 = vld [vmem:[#allocation8 + $0x398] sm:$0xff]
    %v355 = vld [vmem:[#allocation8 + $0x3a0] sm:$0xff]
    %v356 = vld [vmem:[#allocation8 + $0x3a8] sm:$0xff]
    %v357 = vld [vmem:[#allocation8 + $0x3b0] sm:$0xff]
    %v358 = vld [vmem:[#allocation8 + $0x3b8] sm:$0xff]
    %v359 = vld [vmem:[#allocation8 + $0x3c0] sm:$0xff]
    %v360 = vld [vmem:[#allocation8 + $0x3c8] sm:$0xff]
    %v361 = vld [vmem:[#allocation8 + $0x3d0] sm:$0xff]
    %v362 = vld [vmem:[#allocation8 + $0x3d8] sm:$0xff]
    %v363 = vld [vmem:[#allocation8 + $0x3e0] sm:$0xff]
    %v364 = vld [vmem:[#allocation8 + $0x3e8] sm:$0xff]
    %v365 = vld [vmem:[#allocation8 + $0x3f0] sm:$0xff]
    %v366 = vld [vmem:[#allocation8 + $0x3f8] sm:$0xff]
    %v367 = vld [vmem:[#allocation8 + $0x400] sm:$0xff]
    %v368 = vld [vmem:[#allocation8 + $0x408] sm:$0xff]
    %v369 = vld [vmem:[#allocation8 + $0x410] sm:$0xff]
    %v370 = vld [vmem:[#allocation8 + $0x418] sm:$0xff]
    %v371 = vld [vmem:[#allocation8 + $0x420] sm:$0xff]
    %v372 = vld [vmem:[#allocation8 + $0x428] sm:$0xff]
    %v373 = vld [vmem:[#allocation8 + $0x430] sm:$0xff]
    %v374 = vld [vmem:[#allocation8 + $0x438] sm:$0xff]
    %v375 = vld [vmem:[#allocation8 + $0x440] sm:$0xff]
    %v376 = vld [vmem:[#allocation8 + $0x448] sm:$0xff]
    %v377 = vld [vmem:[#allocation8 + $0x450] sm:$0xff]
    %v378 = vld [vmem:[#allocation8 + $0x458] sm:$0xff]
    %v379 = vld [vmem:[#allocation8 + $0x460] sm:$0xff]
    %v380 = vld [vmem:[#allocation8 + $0x468] sm:$0xff]
    %v381 = vld [vmem:[#allocation8 + $0x470] sm:$0xff]
    %v382 = vld [vmem:[#allocation8 + $0x478] sm:$0xff]
    %v383 = vld [vmem:[#allocation8 + $0x480] sm:$0xff]
    %v384 = vld [vmem:[#allocation8 + $0x488] sm:$0xff]
    %v385 = vld [vmem:[#allocation8 + $0x490] sm:$0xff]
    %v386 = vld [vmem:[#allocation8 + $0x498] sm:$0xff]
    %v387 = vld [vmem:[#allocation8 + $0x4a0] sm:$0xff]
    %v388 = vld [vmem:[#allocation8 + $0x4a8] sm:$0xff]
    %v389 = vld [vmem:[#allocation8 + $0x4b0] sm:$0xff]
    %v390 = vld [vmem:[#allocation8 + $0x4b8] sm:$0xff]
    %v391 = vld [vmem:[#allocation8 + $0x4c0] sm:$0xff]
    %v392 = vld [vmem:[#allocation8 + $0x4c8] sm:$0xff]
    %v393 = vld [vmem:[#allocation8 + $0x4d0] sm:$0xff]
    %v394 = vld [vmem:[#allocation8 + $0x4d8] sm:$0xff]
    %v395 = vld [vmem:[#allocation8 + $0x4e0] sm:$0xff]
    %v396 = vld [vmem:[#allocation8 + $0x4e8] sm:$0xff]
    %v397 = vld [vmem:[#allocation8 + $0x4f0] sm:$0xff]
    %v398 = vld [vmem:[#allocation8 + $0x4f8] sm:$0xff]
    %v399 = vld [vmem:[#allocation8 + $0x500] sm:$0xff]
    %v400 = vld [vmem:[#allocation8 + $0x508] sm:$0xff]
    %v401 = vld [vmem:[#allocation8 + $0x510] sm:$0xff]
    %v402 = vld [vmem:[#allocation8 + $0x518] sm:$0xff]
    %v403 = vld [vmem:[#allocation8 + $0x520] sm:$0xff]
    %v404 = vld [vmem:[#allocation8 + $0x528] sm:$0xff]
    %v405 = vld [vmem:[#allocation8 + $0x530] sm:$0xff]
    %v406 = vld [vmem:[#allocation8 + $0x538] sm:$0xff]
    %v407 = vld [vmem:[#allocation8 + $0x540] sm:$0xff]
    %v408 = vld [vmem:[#allocation8 + $0x548] sm:$0xff]
    %v409 = vld [vmem:[#allocation8 + $0x550] sm:$0xff]
    %v410 = vld [vmem:[#allocation8 + $0x558] sm:$0xff]
    %v411 = vld [vmem:[#allocation8 + $0x560] sm:$0xff]
    %v412 = vld [vmem:[#allocation8 + $0x568] sm:$0xff]
    %v413 = vld [vmem:[#allocation8 + $0x570] sm:$0xff]
    %v414 = vld [vmem:[#allocation8 + $0x578] sm:$0xff]
    %v415 = vld [vmem:[#allocation8 + $0x580] sm:$0xff]
    %v416 = vld [vmem:[#allocation8 + $0x588] sm:$0xff]
    %v417 = vld [vmem:[#allocation8 + $0x590] sm:$0xff]
    %v418 = vld [vmem:[#allocation8 + $0x598] sm:$0xff]
    %v419 = vld [vmem:[#allocation8 + $0x5a0] sm:$0xff]
    %v420 = vld [vmem:[#allocation8 + $0x5a8] sm:$0xff]
    %v421 = vld [vmem:[#allocation8 + $0x5b0] sm:$0xff]
    %v422 = vld [vmem:[#allocation8 + $0x5b8] sm:$0xff]
    %v423 = vld [vmem:[#allocation8 + $0x5c0] sm:$0xff]
    %v424 = vld [vmem:[#allocation8 + $0x5c8] sm:$0xff]
    %v425 = vld [vmem:[#allocation8 + $0x5d0] sm:$0xff]
    %v426 = vld [vmem:[#allocation8 + $0x5d8] sm:$0xff]
    %v427 = vld [vmem:[#allocation8 + $0x5e0] sm:$0xff]
    %v428 = vld [vmem:[#allocation8 + $0x5e8] sm:$0xff]
    %v429 = vld [vmem:[#allocation8 + $0x5f0] sm:$0xff]
    %v430 = vld [vmem:[#allocation8 + $0x5f8] sm:$0xff]
    %v431 = vld [vmem:[#allocation8 + $0x600] sm:$0xff]
    %v432 = vld [vmem:[#allocation8 + $0x608] sm:$0xff]
    %v433 = vld [vmem:[#allocation8 + $0x610] sm:$0xff]
    %v434 = vld [vmem:[#allocation8 + $0x618] sm:$0xff]
    %v435 = vld [vmem:[#allocation8 + $0x620] sm:$0xff]
    %v436 = vld [vmem:[#allocation8 + $0x628] sm:$0xff]
    %v437 = vld [vmem:[#allocation8 + $0x630] sm:$0xff]
    %v438 = vld [vmem:[#allocation8 + $0x638] sm:$0xff]
    %v439 = vld [vmem:[#allocation8 + $0x640] sm:$0xff]
    %v440 = vld [vmem:[#allocation8 + $0x648] sm:$0xff]
    %v441 = vld [vmem:[#allocation8 + $0x650] sm:$0xff]
    %v442 = vld [vmem:[#allocation8 + $0x658] sm:$0xff]
    %v443 = vld [vmem:[#allocation8 + $0x660] sm:$0xff]
    %v444 = vld [vmem:[#allocation8 + $0x668] sm:$0xff]
    %v445 = vld [vmem:[#allocation8 + $0x670] sm:$0xff]
    %v446 = vld [vmem:[#allocation8 + $0x678] sm:$0xff]
    %v447 = vld [vmem:[#allocation8 + $0x680] sm:$0xff]
    %v448 = vld [vmem:[#allocation8 + $0x688] sm:$0xff]
    %v449 = vld [vmem:[#allocation8 + $0x690] sm:$0xff]
    %v450 = vld [vmem:[#allocation8 + $0x698] sm:$0xff]
    %v451 = vld [vmem:[#allocation8 + $0x6a0] sm:$0xff]
    %v452 = vld [vmem:[#allocation8 + $0x6a8] sm:$0xff]
    %v453 = vld [vmem:[#allocation8 + $0x6b0] sm:$0xff]
    %v454 = vld [vmem:[#allocation8 + $0x6b8] sm:$0xff]
    %v455 = vld [vmem:[#allocation8 + $0x6c0] sm:$0xff]
    %v456 = vld [vmem:[#allocation8 + $0x6c8] sm:$0xff]
    %v457 = vld [vmem:[#allocation8 + $0x6d0] sm:$0xff]
    %v458 = vld [vmem:[#allocation8 + $0x6d8] sm:$0xff]
    %v459 = vld [vmem:[#allocation8 + $0x6e0] sm:$0xff]
    %v460 = vld [vmem:[#allocation8 + $0x6e8] sm:$0xff]
    %v461 = vld [vmem:[#allocation8 + $0x6f0] sm:$0xff]
    %v462 = vld [vmem:[#allocation8 + $0x6f8] sm:$0xff]
    %v463 = vld [vmem:[#allocation8 + $0x700] sm:$0xff]
    %v464 = vld [vmem:[#allocation8 + $0x708] sm:$0xff]
    %v465 = vld [vmem:[#allocation8 + $0x710] sm:$0xff]
    %v466 = vld [vmem:[#allocation8 + $0x718] sm:$0xff]
    %v467 = vld [vmem:[#allocation8 + $0x720] sm:$0xff]
    %v468 = vld [vmem:[#allocation8 + $0x728] sm:$0xff]
    %v469 = vld [vmem:[#allocation8 + $0x730] sm:$0xff]
    %v470 = vld [vmem:[#allocation8 + $0x738] sm:$0xff]
    %v471 = vld [vmem:[#allocation8 + $0x740] sm:$0xff]
    %v472 = vld [vmem:[#allocation8 + $0x748] sm:$0xff]
    %v473 = vld [vmem:[#allocation8 + $0x750] sm:$0xff]
    %v474 = vld [vmem:[#allocation8 + $0x758] sm:$0xff]
    %v475 = vld [vmem:[#allocation8 + $0x760] sm:$0xff]
    %v476 = vld [vmem:[#allocation8 + $0x768] sm:$0xff]
    %v477 = vld [vmem:[#allocation8 + $0x770] sm:$0xff]
    %v478 = vld [vmem:[#allocation8 + $0x778] sm:$0xff]
    %v479 = vld [vmem:[#allocation8 + $0x780] sm:$0xff]
    %v480 = vld [vmem:[#allocation8 + $0x788] sm:$0xff]
    %v481 = vld [vmem:[#allocation8 + $0x790] sm:$0xff]
    %v482 = vld [vmem:[#allocation8 + $0x798] sm:$0xff]
    %v483 = vld [vmem:[#allocation8 + $0x7a0] sm:$0xff]
    %v484 = vld [vmem:[#allocation8 + $0x7a8] sm:$0xff]
    %v485 = vld [vmem:[#allocation8 + $0x7b0] sm:$0xff]
    %v486 = vld [vmem:[#allocation8 + $0x7b8] sm:$0xff]
    %v487 = vld [vmem:[#allocation8 + $0x7c0] sm:$0xff]
    %v488 = vld [vmem:[#allocation8 + $0x7c8] sm:$0xff]
    %v489 = vld [vmem:[#allocation8 + $0x7d0] sm:$0xff]
    %v490 = vld [vmem:[#allocation8 + $0x7d8] sm:$0xff]
    %v491 = vld [vmem:[#allocation8 + $0x7e0] sm:$0xff]
    %v492 = vld [vmem:[#allocation8 + $0x7e8] sm:$0xff]
    %v493 = vld [vmem:[#allocation8 + $0x7f0] sm:$0xff]
    %v494 = vld [vmem:[#allocation8 + $0x7f8] sm:$0xff]
    %v495 = vld [vmem:[#allocation8 + $0x800] sm:$0xff]
    %v496 = vld [vmem:[#allocation8 + $0x808] sm:$0xff]
    %v497 = vld [vmem:[#allocation8 + $0x810] sm:$0xff]
    %v498 = vld [vmem:[#allocation8 + $0x818] sm:$0xff]
    %v499 = vld [vmem:[#allocation8 + $0x820] sm:$0xff]
    %v500 = vld [vmem:[#allocation8 + $0x828] sm:$0xff]
    %v501 = vld [vmem:[#allocation8 + $0x830] sm:$0xff]
    %v502 = vld [vmem:[#allocation8 + $0x838] sm:$0xff]
    %v503 = vld [vmem:[#allocation8 + $0x840] sm:$0xff]
    %v504 = vld [vmem:[#allocation8 + $0x848] sm:$0xff]
    %v505 = vld [vmem:[#allocation8 + $0x850] sm:$0xff]
    %v506 = vld [vmem:[#allocation8 + $0x858] sm:$0xff]
    %v507 = vld [vmem:[#allocation8 + $0x860] sm:$0xff]
    %v508 = vld [vmem:[#allocation8 + $0x868] sm:$0xff]
    %v509 = vld [vmem:[#allocation8 + $0x870] sm:$0xff]
    %v510 = vld [vmem:[#allocation8 + $0x878] sm:$0xff]
    %v511 = vld [vmem:[#allocation8 + $0x880] sm:$0xff]
    %v512 = vld [vmem:[#allocation8 + $0x888] sm:$0xff]
    %v513 = vld [vmem:[#allocation8 + $0x890] sm:$0xff]
    %v514 = vld [vmem:[#allocation8 + $0x898] sm:$0xff]
    %v515 = vld [vmem:[#allocation8 + $0x8a0] sm:$0xff]
    %v516 = vld [vmem:[#allocation8 + $0x8a8] sm:$0xff]
    %v517 = vld [vmem:[#allocation8 + $0x8b0] sm:$0xff]
    %v518 = vld [vmem:[#allocation8 + $0x8b8] sm:$0xff]
    %v519 = vld [vmem:[#allocation8 + $0x8c0] sm:$0xff]
    %v520 = vld [vmem:[#allocation8 + $0x8c8] sm:$0xff]
    %v521 = vld [vmem:[#allocation8 + $0x8d0] sm:$0xff]
    %v522 = vld [vmem:[#allocation8 + $0x8d8] sm:$0xff]
    %v523 = vld [vmem:[#allocation8 + $0x8e0] sm:$0xff]
    %v524 = vld [vmem:[#allocation8 + $0x8e8] sm:$0xff]
    %v525 = vld [vmem:[#allocation8 + $0x8f0] sm:$0xff]
    %v526 = vld [vmem:[#allocation8 + $0x8f8] sm:$0xff]
    %v527 = vld [vmem:[#allocation8 + $0x900] sm:$0xff]
    %v528 = vld [vmem:[#allocation8 + $0x908] sm:$0xff]
    %v529 = vld [vmem:[#allocation8 + $0x910] sm:$0xff]
    %v530 = vld [vmem:[#allocation8 + $0x918] sm:$0xff]
    %v531 = vld [vmem:[#allocation8 + $0x920] sm:$0xff]
    %v532 = vld [vmem:[#allocation8 + $0x928] sm:$0xff]
    %v533 = vld [vmem:[#allocation8 + $0x930] sm:$0xff]
    %v534 = vld [vmem:[#allocation8 + $0x938] sm:$0xff]
    %v535 = vld [vmem:[#allocation8 + $0x940] sm:$0xff]
    %v536 = vld [vmem:[#allocation8 + $0x948] sm:$0xff]
    %v537 = vld [vmem:[#allocation8 + $0x950] sm:$0xff]
    %v538 = vld [vmem:[#allocation8 + $0x958] sm:$0xff]
    %v539 = vld [vmem:[#allocation8 + $0x960] sm:$0xff]
    %v540 = vld [vmem:[#allocation8 + $0x968] sm:$0xff]
    %v541 = vld [vmem:[#allocation8 + $0x970] sm:$0xff]
    %v542 = vld [vmem:[#allocation8 + $0x978] sm:$0xff]
    %v543 = vld [vmem:[#allocation8 + $0x980] sm:$0xff]
    %v544 = vld [vmem:[#allocation8 + $0x988] sm:$0xff]
    %v545 = vld [vmem:[#allocation8 + $0x990] sm:$0xff]
    %v546 = vld [vmem:[#allocation8 + $0x998] sm:$0xff]
    %v547 = vld [vmem:[#allocation8 + $0x9a0] sm:$0xff]
    %v548 = vld [vmem:[#allocation8 + $0x9a8] sm:$0xff]
    %v549 = vld [vmem:[#allocation8 + $0x9b0] sm:$0xff]
    %v550 = vld [vmem:[#allocation8 + $0x9b8] sm:$0xff]
    %v551 = vld [vmem:[#allocation8 + $0x9c0] sm:$0xff]
    %v552 = vld [vmem:[#allocation8 + $0x9c8] sm:$0xff]
    %v553 = vld [vmem:[#allocation8 + $0x9d0] sm:$0xff]
    %v554 = vld [vmem:[#allocation8 + $0x9d8] sm:$0xff]
    %v555 = vld [vmem:[#allocation8 + $0x9e0] sm:$0xff]
    %v556 = vld [vmem:[#allocation8 + $0x9e8] sm:$0xff]
    %v557 = vld [vmem:[#allocation8 + $0x9f0] sm:$0xff]
    %v558 = vld [vmem:[#allocation8 + $0x9f8] sm:$0xff]
    %v559 = vld [vmem:[#allocation8 + $0xa00] sm:$0xff]
    %v560 = vld [vmem:[#allocation8 + $0xa08] sm:$0xff]
    %v561 = vld [vmem:[#allocation8 + $0xa10] sm:$0xff]
    %v562 = vld [vmem:[#allocation8 + $0xa18] sm:$0xff]
    %v563 = vld [vmem:[#allocation8 + $0xa20] sm:$0xff]
    %v564 = vld [vmem:[#allocation8 + $0xa28] sm:$0xff]
    %v565 = vld [vmem:[#allocation8 + $0xa30] sm:$0xff]
    %v566 = vld [vmem:[#allocation8 + $0xa38] sm:$0xff]
    %v567 = vld [vmem:[#allocation8 + $0xa40] sm:$0xff]
    %v568 = vld [vmem:[#allocation8 + $0xa48] sm:$0xff]
    %v569 = vld [vmem:[#allocation8 + $0xa50] sm:$0xff]
    %v570 = vld [vmem:[#allocation8 + $0xa58] sm:$0xff]
    %v571 = vld [vmem:[#allocation8 + $0xa60] sm:$0xff]
    %v572 = vld [vmem:[#allocation8 + $0xa68] sm:$0xff]
    %v573 = vld [vmem:[#allocation8 + $0xa70] sm:$0xff]
    %v574 = vld [vmem:[#allocation8 + $0xa78] sm:$0xff]
    %v575 = vld [vmem:[#allocation8 + $0xa80] sm:$0xff]
    %v576 = vld [vmem:[#allocation8 + $0xa88] sm:$0xff]
    %v577 = vld [vmem:[#allocation8 + $0xa90] sm:$0xff]
    %v578 = vld [vmem:[#allocation8 + $0xa98] sm:$0xff]
    %v579 = vld [vmem:[#allocation8 + $0xaa0] sm:$0xff]
    %v580 = vld [vmem:[#allocation8 + $0xaa8] sm:$0xff]
    %v581 = vld [vmem:[#allocation8 + $0xab0] sm:$0xff]
    %v582 = vld [vmem:[#allocation8 + $0xab8] sm:$0xff]
    %v583 = vld [vmem:[#allocation8 + $0xac0] sm:$0xff]
    %v584 = vld [vmem:[#allocation8 + $0xac8] sm:$0xff]
    %v585 = vld [vmem:[#allocation8 + $0xad0] sm:$0xff]
    %v586 = vld [vmem:[#allocation8 + $0xad8] sm:$0xff]
    %v587 = vld [vmem:[#allocation8 + $0xae0] sm:$0xff]
    %v588 = vld [vmem:[#allocation8 + $0xae8] sm:$0xff]
    %v589 = vld [vmem:[#allocation8 + $0xaf0] sm:$0xff]
    %v590 = vld [vmem:[#allocation8 + $0xaf8] sm:$0xff]
    %v591 = vld [vmem:[#allocation8 + $0xb00] sm:$0xff]
    %v592 = vld [vmem:[#allocation8 + $0xb08] sm:$0xff]
    %v593 = vld [vmem:[#allocation8 + $0xb10] sm:$0xff]
    %v594 = vld [vmem:[#allocation8 + $0xb18] sm:$0xff]
    %v595 = vld [vmem:[#allocation8 + $0xb20] sm:$0xff]
    %v596 = vld [vmem:[#allocation8 + $0xb28] sm:$0xff]
    %v597 = vld [vmem:[#allocation8 + $0xb30] sm:$0xff]
    %v598 = vld [vmem:[#allocation8 + $0xb38] sm:$0xff]
    %v599 = vld [vmem:[#allocation8 + $0xb40] sm:$0xff]
    %v600 = vld [vmem:[#allocation8 + $0xb48] sm:$0xff]
    %v601 = vld [vmem:[#allocation8 + $0xb50] sm:$0xff]
    %v602 = vld [vmem:[#allocation8 + $0xb58] sm:$0xff]
    %v603 = vld [vmem:[#allocation8 + $0xb60] sm:$0xff]
    %v604 = vld [vmem:[#allocation8 + $0xb68] sm:$0xff]
    %v605 = vld [vmem:[#allocation8 + $0xb70] sm:$0xff]
    %v606 = vld [vmem:[#allocation8 + $0xb78] sm:$0xff]
    %v607 = vld [vmem:[#allocation8 + $0xb80] sm:$0xff]
    %v608 = vld [vmem:[#allocation8 + $0xb88] sm:$0xff]
    %v609 = vld [vmem:[#allocation8 + $0xb90] sm:$0xff]
    %v610 = vld [vmem:[#allocation8 + $0xb98] sm:$0xff]
    %v611 = vld [vmem:[#allocation8 + $0xba0] sm:$0xff]
    %v612 = vld [vmem:[#allocation8 + $0xba8] sm:$0xff]
    %v613 = vld [vmem:[#allocation8 + $0xbb0] sm:$0xff]
    %v614 = vld [vmem:[#allocation8 + $0xbb8] sm:$0xff]
    %v615 = vld [vmem:[#allocation8 + $0xbc0] sm:$0xff]
    %v616 = vld [vmem:[#allocation8 + $0xbc8] sm:$0xff]
    %v617 = vld [vmem:[#allocation8 + $0xbd0] sm:$0xff]
    %v618 = vld [vmem:[#allocation8 + $0xbd8] sm:$0xff]
    %v619 = vld [vmem:[#allocation8 + $0xbe0] sm:$0xff]
    %v620 = vld [vmem:[#allocation8 + $0xbe8] sm:$0xff]
    %v621 = vld [vmem:[#allocation8 + $0xbf0] sm:$0xff]
    %v622 = vld [vmem:[#allocation8 + $0xbf8] sm:$0xff]
    %v623 = vld [vmem:[#allocation8 + $0xc00] sm:$0xff]
    %v624 = vld [vmem:[#allocation8 + $0xc08] sm:$0xff]
    %v625 = vld [vmem:[#allocation8 + $0xc10] sm:$0xff]
    %v626 = vld [vmem:[#allocation8 + $0xc18] sm:$0xff]
    %v627 = vld [vmem:[#allocation8 + $0xc20] sm:$0xff]
    %v628 = vld [vmem:[#allocation8 + $0xc28] sm:$0xff]
    %v629 = vld [vmem:[#allocation8 + $0xc30] sm:$0xff]
    %v630 = vld [vmem:[#allocation8 + $0xc38] sm:$0xff]
    %v631 = vld [vmem:[#allocation8 + $0xc40] sm:$0xff]
    %v632 = vld [vmem:[#allocation8 + $0xc48] sm:$0xff]
    %v633 = vld [vmem:[#allocation8 + $0xc50] sm:$0xff]
    %v634 = vld [vmem:[#allocation8 + $0xc58] sm:$0xff]
    %v635 = vld [vmem:[#allocation8 + $0xc60] sm:$0xff]
    %v636 = vld [vmem:[#allocation8 + $0xc68] sm:$0xff]
    %v637 = vld [vmem:[#allocation8 + $0xc70] sm:$0xff]
    %v638 = vld [vmem:[#allocation8 + $0xc78] sm:$0xff]
    %v639 = vld [vmem:[#allocation8 + $0xc80] sm:$0xff]
    %v640 = vld [vmem:[#allocation8 + $0xc88] sm:$0xff]
    %v641 = vld [vmem:[#allocation8 + $0xc90] sm:$0xff]
    %v642 = vld [vmem:[#allocation8 + $0xc98] sm:$0xff]
    %v643 = vld [vmem:[#allocation8 + $0xca0] sm:$0xff]
    %v644 = vld [vmem:[#allocation8 + $0xca8] sm:$0xff]
    %v645 = vld [vmem:[#allocation8 + $0xcb0] sm:$0xff]
    %v646 = vld [vmem:[#allocation8 + $0xcb8] sm:$0xff]
    %v647 = vld [vmem:[#allocation8 + $0xcc0] sm:$0xff]
    %v648 = vld [vmem:[#allocation8 + $0xcc8] sm:$0xff]
    %v649 = vld [vmem:[#allocation8 + $0xcd0] sm:$0xff]
    %v650 = vld [vmem:[#allocation8 + $0xcd8] sm:$0xff]
    %v651 = vld [vmem:[#allocation8 + $0xce0] sm:$0xff]
    %v652 = vld [vmem:[#allocation8 + $0xce8] sm:$0xff]
    %v653 = vld [vmem:[#allocation8 + $0xcf0] sm:$0xff]
    %v654 = vld [vmem:[#allocation8 + $0xcf8] sm:$0xff]
    %v655 = vld [vmem:[#allocation8 + $0xd00] sm:$0xff]
    %v656 = vld [vmem:[#allocation8 + $0xd08] sm:$0xff]
    %v657 = vld [vmem:[#allocation8 + $0xd10] sm:$0xff]
    %v658 = vld [vmem:[#allocation8 + $0xd18] sm:$0xff]
    %v659 = vld [vmem:[#allocation8 + $0xd20] sm:$0xff]
    %v660 = vld [vmem:[#allocation8 + $0xd28] sm:$0xff]
    %v661 = vld [vmem:[#allocation8 + $0xd30] sm:$0xff]
    %v662 = vld [vmem:[#allocation8 + $0xd38] sm:$0xff]
    %v663 = vld [vmem:[#allocation8 + $0xd40] sm:$0xff]
    %v664 = vld [vmem:[#allocation8 + $0xd48] sm:$0xff]
    %v665 = vld [vmem:[#allocation8 + $0xd50] sm:$0xff]
    %v666 = vld [vmem:[#allocation8 + $0xd58] sm:$0xff]
    %v667 = vld [vmem:[#allocation8 + $0xd60] sm:$0xff]
    %v668 = vld [vmem:[#allocation8 + $0xd68] sm:$0xff]
    %v669 = vld [vmem:[#allocation8 + $0xd70] sm:$0xff]
    %v670 = vld [vmem:[#allocation8 + $0xd78] sm:$0xff]
    %v671 = vld [vmem:[#allocation8 + $0xd80] sm:$0xff]
    %v672 = vld [vmem:[#allocation8 + $0xd88] sm:$0xff]
    %v673 = vld [vmem:[#allocation8 + $0xd90] sm:$0xff]
    %v674 = vld [vmem:[#allocation8 + $0xd98] sm:$0xff]
    %v675 = vld [vmem:[#allocation8 + $0xda0] sm:$0xff]
    %v676 = vld [vmem:[#allocation8 + $0xda8] sm:$0xff]
    %v677 = vld [vmem:[#allocation8 + $0xdb0] sm:$0xff]
    %v678 = vld [vmem:[#allocation8 + $0xdb8] sm:$0xff]
    %v679 = vld [vmem:[#allocation8 + $0xdc0] sm:$0xff]
    %v680 = vld [vmem:[#allocation8 + $0xdc8] sm:$0xff]
    %v681 = vld [vmem:[#allocation8 + $0xdd0] sm:$0xff]
    %v682 = vld [vmem:[#allocation8 + $0xdd8] sm:$0xff]
    %v683 = vld [vmem:[#allocation8 + $0xde0] sm:$0xff]
    %v684 = vld [vmem:[#allocation8 + $0xde8] sm:$0xff]
    %v685 = vld [vmem:[#allocation8 + $0xdf0] sm:$0xff]
    %v686 = vld [vmem:[#allocation8 + $0xdf8] sm:$0xff]
    %v687 = vld [vmem:[#allocation8 + $0xe00] sm:$0xff]
    %v688 = vld [vmem:[#allocation8 + $0xe08] sm:$0xff]
    %v689 = vld [vmem:[#allocation8 + $0xe10] sm:$0xff]
    %v690 = vld [vmem:[#allocation8 + $0xe18] sm:$0xff]
    %v691 = vld [vmem:[#allocation8 + $0xe20] sm:$0xff]
    %v692 = vld [vmem:[#allocation8 + $0xe28] sm:$0xff]
    %v693 = vld [vmem:[#allocation8 + $0xe30] sm:$0xff]
    %v694 = vld [vmem:[#allocation8 + $0xe38] sm:$0xff]
    %v695 = vld [vmem:[#allocation8 + $0xe40] sm:$0xff]
    %v696 = vld [vmem:[#allocation8 + $0xe48] sm:$0xff]
    %v697 = vld [vmem:[#allocation8 + $0xe50] sm:$0xff]
    %v698 = vld [vmem:[#allocation8 + $0xe58] sm:$0xff]
    %v699 = vld [vmem:[#allocation8 + $0xe60] sm:$0xff]
    %v700 = vld [vmem:[#allocation8 + $0xe68] sm:$0xff]
    %v701 = vld [vmem:[#allocation8 + $0xe70] sm:$0xff]
    %v702 = vld [vmem:[#allocation8 + $0xe78] sm:$0xff]
    %v703 = vld [vmem:[#allocation8 + $0xe80] sm:$0xff]
    %v704 = vld [vmem:[#allocation8 + $0xe88] sm:$0xff]
    %v705 = vld [vmem:[#allocation8 + $0xe90] sm:$0xff]
    %v706 = vld [vmem:[#allocation8 + $0xe98] sm:$0xff]
    %v707 = vld [vmem:[#allocation8 + $0xea0] sm:$0xff]
    %v708 = vld [vmem:[#allocation8 + $0xea8] sm:$0xff]
    %v709 = vld [vmem:[#allocation8 + $0xeb0] sm:$0xff]
    %v710 = vld [vmem:[#allocation8 + $0xeb8] sm:$0xff]
    %v711 = vld [vmem:[#allocation8 + $0xec0] sm:$0xff]
    %v712 = vld [vmem:[#allocation8 + $0xec8] sm:$0xff]
    %v713 = vld [vmem:[#allocation8 + $0xed0] sm:$0xff]
    %v714 = vld [vmem:[#allocation8 + $0xed8] sm:$0xff]
    %v715 = vld [vmem:[#allocation8 + $0xee0] sm:$0xff]
    %v716 = vld [vmem:[#allocation8 + $0xee8] sm:$0xff]
    %v717 = vld [vmem:[#allocation8 + $0xef0] sm:$0xff]
    %v718 = vld [vmem:[#allocation8 + $0xef8] sm:$0xff]
    %v719 = vld [vmem:[#allocation8 + $0xf00] sm:$0xff]
    %v720 = vld [vmem:[#allocation8 + $0xf08] sm:$0xff]
    %v721 = vld [vmem:[#allocation8 + $0xf10] sm:$0xff]
    %v722 = vld [vmem:[#allocation8 + $0xf18] sm:$0xff]
    %v723 = vld [vmem:[#allocation8 + $0xf20] sm:$0xff]
    %v724 = vld [vmem:[#allocation8 + $0xf28] sm:$0xff]
    %v725 = vld [vmem:[#allocation8 + $0xf30] sm:$0xff]
    %v726 = vld [vmem:[#allocation8 + $0xf38] sm:$0xff]
    %v727 = vld [vmem:[#allocation8 + $0xf40] sm:$0xff]
    %v728 = vld [vmem:[#allocation8 + $0xf48] sm:$0xff]
    %v729 = vld [vmem:[#allocation8 + $0xf50] sm:$0xff]
    %v730 = vld [vmem:[#allocation8 + $0xf58] sm:$0xff]
    %v731 = vld [vmem:[#allocation8 + $0xf60] sm:$0xff]
    %v732 = vld [vmem:[#allocation8 + $0xf68] sm:$0xff]
    %v733 = vld [vmem:[#allocation8 + $0xf70] sm:$0xff]
    %v734 = vld [vmem:[#allocation8 + $0xf78] sm:$0xff]
    %v735 = vld [vmem:[#allocation8 + $0xf80] sm:$0xff]
    %v736 = vld [vmem:[#allocation8 + $0xf88] sm:$0xff]
    %v737 = vld [vmem:[#allocation8 + $0xf90] sm:$0xff]
    %v738 = vld [vmem:[#allocation8 + $0xf98] sm:$0xff]
    %v739 = vld [vmem:[#allocation8 + $0xfa0] sm:$0xff]
    %v740 = vld [vmem:[#allocation8 + $0xfa8] sm:$0xff]
    %v741 = vld [vmem:[#allocation8 + $0xfb0] sm:$0xff]
    %v742 = vld [vmem:[#allocation8 + $0xfb8] sm:$0xff]
    %v743 = vld [vmem:[#allocation8 + $0xfc0] sm:$0xff]
    %v744 = vld [vmem:[#allocation8 + $0xfc8] sm:$0xff]
    %v745 = vld [vmem:[#allocation8 + $0xfd0] sm:$0xff]
    %v746 = vld [vmem:[#allocation8 + $0xfd8] sm:$0xff]
    %v747 = vld [vmem:[#allocation8 + $0xfe0] sm:$0xff]
    %v748 = vld [vmem:[#allocation8 + $0xfe8] sm:$0xff]
    %v749 = vld [vmem:[#allocation8 + $0xff0] sm:$0xff]
    %v750 = vld [vmem:[#allocation8 + $0xff8] sm:$0xff]
    %v1263 = vunpack.c.l.b16 %v239
    %v1264 = vunpack.c.h.b16 %v239
    %v1265 = vunpack.c.l.b16 %v240
    %v1266 = vunpack.c.h.b16 %v240
    %v1267 = vunpack.c.l.b16 %v241
    %v1268 = vunpack.c.h.b16 %v241
    %v1269 = vunpack.c.l.b16 %v242
    %v1270 = vunpack.c.h.b16 %v242
    %v1271 = vunpack.c.l.b16 %v243
    %v1272 = vunpack.c.h.b16 %v243
    %v1273 = vunpack.c.l.b16 %v244
    %v1274 = vunpack.c.h.b16 %v244
    %v1275 = vunpack.c.l.b16 %v245
    %v1276 = vunpack.c.h.b16 %v245
    %v1277 = vunpack.c.l.b16 %v246
    %v1278 = vunpack.c.h.b16 %v246
    %v1279 = vunpack.c.l.b16 %v247
    %v1280 = vunpack.c.h.b16 %v247
    %v1281 = vunpack.c.l.b16 %v248
    %v1282 = vunpack.c.h.b16 %v248
    %v1283 = vunpack.c.l.b16 %v249
    %v1284 = vunpack.c.h.b16 %v249
    %v1285 = vunpack.c.l.b16 %v250
    %v1286 = vunpack.c.h.b16 %v250
    %v1287 = vunpack.c.l.b16 %v251
    %v1288 = vunpack.c.h.b16 %v251
    %v1289 = vunpack.c.l.b16 %v252
    %v1290 = vunpack.c.h.b16 %v252
    %v1291 = vunpack.c.l.b16 %v253
    %v1292 = vunpack.c.h.b16 %v253
    %v1293 = vunpack.c.l.b16 %v254
    %v1294 = vunpack.c.h.b16 %v254
    %v1295 = vunpack.c.l.b16 %v255
    %v1296 = vunpack.c.h.b16 %v255
    %v1297 = vunpack.c.l.b16 %v256
    %v1298 = vunpack.c.h.b16 %v256
    %v1299 = vunpack.c.l.b16 %v257
    %v1300 = vunpack.c.h.b16 %v257
    %v1301 = vunpack.c.l.b16 %v258
    %v1302 = vunpack.c.h.b16 %v258
    %v1303 = vunpack.c.l.b16 %v259
    %v1304 = vunpack.c.h.b16 %v259
    %v1305 = vunpack.c.l.b16 %v260
    %v1306 = vunpack.c.h.b16 %v260
    %v1307 = vunpack.c.l.b16 %v261
    %v1308 = vunpack.c.h.b16 %v261
    %v1309 = vunpack.c.l.b16 %v262
    %v1310 = vunpack.c.h.b16 %v262
    %v1311 = vunpack.c.l.b16 %v263
    %v1312 = vunpack.c.h.b16 %v263
    %v1313 = vunpack.c.l.b16 %v264
    %v1314 = vunpack.c.h.b16 %v264
    %v1315 = vunpack.c.l.b16 %v265
    %v1316 = vunpack.c.h.b16 %v265
    %v1317 = vunpack.c.l.b16 %v266
    %v1318 = vunpack.c.h.b16 %v266
    %v1319 = vunpack.c.l.b16 %v267
    %v1320 = vunpack.c.h.b16 %v267
    %v1321 = vunpack.c.l.b16 %v268
    %v1322 = vunpack.c.h.b16 %v268
    %v1323 = vunpack.c.l.b16 %v269
    %v1324 = vunpack.c.h.b16 %v269
    %v1325 = vunpack.c.l.b16 %v270
    %v1326 = vunpack.c.h.b16 %v270
    %v1327 = vunpack.c.l.b16 %v271
    %v1328 = vunpack.c.h.b16 %v271
    %v1329 = vunpack.c.l.b16 %v272
    %v1330 = vunpack.c.h.b16 %v272
    %v1331 = vunpack.c.l.b16 %v273
    %v1332 = vunpack.c.h.b16 %v273
    %v1333 = vunpack.c.l.b16 %v274
    %v1334 = vunpack.c.h.b16 %v274
    %v1335 = vunpack.c.l.b16 %v275
    %v1336 = vunpack.c.h.b16 %v275
    %v1337 = vunpack.c.l.b16 %v276
    %v1338 = vunpack.c.h.b16 %v276
    %v1339 = vunpack.c.l.b16 %v277
    %v1340 = vunpack.c.h.b16 %v277
    %v1341 = vunpack.c.l.b16 %v278
    %v1342 = vunpack.c.h.b16 %v278
    %v1343 = vunpack.c.l.b16 %v279
    %v1344 = vunpack.c.h.b16 %v279
    %v1345 = vunpack.c.l.b16 %v280
    %v1346 = vunpack.c.h.b16 %v280
    %v1347 = vunpack.c.l.b16 %v281
    %v1348 = vunpack.c.h.b16 %v281
    %v1349 = vunpack.c.l.b16 %v282
    %v1350 = vunpack.c.h.b16 %v282
    %v1351 = vunpack.c.l.b16 %v283
    %v1352 = vunpack.c.h.b16 %v283
    %v1353 = vunpack.c.l.b16 %v284
    %v1354 = vunpack.c.h.b16 %v284
    %v1355 = vunpack.c.l.b16 %v285
    %v1356 = vunpack.c.h.b16 %v285
    %v1357 = vunpack.c.l.b16 %v286
    %v1358 = vunpack.c.h.b16 %v286
    %v1359 = vunpack.c.l.b16 %v287
    %v1360 = vunpack.c.h.b16 %v287
    %v1361 = vunpack.c.l.b16 %v288
    %v1362 = vunpack.c.h.b16 %v288
    %v1363 = vunpack.c.l.b16 %v289
    %v1364 = vunpack.c.h.b16 %v289
    %v1365 = vunpack.c.l.b16 %v290
    %v1366 = vunpack.c.h.b16 %v290
    %v1367 = vunpack.c.l.b16 %v291
    %v1368 = vunpack.c.h.b16 %v291
    %v1369 = vunpack.c.l.b16 %v292
    %v1370 = vunpack.c.h.b16 %v292
    %v1371 = vunpack.c.l.b16 %v293
    %v1372 = vunpack.c.h.b16 %v293
    %v1373 = vunpack.c.l.b16 %v294
    %v1374 = vunpack.c.h.b16 %v294
    %v1375 = vunpack.c.l.b16 %v295
    %v1376 = vunpack.c.h.b16 %v295
    %v1377 = vunpack.c.l.b16 %v296
    %v1378 = vunpack.c.h.b16 %v296
    %v1379 = vunpack.c.l.b16 %v297
    %v1380 = vunpack.c.h.b16 %v297
    %v1381 = vunpack.c.l.b16 %v298
    %v1382 = vunpack.c.h.b16 %v298
    %v1383 = vunpack.c.l.b16 %v299
    %v1384 = vunpack.c.h.b16 %v299
    %v1385 = vunpack.c.l.b16 %v300
    %v1386 = vunpack.c.h.b16 %v300
    %v1387 = vunpack.c.l.b16 %v301
    %v1388 = vunpack.c.h.b16 %v301
    %v1389 = vunpack.c.l.b16 %v302
    %v1390 = vunpack.c.h.b16 %v302
    %v1391 = vunpack.c.l.b16 %v303
    %v1392 = vunpack.c.h.b16 %v303
    %v1393 = vunpack.c.l.b16 %v304
    %v1394 = vunpack.c.h.b16 %v304
    %v1395 = vunpack.c.l.b16 %v305
    %v1396 = vunpack.c.h.b16 %v305
    %v1397 = vunpack.c.l.b16 %v306
    %v1398 = vunpack.c.h.b16 %v306
    %v1399 = vunpack.c.l.b16 %v307
    %v1400 = vunpack.c.h.b16 %v307
    %v1401 = vunpack.c.l.b16 %v308
    %v1402 = vunpack.c.h.b16 %v308
    %v1403 = vunpack.c.l.b16 %v309
    %v1404 = vunpack.c.h.b16 %v309
    %v1405 = vunpack.c.l.b16 %v310
    %v1406 = vunpack.c.h.b16 %v310
    %v1407 = vunpack.c.l.b16 %v311
    %v1408 = vunpack.c.h.b16 %v311
    %v1409 = vunpack.c.l.b16 %v312
    %v1410 = vunpack.c.h.b16 %v312
    %v1411 = vunpack.c.l.b16 %v313
    %v1412 = vunpack.c.h.b16 %v313
    %v1413 = vunpack.c.l.b16 %v314
    %v1414 = vunpack.c.h.b16 %v314
    %v1415 = vunpack.c.l.b16 %v315
    %v1416 = vunpack.c.h.b16 %v315
    %v1417 = vunpack.c.l.b16 %v316
    %v1418 = vunpack.c.h.b16 %v316
    %v1419 = vunpack.c.l.b16 %v317
    %v1420 = vunpack.c.h.b16 %v317
    %v1421 = vunpack.c.l.b16 %v318
    %v1422 = vunpack.c.h.b16 %v318
    %v1423 = vunpack.c.l.b16 %v319
    %v1424 = vunpack.c.h.b16 %v319
    %v1425 = vunpack.c.l.b16 %v320
    %v1426 = vunpack.c.h.b16 %v320
    %v1427 = vunpack.c.l.b16 %v321
    %v1428 = vunpack.c.h.b16 %v321
    %v1429 = vunpack.c.l.b16 %v322
    %v1430 = vunpack.c.h.b16 %v322
    %v1431 = vunpack.c.l.b16 %v323
    %v1432 = vunpack.c.h.b16 %v323
    %v1433 = vunpack.c.l.b16 %v324
    %v1434 = vunpack.c.h.b16 %v324
    %v1435 = vunpack.c.l.b16 %v325
    %v1436 = vunpack.c.h.b16 %v325
    %v1437 = vunpack.c.l.b16 %v326
    %v1438 = vunpack.c.h.b16 %v326
    %v1439 = vunpack.c.l.b16 %v327
    %v1440 = vunpack.c.h.b16 %v327
    %v1441 = vunpack.c.l.b16 %v328
    %v1442 = vunpack.c.h.b16 %v328
    %v1443 = vunpack.c.l.b16 %v329
    %v1444 = vunpack.c.h.b16 %v329
    %v1445 = vunpack.c.l.b16 %v330
    %v1446 = vunpack.c.h.b16 %v330
    %v1447 = vunpack.c.l.b16 %v331
    %v1448 = vunpack.c.h.b16 %v331
    %v1449 = vunpack.c.l.b16 %v332
    %v1450 = vunpack.c.h.b16 %v332
    %v1451 = vunpack.c.l.b16 %v333
    %v1452 = vunpack.c.h.b16 %v333
    %v1453 = vunpack.c.l.b16 %v334
    %v1454 = vunpack.c.h.b16 %v334
    %v1455 = vunpack.c.l.b16 %v335
    %v1456 = vunpack.c.h.b16 %v335
    %v1457 = vunpack.c.l.b16 %v336
    %v1458 = vunpack.c.h.b16 %v336
    %v1459 = vunpack.c.l.b16 %v337
    %v1460 = vunpack.c.h.b16 %v337
    %v1461 = vunpack.c.l.b16 %v338
    %v1462 = vunpack.c.h.b16 %v338
    %v1463 = vunpack.c.l.b16 %v339
    %v1464 = vunpack.c.h.b16 %v339
    %v1465 = vunpack.c.l.b16 %v340
    %v1466 = vunpack.c.h.b16 %v340
    %v1467 = vunpack.c.l.b16 %v341
    %v1468 = vunpack.c.h.b16 %v341
    %v1469 = vunpack.c.l.b16 %v342
    %v1470 = vunpack.c.h.b16 %v342
    %v1471 = vunpack.c.l.b16 %v343
    %v1472 = vunpack.c.h.b16 %v343
    %v1473 = vunpack.c.l.b16 %v344
    %v1474 = vunpack.c.h.b16 %v344
    %v1475 = vunpack.c.l.b16 %v345
    %v1476 = vunpack.c.h.b16 %v345
    %v1477 = vunpack.c.l.b16 %v346
    %v1478 = vunpack.c.h.b16 %v346
    %v1479 = vunpack.c.l.b16 %v347
    %v1480 = vunpack.c.h.b16 %v347
    %v1481 = vunpack.c.l.b16 %v348
    %v1482 = vunpack.c.h.b16 %v348
    %v1483 = vunpack.c.l.b16 %v349
    %v1484 = vunpack.c.h.b16 %v349
    %v1485 = vunpack.c.l.b16 %v350
    %v1486 = vunpack.c.h.b16 %v350
    %v1487 = vunpack.c.l.b16 %v351
    %v1488 = vunpack.c.h.b16 %v351
    %v1489 = vunpack.c.l.b16 %v352
    %v1490 = vunpack.c.h.b16 %v352
    %v1491 = vunpack.c.l.b16 %v353
    %v1492 = vunpack.c.h.b16 %v353
    %v1493 = vunpack.c.l.b16 %v354
    %v1494 = vunpack.c.h.b16 %v354
    %v1495 = vunpack.c.l.b16 %v355
    %v1496 = vunpack.c.h.b16 %v355
    %v1497 = vunpack.c.l.b16 %v356
    %v1498 = vunpack.c.h.b16 %v356
    %v1499 = vunpack.c.l.b16 %v357
    %v1500 = vunpack.c.h.b16 %v357
    %v1501 = vunpack.c.l.b16 %v358
    %v1502 = vunpack.c.h.b16 %v358
    %v1503 = vunpack.c.l.b16 %v359
    %v1504 = vunpack.c.h.b16 %v359
    %v1505 = vunpack.c.l.b16 %v360
    %v1506 = vunpack.c.h.b16 %v360
    %v1507 = vunpack.c.l.b16 %v361
    %v1508 = vunpack.c.h.b16 %v361
    %v1509 = vunpack.c.l.b16 %v362
    %v1510 = vunpack.c.h.b16 %v362
    %v1511 = vunpack.c.l.b16 %v363
    %v1512 = vunpack.c.h.b16 %v363
    %v1513 = vunpack.c.l.b16 %v364
    %v1514 = vunpack.c.h.b16 %v364
    %v1515 = vunpack.c.l.b16 %v365
    %v1516 = vunpack.c.h.b16 %v365
    %v1517 = vunpack.c.l.b16 %v366
    %v1518 = vunpack.c.h.b16 %v366
    %v1519 = vunpack.c.l.b16 %v367
    %v1520 = vunpack.c.h.b16 %v367
    %v1521 = vunpack.c.l.b16 %v368
    %v1522 = vunpack.c.h.b16 %v368
    %v1523 = vunpack.c.l.b16 %v369
    %v1524 = vunpack.c.h.b16 %v369
    %v1525 = vunpack.c.l.b16 %v370
    %v1526 = vunpack.c.h.b16 %v370
    %v1527 = vunpack.c.l.b16 %v371
    %v1528 = vunpack.c.h.b16 %v371
    %v1529 = vunpack.c.l.b16 %v372
    %v1530 = vunpack.c.h.b16 %v372
    %v1531 = vunpack.c.l.b16 %v373
    %v1532 = vunpack.c.h.b16 %v373
    %v1533 = vunpack.c.l.b16 %v374
    %v1534 = vunpack.c.h.b16 %v374
    %v1535 = vunpack.c.l.b16 %v375
    %v1536 = vunpack.c.h.b16 %v375
    %v1537 = vunpack.c.l.b16 %v376
    %v1538 = vunpack.c.h.b16 %v376
    %v1539 = vunpack.c.l.b16 %v377
    %v1540 = vunpack.c.h.b16 %v377
    %v1541 = vunpack.c.l.b16 %v378
    %v1542 = vunpack.c.h.b16 %v378
    %v1543 = vunpack.c.l.b16 %v379
    %v1544 = vunpack.c.h.b16 %v379
    %v1545 = vunpack.c.l.b16 %v380
    %v1546 = vunpack.c.h.b16 %v380
    %v1547 = vunpack.c.l.b16 %v381
    %v1548 = vunpack.c.h.b16 %v381
    %v1549 = vunpack.c.l.b16 %v382
    %v1550 = vunpack.c.h.b16 %v382
    %v1551 = vunpack.c.l.b16 %v383
    %v1552 = vunpack.c.h.b16 %v383
    %v1553 = vunpack.c.l.b16 %v384
    %v1554 = vunpack.c.h.b16 %v384
    %v1555 = vunpack.c.l.b16 %v385
    %v1556 = vunpack.c.h.b16 %v385
    %v1557 = vunpack.c.l.b16 %v386
    %v1558 = vunpack.c.h.b16 %v386
    %v1559 = vunpack.c.l.b16 %v387
    %v1560 = vunpack.c.h.b16 %v387
    %v1561 = vunpack.c.l.b16 %v388
    %v1562 = vunpack.c.h.b16 %v388
    %v1563 = vunpack.c.l.b16 %v389
    %v1564 = vunpack.c.h.b16 %v389
    %v1565 = vunpack.c.l.b16 %v390
    %v1566 = vunpack.c.h.b16 %v390
    %v1567 = vunpack.c.l.b16 %v391
    %v1568 = vunpack.c.h.b16 %v391
    %v1569 = vunpack.c.l.b16 %v392
    %v1570 = vunpack.c.h.b16 %v392
    %v1571 = vunpack.c.l.b16 %v393
    %v1572 = vunpack.c.h.b16 %v393
    %v1573 = vunpack.c.l.b16 %v394
    %v1574 = vunpack.c.h.b16 %v394
    %v1575 = vunpack.c.l.b16 %v395
    %v1576 = vunpack.c.h.b16 %v395
    %v1577 = vunpack.c.l.b16 %v396
    %v1578 = vunpack.c.h.b16 %v396
    %v1579 = vunpack.c.l.b16 %v397
    %v1580 = vunpack.c.h.b16 %v397
    %v1581 = vunpack.c.l.b16 %v398
    %v1582 = vunpack.c.h.b16 %v398
    %v1583 = vunpack.c.l.b16 %v399
    %v1584 = vunpack.c.h.b16 %v399
    %v1585 = vunpack.c.l.b16 %v400
    %v1586 = vunpack.c.h.b16 %v400
    %v1587 = vunpack.c.l.b16 %v401
    %v1588 = vunpack.c.h.b16 %v401
    %v1589 = vunpack.c.l.b16 %v402
    %v1590 = vunpack.c.h.b16 %v402
    %v1591 = vunpack.c.l.b16 %v403
    %v1592 = vunpack.c.h.b16 %v403
    %v1593 = vunpack.c.l.b16 %v404
    %v1594 = vunpack.c.h.b16 %v404
    %v1595 = vunpack.c.l.b16 %v405
    %v1596 = vunpack.c.h.b16 %v405
    %v1597 = vunpack.c.l.b16 %v406
    %v1598 = vunpack.c.h.b16 %v406
    %v1599 = vunpack.c.l.b16 %v407
    %v1600 = vunpack.c.h.b16 %v407
    %v1601 = vunpack.c.l.b16 %v408
    %v1602 = vunpack.c.h.b16 %v408
    %v1603 = vunpack.c.l.b16 %v409
    %v1604 = vunpack.c.h.b16 %v409
    %v1605 = vunpack.c.l.b16 %v410
    %v1606 = vunpack.c.h.b16 %v410
    %v1607 = vunpack.c.l.b16 %v411
    %v1608 = vunpack.c.h.b16 %v411
    %v1609 = vunpack.c.l.b16 %v412
    %v1610 = vunpack.c.h.b16 %v412
    %v1611 = vunpack.c.l.b16 %v413
    %v1612 = vunpack.c.h.b16 %v413
    %v1613 = vunpack.c.l.b16 %v414
    %v1614 = vunpack.c.h.b16 %v414
    %v1615 = vunpack.c.l.b16 %v415
    %v1616 = vunpack.c.h.b16 %v415
    %v1617 = vunpack.c.l.b16 %v416
    %v1618 = vunpack.c.h.b16 %v416
    %v1619 = vunpack.c.l.b16 %v417
    %v1620 = vunpack.c.h.b16 %v417
    %v1621 = vunpack.c.l.b16 %v418
    %v1622 = vunpack.c.h.b16 %v418
    %v1623 = vunpack.c.l.b16 %v419
    %v1624 = vunpack.c.h.b16 %v419
    %v1625 = vunpack.c.l.b16 %v420
    %v1626 = vunpack.c.h.b16 %v420
    %v1627 = vunpack.c.l.b16 %v421
    %v1628 = vunpack.c.h.b16 %v421
    %v1629 = vunpack.c.l.b16 %v422
    %v1630 = vunpack.c.h.b16 %v422
    %v1631 = vunpack.c.l.b16 %v423
    %v1632 = vunpack.c.h.b16 %v423
    %v1633 = vunpack.c.l.b16 %v424
    %v1634 = vunpack.c.h.b16 %v424
    %v1635 = vunpack.c.l.b16 %v425
    %v1636 = vunpack.c.h.b16 %v425
    %v1637 = vunpack.c.l.b16 %v426
    %v1638 = vunpack.c.h.b16 %v426
    %v1639 = vunpack.c.l.b16 %v427
    %v1640 = vunpack.c.h.b16 %v427
    %v1641 = vunpack.c.l.b16 %v428
    %v1642 = vunpack.c.h.b16 %v428
    %v1643 = vunpack.c.l.b16 %v429
    %v1644 = vunpack.c.h.b16 %v429
    %v1645 = vunpack.c.l.b16 %v430
    %v1646 = vunpack.c.h.b16 %v430
    %v1647 = vunpack.c.l.b16 %v431
    %v1648 = vunpack.c.h.b16 %v431
    %v1649 = vunpack.c.l.b16 %v432
    %v1650 = vunpack.c.h.b16 %v432
    %v1651 = vunpack.c.l.b16 %v433
    %v1652 = vunpack.c.h.b16 %v433
    %v1653 = vunpack.c.l.b16 %v434
    %v1654 = vunpack.c.h.b16 %v434
    %v1655 = vunpack.c.l.b16 %v435
    %v1656 = vunpack.c.h.b16 %v435
    %v1657 = vunpack.c.l.b16 %v436
    %v1658 = vunpack.c.h.b16 %v436
    %v1659 = vunpack.c.l.b16 %v437
    %v1660 = vunpack.c.h.b16 %v437
    %v1661 = vunpack.c.l.b16 %v438
    %v1662 = vunpack.c.h.b16 %v438
    %v1663 = vunpack.c.l.b16 %v439
    %v1664 = vunpack.c.h.b16 %v439
    %v1665 = vunpack.c.l.b16 %v440
    %v1666 = vunpack.c.h.b16 %v440
    %v1667 = vunpack.c.l.b16 %v441
    %v1668 = vunpack.c.h.b16 %v441
    %v1669 = vunpack.c.l.b16 %v442
    %v1670 = vunpack.c.h.b16 %v442
    %v1671 = vunpack.c.l.b16 %v443
    %v1672 = vunpack.c.h.b16 %v443
    %v1673 = vunpack.c.l.b16 %v444
    %v1674 = vunpack.c.h.b16 %v444
    %v1675 = vunpack.c.l.b16 %v445
    %v1676 = vunpack.c.h.b16 %v445
    %v1677 = vunpack.c.l.b16 %v446
    %v1678 = vunpack.c.h.b16 %v446
    %v1679 = vunpack.c.l.b16 %v447
    %v1680 = vunpack.c.h.b16 %v447
    %v1681 = vunpack.c.l.b16 %v448
    %v1682 = vunpack.c.h.b16 %v448
    %v1683 = vunpack.c.l.b16 %v449
    %v1684 = vunpack.c.h.b16 %v449
    %v1685 = vunpack.c.l.b16 %v450
    %v1686 = vunpack.c.h.b16 %v450
    %v1687 = vunpack.c.l.b16 %v451
    %v1688 = vunpack.c.h.b16 %v451
    %v1689 = vunpack.c.l.b16 %v452
    %v1690 = vunpack.c.h.b16 %v452
    %v1691 = vunpack.c.l.b16 %v453
    %v1692 = vunpack.c.h.b16 %v453
    %v1693 = vunpack.c.l.b16 %v454
    %v1694 = vunpack.c.h.b16 %v454
    %v1695 = vunpack.c.l.b16 %v455
    %v1696 = vunpack.c.h.b16 %v455
    %v1697 = vunpack.c.l.b16 %v456
    %v1698 = vunpack.c.h.b16 %v456
    %v1699 = vunpack.c.l.b16 %v457
    %v1700 = vunpack.c.h.b16 %v457
    %v1701 = vunpack.c.l.b16 %v458
    %v1702 = vunpack.c.h.b16 %v458
    %v1703 = vunpack.c.l.b16 %v459
    %v1704 = vunpack.c.h.b16 %v459
    %v1705 = vunpack.c.l.b16 %v460
    %v1706 = vunpack.c.h.b16 %v460
    %v1707 = vunpack.c.l.b16 %v461
    %v1708 = vunpack.c.h.b16 %v461
    %v1709 = vunpack.c.l.b16 %v462
    %v1710 = vunpack.c.h.b16 %v462
    %v1711 = vunpack.c.l.b16 %v463
    %v1712 = vunpack.c.h.b16 %v463
    %v1713 = vunpack.c.l.b16 %v464
    %v1714 = vunpack.c.h.b16 %v464
    %v1715 = vunpack.c.l.b16 %v465
    %v1716 = vunpack.c.h.b16 %v465
    %v1717 = vunpack.c.l.b16 %v466
    %v1718 = vunpack.c.h.b16 %v466
    %v1719 = vunpack.c.l.b16 %v467
    %v1720 = vunpack.c.h.b16 %v467
    %v1721 = vunpack.c.l.b16 %v468
    %v1722 = vunpack.c.h.b16 %v468
    %v1723 = vunpack.c.l.b16 %v469
    %v1724 = vunpack.c.h.b16 %v469
    %v1725 = vunpack.c.l.b16 %v470
    %v1726 = vunpack.c.h.b16 %v470
    %v1727 = vunpack.c.l.b16 %v471
    %v1728 = vunpack.c.h.b16 %v471
    %v1729 = vunpack.c.l.b16 %v472
    %v1730 = vunpack.c.h.b16 %v472
    %v1731 = vunpack.c.l.b16 %v473
    %v1732 = vunpack.c.h.b16 %v473
    %v1733 = vunpack.c.l.b16 %v474
    %v1734 = vunpack.c.h.b16 %v474
    %v1735 = vunpack.c.l.b16 %v475
    %v1736 = vunpack.c.h.b16 %v475
    %v1737 = vunpack.c.l.b16 %v476
    %v1738 = vunpack.c.h.b16 %v476
    %v1739 = vunpack.c.l.b16 %v477
    %v1740 = vunpack.c.h.b16 %v477
    %v1741 = vunpack.c.l.b16 %v478
    %v1742 = vunpack.c.h.b16 %v478
    %v1743 = vunpack.c.l.b16 %v479
    %v1744 = vunpack.c.h.b16 %v479
    %v1745 = vunpack.c.l.b16 %v480
    %v1746 = vunpack.c.h.b16 %v480
    %v1747 = vunpack.c.l.b16 %v481
    %v1748 = vunpack.c.h.b16 %v481
    %v1749 = vunpack.c.l.b16 %v482
    %v1750 = vunpack.c.h.b16 %v482
    %v1751 = vunpack.c.l.b16 %v483
    %v1752 = vunpack.c.h.b16 %v483
    %v1753 = vunpack.c.l.b16 %v484
    %v1754 = vunpack.c.h.b16 %v484
    %v1755 = vunpack.c.l.b16 %v485
    %v1756 = vunpack.c.h.b16 %v485
    %v1757 = vunpack.c.l.b16 %v486
    %v1758 = vunpack.c.h.b16 %v486
    %v1759 = vunpack.c.l.b16 %v487
    %v1760 = vunpack.c.h.b16 %v487
    %v1761 = vunpack.c.l.b16 %v488
    %v1762 = vunpack.c.h.b16 %v488
    %v1763 = vunpack.c.l.b16 %v489
    %v1764 = vunpack.c.h.b16 %v489
    %v1765 = vunpack.c.l.b16 %v490
    %v1766 = vunpack.c.h.b16 %v490
    %v1767 = vunpack.c.l.b16 %v491
    %v1768 = vunpack.c.h.b16 %v491
    %v1769 = vunpack.c.l.b16 %v492
    %v1770 = vunpack.c.h.b16 %v492
    %v1771 = vunpack.c.l.b16 %v493
    %v1772 = vunpack.c.h.b16 %v493
    %v1773 = vunpack.c.l.b16 %v494
    %v1774 = vunpack.c.h.b16 %v494
    %v1775 = vunpack.c.l.b16 %v495
    %v1776 = vunpack.c.h.b16 %v495
    %v1777 = vunpack.c.l.b16 %v496
    %v1778 = vunpack.c.h.b16 %v496
    %v1779 = vunpack.c.l.b16 %v497
    %v1780 = vunpack.c.h.b16 %v497
    %v1781 = vunpack.c.l.b16 %v498
    %v1782 = vunpack.c.h.b16 %v498
    %v1783 = vunpack.c.l.b16 %v499
    %v1784 = vunpack.c.h.b16 %v499
    %v1785 = vunpack.c.l.b16 %v500
    %v1786 = vunpack.c.h.b16 %v500
    %v1787 = vunpack.c.l.b16 %v501
    %v1788 = vunpack.c.h.b16 %v501
    %v1789 = vunpack.c.l.b16 %v502
    %v1790 = vunpack.c.h.b16 %v502
    %v1791 = vunpack.c.l.b16 %v503
    %v1792 = vunpack.c.h.b16 %v503
    %v1793 = vunpack.c.l.b16 %v504
    %v1794 = vunpack.c.h.b16 %v504
    %v1795 = vunpack.c.l.b16 %v505
    %v1796 = vunpack.c.h.b16 %v505
    %v1797 = vunpack.c.l.b16 %v506
    %v1798 = vunpack.c.h.b16 %v506
    %v1799 = vunpack.c.l.b16 %v507
    %v1800 = vunpack.c.h.b16 %v507
    %v1801 = vunpack.c.l.b16 %v508
    %v1802 = vunpack.c.h.b16 %v508
    %v1803 = vunpack.c.l.b16 %v509
    %v1804 = vunpack.c.h.b16 %v509
    %v1805 = vunpack.c.l.b16 %v510
    %v1806 = vunpack.c.h.b16 %v510
    %v1807 = vunpack.c.l.b16 %v511
    %v1808 = vunpack.c.h.b16 %v511
    %v1809 = vunpack.c.l.b16 %v512
    %v1810 = vunpack.c.h.b16 %v512
    %v1811 = vunpack.c.l.b16 %v513
    %v1812 = vunpack.c.h.b16 %v513
    %v1813 = vunpack.c.l.b16 %v514
    %v1814 = vunpack.c.h.b16 %v514
    %v1815 = vunpack.c.l.b16 %v515
    %v1816 = vunpack.c.h.b16 %v515
    %v1817 = vunpack.c.l.b16 %v516
    %v1818 = vunpack.c.h.b16 %v516
    %v1819 = vunpack.c.l.b16 %v517
    %v1820 = vunpack.c.h.b16 %v517
    %v1821 = vunpack.c.l.b16 %v518
    %v1822 = vunpack.c.h.b16 %v518
    %v1823 = vunpack.c.l.b16 %v519
    %v1824 = vunpack.c.h.b16 %v519
    %v1825 = vunpack.c.l.b16 %v520
    %v1826 = vunpack.c.h.b16 %v520
    %v1827 = vunpack.c.l.b16 %v521
    %v1828 = vunpack.c.h.b16 %v521
    %v1829 = vunpack.c.l.b16 %v522
    %v1830 = vunpack.c.h.b16 %v522
    %v1831 = vunpack.c.l.b16 %v523
    %v1832 = vunpack.c.h.b16 %v523
    %v1833 = vunpack.c.l.b16 %v524
    %v1834 = vunpack.c.h.b16 %v524
    %v1835 = vunpack.c.l.b16 %v525
    %v1836 = vunpack.c.h.b16 %v525
    %v1837 = vunpack.c.l.b16 %v526
    %v1838 = vunpack.c.h.b16 %v526
    %v1839 = vunpack.c.l.b16 %v527
    %v1840 = vunpack.c.h.b16 %v527
    %v1841 = vunpack.c.l.b16 %v528
    %v1842 = vunpack.c.h.b16 %v528
    %v1843 = vunpack.c.l.b16 %v529
    %v1844 = vunpack.c.h.b16 %v529
    %v1845 = vunpack.c.l.b16 %v530
    %v1846 = vunpack.c.h.b16 %v530
    %v1847 = vunpack.c.l.b16 %v531
    %v1848 = vunpack.c.h.b16 %v531
    %v1849 = vunpack.c.l.b16 %v532
    %v1850 = vunpack.c.h.b16 %v532
    %v1851 = vunpack.c.l.b16 %v533
    %v1852 = vunpack.c.h.b16 %v533
    %v1853 = vunpack.c.l.b16 %v534
    %v1854 = vunpack.c.h.b16 %v534
    %v1855 = vunpack.c.l.b16 %v535
    %v1856 = vunpack.c.h.b16 %v535
    %v1857 = vunpack.c.l.b16 %v536
    %v1858 = vunpack.c.h.b16 %v536
    %v1859 = vunpack.c.l.b16 %v537
    %v1860 = vunpack.c.h.b16 %v537
    %v1861 = vunpack.c.l.b16 %v538
    %v1862 = vunpack.c.h.b16 %v538
    %v1863 = vunpack.c.l.b16 %v539
    %v1864 = vunpack.c.h.b16 %v539
    %v1865 = vunpack.c.l.b16 %v540
    %v1866 = vunpack.c.h.b16 %v540
    %v1867 = vunpack.c.l.b16 %v541
    %v1868 = vunpack.c.h.b16 %v541
    %v1869 = vunpack.c.l.b16 %v542
    %v1870 = vunpack.c.h.b16 %v542
    %v1871 = vunpack.c.l.b16 %v543
    %v1872 = vunpack.c.h.b16 %v543
    %v1873 = vunpack.c.l.b16 %v544
    %v1874 = vunpack.c.h.b16 %v544
    %v1875 = vunpack.c.l.b16 %v545
    %v1876 = vunpack.c.h.b16 %v545
    %v1877 = vunpack.c.l.b16 %v546
    %v1878 = vunpack.c.h.b16 %v546
    %v1879 = vunpack.c.l.b16 %v547
    %v1880 = vunpack.c.h.b16 %v547
    %v1881 = vunpack.c.l.b16 %v548
    %v1882 = vunpack.c.h.b16 %v548
    %v1883 = vunpack.c.l.b16 %v549
    %v1884 = vunpack.c.h.b16 %v549
    %v1885 = vunpack.c.l.b16 %v550
    %v1886 = vunpack.c.h.b16 %v550
    %v1887 = vunpack.c.l.b16 %v551
    %v1888 = vunpack.c.h.b16 %v551
    %v1889 = vunpack.c.l.b16 %v552
    %v1890 = vunpack.c.h.b16 %v552
    %v1891 = vunpack.c.l.b16 %v553
    %v1892 = vunpack.c.h.b16 %v553
    %v1893 = vunpack.c.l.b16 %v554
    %v1894 = vunpack.c.h.b16 %v554
    %v1895 = vunpack.c.l.b16 %v555
    %v1896 = vunpack.c.h.b16 %v555
    %v1897 = vunpack.c.l.b16 %v556
    %v1898 = vunpack.c.h.b16 %v556
    %v1899 = vunpack.c.l.b16 %v557
    %v1900 = vunpack.c.h.b16 %v557
    %v1901 = vunpack.c.l.b16 %v558
    %v1902 = vunpack.c.h.b16 %v558
    %v1903 = vunpack.c.l.b16 %v559
    %v1904 = vunpack.c.h.b16 %v559
    %v1905 = vunpack.c.l.b16 %v560
    %v1906 = vunpack.c.h.b16 %v560
    %v1907 = vunpack.c.l.b16 %v561
    %v1908 = vunpack.c.h.b16 %v561
    %v1909 = vunpack.c.l.b16 %v562
    %v1910 = vunpack.c.h.b16 %v562
    %v1911 = vunpack.c.l.b16 %v563
    %v1912 = vunpack.c.h.b16 %v563
    %v1913 = vunpack.c.l.b16 %v564
    %v1914 = vunpack.c.h.b16 %v564
    %v1915 = vunpack.c.l.b16 %v565
    %v1916 = vunpack.c.h.b16 %v565
    %v1917 = vunpack.c.l.b16 %v566
    %v1918 = vunpack.c.h.b16 %v566
    %v1919 = vunpack.c.l.b16 %v567
    %v1920 = vunpack.c.h.b16 %v567
    %v1921 = vunpack.c.l.b16 %v568
    %v1922 = vunpack.c.h.b16 %v568
    %v1923 = vunpack.c.l.b16 %v569
    %v1924 = vunpack.c.h.b16 %v569
    %v1925 = vunpack.c.l.b16 %v570
    %v1926 = vunpack.c.h.b16 %v570
    %v1927 = vunpack.c.l.b16 %v571
    %v1928 = vunpack.c.h.b16 %v571
    %v1929 = vunpack.c.l.b16 %v572
    %v1930 = vunpack.c.h.b16 %v572
    %v1931 = vunpack.c.l.b16 %v573
    %v1932 = vunpack.c.h.b16 %v573
    %v1933 = vunpack.c.l.b16 %v574
    %v1934 = vunpack.c.h.b16 %v574
    %v1935 = vunpack.c.l.b16 %v575
    %v1936 = vunpack.c.h.b16 %v575
    %v1937 = vunpack.c.l.b16 %v576
    %v1938 = vunpack.c.h.b16 %v576
    %v1939 = vunpack.c.l.b16 %v577
    %v1940 = vunpack.c.h.b16 %v577
    %v1941 = vunpack.c.l.b16 %v578
    %v1942 = vunpack.c.h.b16 %v578
    %v1943 = vunpack.c.l.b16 %v579
    %v1944 = vunpack.c.h.b16 %v579
    %v1945 = vunpack.c.l.b16 %v580
    %v1946 = vunpack.c.h.b16 %v580
    %v1947 = vunpack.c.l.b16 %v581
    %v1948 = vunpack.c.h.b16 %v581
    %v1949 = vunpack.c.l.b16 %v582
    %v1950 = vunpack.c.h.b16 %v582
    %v1951 = vunpack.c.l.b16 %v583
    %v1952 = vunpack.c.h.b16 %v583
    %v1953 = vunpack.c.l.b16 %v584
    %v1954 = vunpack.c.h.b16 %v584
    %v1955 = vunpack.c.l.b16 %v585
    %v1956 = vunpack.c.h.b16 %v585
    %v1957 = vunpack.c.l.b16 %v586
    %v1958 = vunpack.c.h.b16 %v586
    %v1959 = vunpack.c.l.b16 %v587
    %v1960 = vunpack.c.h.b16 %v587
    %v1961 = vunpack.c.l.b16 %v588
    %v1962 = vunpack.c.h.b16 %v588
    %v1963 = vunpack.c.l.b16 %v589
    %v1964 = vunpack.c.h.b16 %v589
    %v1965 = vunpack.c.l.b16 %v590
    %v1966 = vunpack.c.h.b16 %v590
    %v1967 = vunpack.c.l.b16 %v591
    %v1968 = vunpack.c.h.b16 %v591
    %v1969 = vunpack.c.l.b16 %v592
    %v1970 = vunpack.c.h.b16 %v592
    %v1971 = vunpack.c.l.b16 %v593
    %v1972 = vunpack.c.h.b16 %v593
    %v1973 = vunpack.c.l.b16 %v594
    %v1974 = vunpack.c.h.b16 %v594
    %v1975 = vunpack.c.l.b16 %v595
    %v1976 = vunpack.c.h.b16 %v595
    %v1977 = vunpack.c.l.b16 %v596
    %v1978 = vunpack.c.h.b16 %v596
    %v1979 = vunpack.c.l.b16 %v597
    %v1980 = vunpack.c.h.b16 %v597
    %v1981 = vunpack.c.l.b16 %v598
    %v1982 = vunpack.c.h.b16 %v598
    %v1983 = vunpack.c.l.b16 %v599
    %v1984 = vunpack.c.h.b16 %v599
    %v1985 = vunpack.c.l.b16 %v600
    %v1986 = vunpack.c.h.b16 %v600
    %v1987 = vunpack.c.l.b16 %v601
    %v1988 = vunpack.c.h.b16 %v601
    %v1989 = vunpack.c.l.b16 %v602
    %v1990 = vunpack.c.h.b16 %v602
    %v1991 = vunpack.c.l.b16 %v603
    %v1992 = vunpack.c.h.b16 %v603
    %v1993 = vunpack.c.l.b16 %v604
    %v1994 = vunpack.c.h.b16 %v604
    %v1995 = vunpack.c.l.b16 %v605
    %v1996 = vunpack.c.h.b16 %v605
    %v1997 = vunpack.c.l.b16 %v606
    %v1998 = vunpack.c.h.b16 %v606
    %v1999 = vunpack.c.l.b16 %v607
    %v2000 = vunpack.c.h.b16 %v607
    %v2001 = vunpack.c.l.b16 %v608
    %v2002 = vunpack.c.h.b16 %v608
    %v2003 = vunpack.c.l.b16 %v609
    %v2004 = vunpack.c.h.b16 %v609
    %v2005 = vunpack.c.l.b16 %v610
    %v2006 = vunpack.c.h.b16 %v610
    %v2007 = vunpack.c.l.b16 %v611
    %v2008 = vunpack.c.h.b16 %v611
    %v2009 = vunpack.c.l.b16 %v612
    %v2010 = vunpack.c.h.b16 %v612
    %v2011 = vunpack.c.l.b16 %v613
    %v2012 = vunpack.c.h.b16 %v613
    %v2013 = vunpack.c.l.b16 %v614
    %v2014 = vunpack.c.h.b16 %v614
    %v2015 = vunpack.c.l.b16 %v615
    %v2016 = vunpack.c.h.b16 %v615
    %v2017 = vunpack.c.l.b16 %v616
    %v2018 = vunpack.c.h.b16 %v616
    %v2019 = vunpack.c.l.b16 %v617
    %v2020 = vunpack.c.h.b16 %v617
    %v2021 = vunpack.c.l.b16 %v618
    %v2022 = vunpack.c.h.b16 %v618
    %v2023 = vunpack.c.l.b16 %v619
    %v2024 = vunpack.c.h.b16 %v619
    %v2025 = vunpack.c.l.b16 %v620
    %v2026 = vunpack.c.h.b16 %v620
    %v2027 = vunpack.c.l.b16 %v621
    %v2028 = vunpack.c.h.b16 %v621
    %v2029 = vunpack.c.l.b16 %v622
    %v2030 = vunpack.c.h.b16 %v622
    %v2031 = vunpack.c.l.b16 %v623
    %v2032 = vunpack.c.h.b16 %v623
    %v2033 = vunpack.c.l.b16 %v624
    %v2034 = vunpack.c.h.b16 %v624
    %v2035 = vunpack.c.l.b16 %v625
    %v2036 = vunpack.c.h.b16 %v625
    %v2037 = vunpack.c.l.b16 %v626
    %v2038 = vunpack.c.h.b16 %v626
    %v2039 = vunpack.c.l.b16 %v627
    %v2040 = vunpack.c.h.b16 %v627
    %v2041 = vunpack.c.l.b16 %v628
    %v2042 = vunpack.c.h.b16 %v628
    %v2043 = vunpack.c.l.b16 %v629
    %v2044 = vunpack.c.h.b16 %v629
    %v2045 = vunpack.c.l.b16 %v630
    %v2046 = vunpack.c.h.b16 %v630
    %v2047 = vunpack.c.l.b16 %v631
    %v2048 = vunpack.c.h.b16 %v631
    %v2049 = vunpack.c.l.b16 %v632
    %v2050 = vunpack.c.h.b16 %v632
    %v2051 = vunpack.c.l.b16 %v633
    %v2052 = vunpack.c.h.b16 %v633
    %v2053 = vunpack.c.l.b16 %v634
    %v2054 = vunpack.c.h.b16 %v634
    %v2055 = vunpack.c.l.b16 %v635
    %v2056 = vunpack.c.h.b16 %v635
    %v2057 = vunpack.c.l.b16 %v636
    %v2058 = vunpack.c.h.b16 %v636
    %v2059 = vunpack.c.l.b16 %v637
    %v2060 = vunpack.c.h.b16 %v637
    %v2061 = vunpack.c.l.b16 %v638
    %v2062 = vunpack.c.h.b16 %v638
    %v2063 = vunpack.c.l.b16 %v639
    %v2064 = vunpack.c.h.b16 %v639
    %v2065 = vunpack.c.l.b16 %v640
    %v2066 = vunpack.c.h.b16 %v640
    %v2067 = vunpack.c.l.b16 %v641
    %v2068 = vunpack.c.h.b16 %v641
    %v2069 = vunpack.c.l.b16 %v642
    %v2070 = vunpack.c.h.b16 %v642
    %v2071 = vunpack.c.l.b16 %v643
    %v2072 = vunpack.c.h.b16 %v643
    %v2073 = vunpack.c.l.b16 %v644
    %v2074 = vunpack.c.h.b16 %v644
    %v2075 = vunpack.c.l.b16 %v645
    %v2076 = vunpack.c.h.b16 %v645
    %v2077 = vunpack.c.l.b16 %v646
    %v2078 = vunpack.c.h.b16 %v646
    %v2079 = vunpack.c.l.b16 %v647
    %v2080 = vunpack.c.h.b16 %v647
    %v2081 = vunpack.c.l.b16 %v648
    %v2082 = vunpack.c.h.b16 %v648
    %v2083 = vunpack.c.l.b16 %v649
    %v2084 = vunpack.c.h.b16 %v649
    %v2085 = vunpack.c.l.b16 %v650
    %v2086 = vunpack.c.h.b16 %v650
    %v2087 = vunpack.c.l.b16 %v651
    %v2088 = vunpack.c.h.b16 %v651
    %v2089 = vunpack.c.l.b16 %v652
    %v2090 = vunpack.c.h.b16 %v652
    %v2091 = vunpack.c.l.b16 %v653
    %v2092 = vunpack.c.h.b16 %v653
    %v2093 = vunpack.c.l.b16 %v654
    %v2094 = vunpack.c.h.b16 %v654
    %v2095 = vunpack.c.l.b16 %v655
    %v2096 = vunpack.c.h.b16 %v655
    %v2097 = vunpack.c.l.b16 %v656
    %v2098 = vunpack.c.h.b16 %v656
    %v2099 = vunpack.c.l.b16 %v657
    %v2100 = vunpack.c.h.b16 %v657
    %v2101 = vunpack.c.l.b16 %v658
    %v2102 = vunpack.c.h.b16 %v658
    %v2103 = vunpack.c.l.b16 %v659
    %v2104 = vunpack.c.h.b16 %v659
    %v2105 = vunpack.c.l.b16 %v660
    %v2106 = vunpack.c.h.b16 %v660
    %v2107 = vunpack.c.l.b16 %v661
    %v2108 = vunpack.c.h.b16 %v661
    %v2109 = vunpack.c.l.b16 %v662
    %v2110 = vunpack.c.h.b16 %v662
    %v2111 = vunpack.c.l.b16 %v663
    %v2112 = vunpack.c.h.b16 %v663
    %v2113 = vunpack.c.l.b16 %v664
    %v2114 = vunpack.c.h.b16 %v664
    %v2115 = vunpack.c.l.b16 %v665
    %v2116 = vunpack.c.h.b16 %v665
    %v2117 = vunpack.c.l.b16 %v666
    %v2118 = vunpack.c.h.b16 %v666
    %v2119 = vunpack.c.l.b16 %v667
    %v2120 = vunpack.c.h.b16 %v667
    %v2121 = vunpack.c.l.b16 %v668
    %v2122 = vunpack.c.h.b16 %v668
    %v2123 = vunpack.c.l.b16 %v669
    %v2124 = vunpack.c.h.b16 %v669
    %v2125 = vunpack.c.l.b16 %v670
    %v2126 = vunpack.c.h.b16 %v670
    %v2127 = vunpack.c.l.b16 %v671
    %v2128 = vunpack.c.h.b16 %v671
    %v2129 = vunpack.c.l.b16 %v672
    %v2130 = vunpack.c.h.b16 %v672
    %v2131 = vunpack.c.l.b16 %v673
    %v2132 = vunpack.c.h.b16 %v673
    %v2133 = vunpack.c.l.b16 %v674
    %v2134 = vunpack.c.h.b16 %v674
    %v2135 = vunpack.c.l.b16 %v675
    %v2136 = vunpack.c.h.b16 %v675
    %v2137 = vunpack.c.l.b16 %v676
    %v2138 = vunpack.c.h.b16 %v676
    %v2139 = vunpack.c.l.b16 %v677
    %v2140 = vunpack.c.h.b16 %v677
    %v2141 = vunpack.c.l.b16 %v678
    %v2142 = vunpack.c.h.b16 %v678
    %v2143 = vunpack.c.l.b16 %v679
    %v2144 = vunpack.c.h.b16 %v679
    %v2145 = vunpack.c.l.b16 %v680
    %v2146 = vunpack.c.h.b16 %v680
    %v2147 = vunpack.c.l.b16 %v681
    %v2148 = vunpack.c.h.b16 %v681
    %v2149 = vunpack.c.l.b16 %v682
    %v2150 = vunpack.c.h.b16 %v682
    %v2151 = vunpack.c.l.b16 %v683
    %v2152 = vunpack.c.h.b16 %v683
    %v2153 = vunpack.c.l.b16 %v684
    %v2154 = vunpack.c.h.b16 %v684
    %v2155 = vunpack.c.l.b16 %v685
    %v2156 = vunpack.c.h.b16 %v685
    %v2157 = vunpack.c.l.b16 %v686
    %v2158 = vunpack.c.h.b16 %v686
    %v2159 = vunpack.c.l.b16 %v687
    %v2160 = vunpack.c.h.b16 %v687
    %v2161 = vunpack.c.l.b16 %v688
    %v2162 = vunpack.c.h.b16 %v688
    %v2163 = vunpack.c.l.b16 %v689
    %v2164 = vunpack.c.h.b16 %v689
    %v2165 = vunpack.c.l.b16 %v690
    %v2166 = vunpack.c.h.b16 %v690
    %v2167 = vunpack.c.l.b16 %v691
    %v2168 = vunpack.c.h.b16 %v691
    %v2169 = vunpack.c.l.b16 %v692
    %v2170 = vunpack.c.h.b16 %v692
    %v2171 = vunpack.c.l.b16 %v693
    %v2172 = vunpack.c.h.b16 %v693
    %v2173 = vunpack.c.l.b16 %v694
    %v2174 = vunpack.c.h.b16 %v694
    %v2175 = vunpack.c.l.b16 %v695
    %v2176 = vunpack.c.h.b16 %v695
    %v2177 = vunpack.c.l.b16 %v696
    %v2178 = vunpack.c.h.b16 %v696
    %v2179 = vunpack.c.l.b16 %v697
    %v2180 = vunpack.c.h.b16 %v697
    %v2181 = vunpack.c.l.b16 %v698
    %v2182 = vunpack.c.h.b16 %v698
    %v2183 = vunpack.c.l.b16 %v699
    %v2184 = vunpack.c.h.b16 %v699
    %v2185 = vunpack.c.l.b16 %v700
    %v2186 = vunpack.c.h.b16 %v700
    %v2187 = vunpack.c.l.b16 %v701
    %v2188 = vunpack.c.h.b16 %v701
    %v2189 = vunpack.c.l.b16 %v702
    %v2190 = vunpack.c.h.b16 %v702
    %v2191 = vunpack.c.l.b16 %v703
    %v2192 = vunpack.c.h.b16 %v703
    %v2193 = vunpack.c.l.b16 %v704
    %v2194 = vunpack.c.h.b16 %v704
    %v2195 = vunpack.c.l.b16 %v705
    %v2196 = vunpack.c.h.b16 %v705
    %v2197 = vunpack.c.l.b16 %v706
    %v2198 = vunpack.c.h.b16 %v706
    %v2199 = vunpack.c.l.b16 %v707
    %v2200 = vunpack.c.h.b16 %v707
    %v2201 = vunpack.c.l.b16 %v708
    %v2202 = vunpack.c.h.b16 %v708
    %v2203 = vunpack.c.l.b16 %v709
    %v2204 = vunpack.c.h.b16 %v709
    %v2205 = vunpack.c.l.b16 %v710
    %v2206 = vunpack.c.h.b16 %v710
    %v2207 = vunpack.c.l.b16 %v711
    %v2208 = vunpack.c.h.b16 %v711
    %v2209 = vunpack.c.l.b16 %v712
    %v2210 = vunpack.c.h.b16 %v712
    %v2211 = vunpack.c.l.b16 %v713
    %v2212 = vunpack.c.h.b16 %v713
    %v2213 = vunpack.c.l.b16 %v714
    %v2214 = vunpack.c.h.b16 %v714
    %v2215 = vunpack.c.l.b16 %v715
    %v2216 = vunpack.c.h.b16 %v715
    %v2217 = vunpack.c.l.b16 %v716
    %v2218 = vunpack.c.h.b16 %v716
    %v2219 = vunpack.c.l.b16 %v717
    %v2220 = vunpack.c.h.b16 %v717
    %v2221 = vunpack.c.l.b16 %v718
    %v2222 = vunpack.c.h.b16 %v718
    %v2223 = vunpack.c.l.b16 %v719
    %v2224 = vunpack.c.h.b16 %v719
    %v2225 = vunpack.c.l.b16 %v720
    %v2226 = vunpack.c.h.b16 %v720
    %v2227 = vunpack.c.l.b16 %v721
    %v2228 = vunpack.c.h.b16 %v721
    %v2229 = vunpack.c.l.b16 %v722
    %v2230 = vunpack.c.h.b16 %v722
    %v2231 = vunpack.c.l.b16 %v723
    %v2232 = vunpack.c.h.b16 %v723
    %v2233 = vunpack.c.l.b16 %v724
    %v2234 = vunpack.c.h.b16 %v724
    %v2235 = vunpack.c.l.b16 %v725
    %v2236 = vunpack.c.h.b16 %v725
    %v2237 = vunpack.c.l.b16 %v726
    %v2238 = vunpack.c.h.b16 %v726
    %v2239 = vunpack.c.l.b16 %v727
    %v2240 = vunpack.c.h.b16 %v727
    %v2241 = vunpack.c.l.b16 %v728
    %v2242 = vunpack.c.h.b16 %v728
    %v2243 = vunpack.c.l.b16 %v729
    %v2244 = vunpack.c.h.b16 %v729
    %v2245 = vunpack.c.l.b16 %v730
    %v2246 = vunpack.c.h.b16 %v730
    %v2247 = vunpack.c.l.b16 %v731
    %v2248 = vunpack.c.h.b16 %v731
    %v2249 = vunpack.c.l.b16 %v732
    %v2250 = vunpack.c.h.b16 %v732
    %v2251 = vunpack.c.l.b16 %v733
    %v2252 = vunpack.c.h.b16 %v733
    %v2253 = vunpack.c.l.b16 %v734
    %v2254 = vunpack.c.h.b16 %v734
    %v2255 = vunpack.c.l.b16 %v735
    %v2256 = vunpack.c.h.b16 %v735
    %v2257 = vunpack.c.l.b16 %v736
    %v2258 = vunpack.c.h.b16 %v736
    %v2259 = vunpack.c.l.b16 %v737
    %v2260 = vunpack.c.h.b16 %v737
    %v2261 = vunpack.c.l.b16 %v738
    %v2262 = vunpack.c.h.b16 %v738
    %v2263 = vunpack.c.l.b16 %v739
    %v2264 = vunpack.c.h.b16 %v739
    %v2265 = vunpack.c.l.b16 %v740
    %v2266 = vunpack.c.h.b16 %v740
    %v2267 = vunpack.c.l.b16 %v741
    %v2268 = vunpack.c.h.b16 %v741
    %v2269 = vunpack.c.l.b16 %v742
    %v2270 = vunpack.c.h.b16 %v742
    %v2271 = vunpack.c.l.b16 %v743
    %v2272 = vunpack.c.h.b16 %v743
    %v2273 = vunpack.c.l.b16 %v744
    %v2274 = vunpack.c.h.b16 %v744
    %v2275 = vunpack.c.l.b16 %v745
    %v2276 = vunpack.c.h.b16 %v745
    %v2277 = vunpack.c.l.b16 %v746
    %v2278 = vunpack.c.h.b16 %v746
    %v2279 = vunpack.c.l.b16 %v747
    %v2280 = vunpack.c.h.b16 %v747
    %v2281 = vunpack.c.l.b16 %v748
    %v2282 = vunpack.c.h.b16 %v748
    %v2283 = vunpack.c.l.b16 %v749
    %v2284 = vunpack.c.h.b16 %v749
    %v2285 = vunpack.c.l.b16 %v750
    %v2286 = vunpack.c.h.b16 %v750
    %v2287 = vpack.c.b16 %v1267, %v1263
    %v2288 = vpack.c.b16 %v1268, %v1264
    %v2289 = vpack.c.b16 %v1269, %v1265
    %v2290 = vpack.c.b16 %v1270, %v1266
    %v2291 = vpack.c.b16 %v1275, %v1271
    %v2292 = vpack.c.b16 %v1276, %v1272
    %v2293 = vpack.c.b16 %v1277, %v1273
    %v2294 = vpack.c.b16 %v1278, %v1274
    %v2295 = vpack.c.b16 %v1283, %v1279
    %v2296 = vpack.c.b16 %v1284, %v1280
    %v2297 = vpack.c.b16 %v1285, %v1281
    %v2298 = vpack.c.b16 %v1286, %v1282
    %v2299 = vpack.c.b16 %v1291, %v1287
    %v2300 = vpack.c.b16 %v1292, %v1288
    %v2301 = vpack.c.b16 %v1293, %v1289
    %v2302 = vpack.c.b16 %v1294, %v1290
    %v2303 = vpack.c.b16 %v1299, %v1295
    %v2304 = vpack.c.b16 %v1300, %v1296
    %v2305 = vpack.c.b16 %v1301, %v1297
    %v2306 = vpack.c.b16 %v1302, %v1298
    %v2307 = vpack.c.b16 %v1307, %v1303
    %v2308 = vpack.c.b16 %v1308, %v1304
    %v2309 = vpack.c.b16 %v1309, %v1305
    %v2310 = vpack.c.b16 %v1310, %v1306
    %v2311 = vpack.c.b16 %v1315, %v1311
    %v2312 = vpack.c.b16 %v1316, %v1312
    %v2313 = vpack.c.b16 %v1317, %v1313
    %v2314 = vpack.c.b16 %v1318, %v1314
    %v2315 = vpack.c.b16 %v1323, %v1319
    %v2316 = vpack.c.b16 %v1324, %v1320
    %v2317 = vpack.c.b16 %v1325, %v1321
    %v2318 = vpack.c.b16 %v1326, %v1322
    %v2319 = vpack.c.b16 %v1331, %v1327
    %v2320 = vpack.c.b16 %v1332, %v1328
    %v2321 = vpack.c.b16 %v1333, %v1329
    %v2322 = vpack.c.b16 %v1334, %v1330
    %v2323 = vpack.c.b16 %v1339, %v1335
    %v2324 = vpack.c.b16 %v1340, %v1336
    %v2325 = vpack.c.b16 %v1341, %v1337
    %v2326 = vpack.c.b16 %v1342, %v1338
    %v2327 = vpack.c.b16 %v1347, %v1343
    %v2328 = vpack.c.b16 %v1348, %v1344
    %v2329 = vpack.c.b16 %v1349, %v1345
    %v2330 = vpack.c.b16 %v1350, %v1346
    %v2331 = vpack.c.b16 %v1355, %v1351
    %v2332 = vpack.c.b16 %v1356, %v1352
    %v2333 = vpack.c.b16 %v1357, %v1353
    %v2334 = vpack.c.b16 %v1358, %v1354
    %v2335 = vpack.c.b16 %v1363, %v1359
    %v2336 = vpack.c.b16 %v1364, %v1360
    %v2337 = vpack.c.b16 %v1365, %v1361
    %v2338 = vpack.c.b16 %v1366, %v1362
    %v2339 = vpack.c.b16 %v1371, %v1367
    %v2340 = vpack.c.b16 %v1372, %v1368
    %v2341 = vpack.c.b16 %v1373, %v1369
    %v2342 = vpack.c.b16 %v1374, %v1370
    %v2343 = vpack.c.b16 %v1379, %v1375
    %v2344 = vpack.c.b16 %v1380, %v1376
    %v2345 = vpack.c.b16 %v1381, %v1377
    %v2346 = vpack.c.b16 %v1382, %v1378
    %v2347 = vpack.c.b16 %v1387, %v1383
    %v2348 = vpack.c.b16 %v1388, %v1384
    %v2349 = vpack.c.b16 %v1389, %v1385
    %v2350 = vpack.c.b16 %v1390, %v1386
    %v2351 = vpack.c.b16 %v1395, %v1391
    %v2352 = vpack.c.b16 %v1396, %v1392
    %v2353 = vpack.c.b16 %v1397, %v1393
    %v2354 = vpack.c.b16 %v1398, %v1394
    %v2355 = vpack.c.b16 %v1403, %v1399
    %v2356 = vpack.c.b16 %v1404, %v1400
    %v2357 = vpack.c.b16 %v1405, %v1401
    %v2358 = vpack.c.b16 %v1406, %v1402
    %v2359 = vpack.c.b16 %v1411, %v1407
    %v2360 = vpack.c.b16 %v1412, %v1408
    %v2361 = vpack.c.b16 %v1413, %v1409
    %v2362 = vpack.c.b16 %v1414, %v1410
    %v2363 = vpack.c.b16 %v1419, %v1415
    %v2364 = vpack.c.b16 %v1420, %v1416
    %v2365 = vpack.c.b16 %v1421, %v1417
    %v2366 = vpack.c.b16 %v1422, %v1418
    %v2367 = vpack.c.b16 %v1427, %v1423
    %v2368 = vpack.c.b16 %v1428, %v1424
    %v2369 = vpack.c.b16 %v1429, %v1425
    %v2370 = vpack.c.b16 %v1430, %v1426
    %v2371 = vpack.c.b16 %v1435, %v1431
    %v2372 = vpack.c.b16 %v1436, %v1432
    %v2373 = vpack.c.b16 %v1437, %v1433
    %v2374 = vpack.c.b16 %v1438, %v1434
    %v2375 = vpack.c.b16 %v1443, %v1439
    %v2376 = vpack.c.b16 %v1444, %v1440
    %v2377 = vpack.c.b16 %v1445, %v1441
    %v2378 = vpack.c.b16 %v1446, %v1442
    %v2379 = vpack.c.b16 %v1451, %v1447
    %v2380 = vpack.c.b16 %v1452, %v1448
    %v2381 = vpack.c.b16 %v1453, %v1449
    %v2382 = vpack.c.b16 %v1454, %v1450
    %v2383 = vpack.c.b16 %v1459, %v1455
    %v2384 = vpack.c.b16 %v1460, %v1456
    %v2385 = vpack.c.b16 %v1461, %v1457
    %v2386 = vpack.c.b16 %v1462, %v1458
    %v2387 = vpack.c.b16 %v1467, %v1463
    %v2388 = vpack.c.b16 %v1468, %v1464
    %v2389 = vpack.c.b16 %v1469, %v1465
    %v2390 = vpack.c.b16 %v1470, %v1466
    %v2391 = vpack.c.b16 %v1475, %v1471
    %v2392 = vpack.c.b16 %v1476, %v1472
    %v2393 = vpack.c.b16 %v1477, %v1473
    %v2394 = vpack.c.b16 %v1478, %v1474
    %v2395 = vpack.c.b16 %v1483, %v1479
    %v2396 = vpack.c.b16 %v1484, %v1480
    %v2397 = vpack.c.b16 %v1485, %v1481
    %v2398 = vpack.c.b16 %v1486, %v1482
    %v2399 = vpack.c.b16 %v1491, %v1487
    %v2400 = vpack.c.b16 %v1492, %v1488
    %v2401 = vpack.c.b16 %v1493, %v1489
    %v2402 = vpack.c.b16 %v1494, %v1490
    %v2403 = vpack.c.b16 %v1499, %v1495
    %v2404 = vpack.c.b16 %v1500, %v1496
    %v2405 = vpack.c.b16 %v1501, %v1497
    %v2406 = vpack.c.b16 %v1502, %v1498
    %v2407 = vpack.c.b16 %v1507, %v1503
    %v2408 = vpack.c.b16 %v1508, %v1504
    %v2409 = vpack.c.b16 %v1509, %v1505
    %v2410 = vpack.c.b16 %v1510, %v1506
    %v2411 = vpack.c.b16 %v1515, %v1511
    %v2412 = vpack.c.b16 %v1516, %v1512
    %v2413 = vpack.c.b16 %v1517, %v1513
    %v2414 = vpack.c.b16 %v1518, %v1514
    %v2415 = vpack.c.b16 %v1523, %v1519
    %v2416 = vpack.c.b16 %v1524, %v1520
    %v2417 = vpack.c.b16 %v1525, %v1521
    %v2418 = vpack.c.b16 %v1526, %v1522
    %v2419 = vpack.c.b16 %v1531, %v1527
    %v2420 = vpack.c.b16 %v1532, %v1528
    %v2421 = vpack.c.b16 %v1533, %v1529
    %v2422 = vpack.c.b16 %v1534, %v1530
    %v2423 = vpack.c.b16 %v1539, %v1535
    %v2424 = vpack.c.b16 %v1540, %v1536
    %v2425 = vpack.c.b16 %v1541, %v1537
    %v2426 = vpack.c.b16 %v1542, %v1538
    %v2427 = vpack.c.b16 %v1547, %v1543
    %v2428 = vpack.c.b16 %v1548, %v1544
    %v2429 = vpack.c.b16 %v1549, %v1545
    %v2430 = vpack.c.b16 %v1550, %v1546
    %v2431 = vpack.c.b16 %v1555, %v1551
    %v2432 = vpack.c.b16 %v1556, %v1552
    %v2433 = vpack.c.b16 %v1557, %v1553
    %v2434 = vpack.c.b16 %v1558, %v1554
    %v2435 = vpack.c.b16 %v1563, %v1559
    %v2436 = vpack.c.b16 %v1564, %v1560
    %v2437 = vpack.c.b16 %v1565, %v1561
    %v2438 = vpack.c.b16 %v1566, %v1562
    %v2439 = vpack.c.b16 %v1571, %v1567
    %v2440 = vpack.c.b16 %v1572, %v1568
    %v2441 = vpack.c.b16 %v1573, %v1569
    %v2442 = vpack.c.b16 %v1574, %v1570
    %v2443 = vpack.c.b16 %v1579, %v1575
    %v2444 = vpack.c.b16 %v1580, %v1576
    %v2445 = vpack.c.b16 %v1581, %v1577
    %v2446 = vpack.c.b16 %v1582, %v1578
    %v2447 = vpack.c.b16 %v1587, %v1583
    %v2448 = vpack.c.b16 %v1588, %v1584
    %v2449 = vpack.c.b16 %v1589, %v1585
    %v2450 = vpack.c.b16 %v1590, %v1586
    %v2451 = vpack.c.b16 %v1595, %v1591
    %v2452 = vpack.c.b16 %v1596, %v1592
    %v2453 = vpack.c.b16 %v1597, %v1593
    %v2454 = vpack.c.b16 %v1598, %v1594
    %v2455 = vpack.c.b16 %v1603, %v1599
    %v2456 = vpack.c.b16 %v1604, %v1600
    %v2457 = vpack.c.b16 %v1605, %v1601
    %v2458 = vpack.c.b16 %v1606, %v1602
    %v2459 = vpack.c.b16 %v1611, %v1607
    %v2460 = vpack.c.b16 %v1612, %v1608
    %v2461 = vpack.c.b16 %v1613, %v1609
    %v2462 = vpack.c.b16 %v1614, %v1610
    %v2463 = vpack.c.b16 %v1619, %v1615
    %v2464 = vpack.c.b16 %v1620, %v1616
    %v2465 = vpack.c.b16 %v1621, %v1617
    %v2466 = vpack.c.b16 %v1622, %v1618
    %v2467 = vpack.c.b16 %v1627, %v1623
    %v2468 = vpack.c.b16 %v1628, %v1624
    %v2469 = vpack.c.b16 %v1629, %v1625
    %v2470 = vpack.c.b16 %v1630, %v1626
    %v2471 = vpack.c.b16 %v1635, %v1631
    %v2472 = vpack.c.b16 %v1636, %v1632
    %v2473 = vpack.c.b16 %v1637, %v1633
    %v2474 = vpack.c.b16 %v1638, %v1634
    %v2475 = vpack.c.b16 %v1643, %v1639
    %v2476 = vpack.c.b16 %v1644, %v1640
    %v2477 = vpack.c.b16 %v1645, %v1641
    %v2478 = vpack.c.b16 %v1646, %v1642
    %v2479 = vpack.c.b16 %v1651, %v1647
    %v2480 = vpack.c.b16 %v1652, %v1648
    %v2481 = vpack.c.b16 %v1653, %v1649
    %v2482 = vpack.c.b16 %v1654, %v1650
    %v2483 = vpack.c.b16 %v1659, %v1655
    %v2484 = vpack.c.b16 %v1660, %v1656
    %v2485 = vpack.c.b16 %v1661, %v1657
    %v2486 = vpack.c.b16 %v1662, %v1658
    %v2487 = vpack.c.b16 %v1667, %v1663
    %v2488 = vpack.c.b16 %v1668, %v1664
    %v2489 = vpack.c.b16 %v1669, %v1665
    %v2490 = vpack.c.b16 %v1670, %v1666
    %v2491 = vpack.c.b16 %v1675, %v1671
    %v2492 = vpack.c.b16 %v1676, %v1672
    %v2493 = vpack.c.b16 %v1677, %v1673
    %v2494 = vpack.c.b16 %v1678, %v1674
    %v2495 = vpack.c.b16 %v1683, %v1679
    %v2496 = vpack.c.b16 %v1684, %v1680
    %v2497 = vpack.c.b16 %v1685, %v1681
    %v2498 = vpack.c.b16 %v1686, %v1682
    %v2499 = vpack.c.b16 %v1691, %v1687
    %v2500 = vpack.c.b16 %v1692, %v1688
    %v2501 = vpack.c.b16 %v1693, %v1689
    %v2502 = vpack.c.b16 %v1694, %v1690
    %v2503 = vpack.c.b16 %v1699, %v1695
    %v2504 = vpack.c.b16 %v1700, %v1696
    %v2505 = vpack.c.b16 %v1701, %v1697
    %v2506 = vpack.c.b16 %v1702, %v1698
    %v2507 = vpack.c.b16 %v1707, %v1703
    %v2508 = vpack.c.b16 %v1708, %v1704
    %v2509 = vpack.c.b16 %v1709, %v1705
    %v2510 = vpack.c.b16 %v1710, %v1706
    %v2511 = vpack.c.b16 %v1715, %v1711
    %v2512 = vpack.c.b16 %v1716, %v1712
    %v2513 = vpack.c.b16 %v1717, %v1713
    %v2514 = vpack.c.b16 %v1718, %v1714
    %v2515 = vpack.c.b16 %v1723, %v1719
    %v2516 = vpack.c.b16 %v1724, %v1720
    %v2517 = vpack.c.b16 %v1725, %v1721
    %v2518 = vpack.c.b16 %v1726, %v1722
    %v2519 = vpack.c.b16 %v1731, %v1727
    %v2520 = vpack.c.b16 %v1732, %v1728
    %v2521 = vpack.c.b16 %v1733, %v1729
    %v2522 = vpack.c.b16 %v1734, %v1730
    %v2523 = vpack.c.b16 %v1739, %v1735
    %v2524 = vpack.c.b16 %v1740, %v1736
    %v2525 = vpack.c.b16 %v1741, %v1737
    %v2526 = vpack.c.b16 %v1742, %v1738
    %v2527 = vpack.c.b16 %v1747, %v1743
    %v2528 = vpack.c.b16 %v1748, %v1744
    %v2529 = vpack.c.b16 %v1749, %v1745
    %v2530 = vpack.c.b16 %v1750, %v1746
    %v2531 = vpack.c.b16 %v1755, %v1751
    %v2532 = vpack.c.b16 %v1756, %v1752
    %v2533 = vpack.c.b16 %v1757, %v1753
    %v2534 = vpack.c.b16 %v1758, %v1754
    %v2535 = vpack.c.b16 %v1763, %v1759
    %v2536 = vpack.c.b16 %v1764, %v1760
    %v2537 = vpack.c.b16 %v1765, %v1761
    %v2538 = vpack.c.b16 %v1766, %v1762
    %v2539 = vpack.c.b16 %v1771, %v1767
    %v2540 = vpack.c.b16 %v1772, %v1768
    %v2541 = vpack.c.b16 %v1773, %v1769
    %v2542 = vpack.c.b16 %v1774, %v1770
    %v2543 = vpack.c.b16 %v1779, %v1775
    %v2544 = vpack.c.b16 %v1780, %v1776
    %v2545 = vpack.c.b16 %v1781, %v1777
    %v2546 = vpack.c.b16 %v1782, %v1778
    %v2547 = vpack.c.b16 %v1787, %v1783
    %v2548 = vpack.c.b16 %v1788, %v1784
    %v2549 = vpack.c.b16 %v1789, %v1785
    %v2550 = vpack.c.b16 %v1790, %v1786
    %v2551 = vpack.c.b16 %v1795, %v1791
    %v2552 = vpack.c.b16 %v1796, %v1792
    %v2553 = vpack.c.b16 %v1797, %v1793
    %v2554 = vpack.c.b16 %v1798, %v1794
    %v2555 = vpack.c.b16 %v1803, %v1799
    %v2556 = vpack.c.b16 %v1804, %v1800
    %v2557 = vpack.c.b16 %v1805, %v1801
    %v2558 = vpack.c.b16 %v1806, %v1802
    %v2559 = vpack.c.b16 %v1811, %v1807
    %v2560 = vpack.c.b16 %v1812, %v1808
    %v2561 = vpack.c.b16 %v1813, %v1809
    %v2562 = vpack.c.b16 %v1814, %v1810
    %v2563 = vpack.c.b16 %v1819, %v1815
    %v2564 = vpack.c.b16 %v1820, %v1816
    %v2565 = vpack.c.b16 %v1821, %v1817
    %v2566 = vpack.c.b16 %v1822, %v1818
    %v2567 = vpack.c.b16 %v1827, %v1823
    %v2568 = vpack.c.b16 %v1828, %v1824
    %v2569 = vpack.c.b16 %v1829, %v1825
    %v2570 = vpack.c.b16 %v1830, %v1826
    %v2571 = vpack.c.b16 %v1835, %v1831
    %v2572 = vpack.c.b16 %v1836, %v1832
    %v2573 = vpack.c.b16 %v1837, %v1833
    %v2574 = vpack.c.b16 %v1838, %v1834
    %v2575 = vpack.c.b16 %v1843, %v1839
    %v2576 = vpack.c.b16 %v1844, %v1840
    %v2577 = vpack.c.b16 %v1845, %v1841
    %v2578 = vpack.c.b16 %v1846, %v1842
    %v2579 = vpack.c.b16 %v1851, %v1847
    %v2580 = vpack.c.b16 %v1852, %v1848
    %v2581 = vpack.c.b16 %v1853, %v1849
    %v2582 = vpack.c.b16 %v1854, %v1850
    %v2583 = vpack.c.b16 %v1859, %v1855
    %v2584 = vpack.c.b16 %v1860, %v1856
    %v2585 = vpack.c.b16 %v1861, %v1857
    %v2586 = vpack.c.b16 %v1862, %v1858
    %v2587 = vpack.c.b16 %v1867, %v1863
    %v2588 = vpack.c.b16 %v1868, %v1864
    %v2589 = vpack.c.b16 %v1869, %v1865
    %v2590 = vpack.c.b16 %v1870, %v1866
    %v2591 = vpack.c.b16 %v1875, %v1871
    %v2592 = vpack.c.b16 %v1876, %v1872
    %v2593 = vpack.c.b16 %v1877, %v1873
    %v2594 = vpack.c.b16 %v1878, %v1874
    %v2595 = vpack.c.b16 %v1883, %v1879
    %v2596 = vpack.c.b16 %v1884, %v1880
    %v2597 = vpack.c.b16 %v1885, %v1881
    %v2598 = vpack.c.b16 %v1886, %v1882
    %v2599 = vpack.c.b16 %v1891, %v1887
    %v2600 = vpack.c.b16 %v1892, %v1888
    %v2601 = vpack.c.b16 %v1893, %v1889
    %v2602 = vpack.c.b16 %v1894, %v1890
    %v2603 = vpack.c.b16 %v1899, %v1895
    %v2604 = vpack.c.b16 %v1900, %v1896
    %v2605 = vpack.c.b16 %v1901, %v1897
    %v2606 = vpack.c.b16 %v1902, %v1898
    %v2607 = vpack.c.b16 %v1907, %v1903
    %v2608 = vpack.c.b16 %v1908, %v1904
    %v2609 = vpack.c.b16 %v1909, %v1905
    %v2610 = vpack.c.b16 %v1910, %v1906
    %v2611 = vpack.c.b16 %v1915, %v1911
    %v2612 = vpack.c.b16 %v1916, %v1912
    %v2613 = vpack.c.b16 %v1917, %v1913
    %v2614 = vpack.c.b16 %v1918, %v1914
    %v2615 = vpack.c.b16 %v1923, %v1919
    %v2616 = vpack.c.b16 %v1924, %v1920
    %v2617 = vpack.c.b16 %v1925, %v1921
    %v2618 = vpack.c.b16 %v1926, %v1922
    %v2619 = vpack.c.b16 %v1931, %v1927
    %v2620 = vpack.c.b16 %v1932, %v1928
    %v2621 = vpack.c.b16 %v1933, %v1929
    %v2622 = vpack.c.b16 %v1934, %v1930
    %v2623 = vpack.c.b16 %v1939, %v1935
    %v2624 = vpack.c.b16 %v1940, %v1936
    %v2625 = vpack.c.b16 %v1941, %v1937
    %v2626 = vpack.c.b16 %v1942, %v1938
    %v2627 = vpack.c.b16 %v1947, %v1943
    %v2628 = vpack.c.b16 %v1948, %v1944
    %v2629 = vpack.c.b16 %v1949, %v1945
    %v2630 = vpack.c.b16 %v1950, %v1946
    %v2631 = vpack.c.b16 %v1955, %v1951
    %v2632 = vpack.c.b16 %v1956, %v1952
    %v2633 = vpack.c.b16 %v1957, %v1953
    %v2634 = vpack.c.b16 %v1958, %v1954
    %v2635 = vpack.c.b16 %v1963, %v1959
    %v2636 = vpack.c.b16 %v1964, %v1960
    %v2637 = vpack.c.b16 %v1965, %v1961
    %v2638 = vpack.c.b16 %v1966, %v1962
    %v2639 = vpack.c.b16 %v1971, %v1967
    %v2640 = vpack.c.b16 %v1972, %v1968
    %v2641 = vpack.c.b16 %v1973, %v1969
    %v2642 = vpack.c.b16 %v1974, %v1970
    %v2643 = vpack.c.b16 %v1979, %v1975
    %v2644 = vpack.c.b16 %v1980, %v1976
    %v2645 = vpack.c.b16 %v1981, %v1977
    %v2646 = vpack.c.b16 %v1982, %v1978
    %v2647 = vpack.c.b16 %v1987, %v1983
    %v2648 = vpack.c.b16 %v1988, %v1984
    %v2649 = vpack.c.b16 %v1989, %v1985
    %v2650 = vpack.c.b16 %v1990, %v1986
    %v2651 = vpack.c.b16 %v1995, %v1991
    %v2652 = vpack.c.b16 %v1996, %v1992
    %v2653 = vpack.c.b16 %v1997, %v1993
    %v2654 = vpack.c.b16 %v1998, %v1994
    %v2655 = vpack.c.b16 %v2003, %v1999
    %v2656 = vpack.c.b16 %v2004, %v2000
    %v2657 = vpack.c.b16 %v2005, %v2001
    %v2658 = vpack.c.b16 %v2006, %v2002
    %v2659 = vpack.c.b16 %v2011, %v2007
    %v2660 = vpack.c.b16 %v2012, %v2008
    %v2661 = vpack.c.b16 %v2013, %v2009
    %v2662 = vpack.c.b16 %v2014, %v2010
    %v2663 = vpack.c.b16 %v2019, %v2015
    %v2664 = vpack.c.b16 %v2020, %v2016
    %v2665 = vpack.c.b16 %v2021, %v2017
    %v2666 = vpack.c.b16 %v2022, %v2018
    %v2667 = vpack.c.b16 %v2027, %v2023
    %v2668 = vpack.c.b16 %v2028, %v2024
    %v2669 = vpack.c.b16 %v2029, %v2025
    %v2670 = vpack.c.b16 %v2030, %v2026
    %v2671 = vpack.c.b16 %v2035, %v2031
    %v2672 = vpack.c.b16 %v2036, %v2032
    %v2673 = vpack.c.b16 %v2037, %v2033
    %v2674 = vpack.c.b16 %v2038, %v2034
    %v2675 = vpack.c.b16 %v2043, %v2039
    %v2676 = vpack.c.b16 %v2044, %v2040
    %v2677 = vpack.c.b16 %v2045, %v2041
    %v2678 = vpack.c.b16 %v2046, %v2042
    %v2679 = vpack.c.b16 %v2051, %v2047
    %v2680 = vpack.c.b16 %v2052, %v2048
    %v2681 = vpack.c.b16 %v2053, %v2049
    %v2682 = vpack.c.b16 %v2054, %v2050
    %v2683 = vpack.c.b16 %v2059, %v2055
    %v2684 = vpack.c.b16 %v2060, %v2056
    %v2685 = vpack.c.b16 %v2061, %v2057
    %v2686 = vpack.c.b16 %v2062, %v2058
    %v2687 = vpack.c.b16 %v2067, %v2063
    %v2688 = vpack.c.b16 %v2068, %v2064
    %v2689 = vpack.c.b16 %v2069, %v2065
    %v2690 = vpack.c.b16 %v2070, %v2066
    %v2691 = vpack.c.b16 %v2075, %v2071
    %v2692 = vpack.c.b16 %v2076, %v2072
    %v2693 = vpack.c.b16 %v2077, %v2073
    %v2694 = vpack.c.b16 %v2078, %v2074
    %v2695 = vpack.c.b16 %v2083, %v2079
    %v2696 = vpack.c.b16 %v2084, %v2080
    %v2697 = vpack.c.b16 %v2085, %v2081
    %v2698 = vpack.c.b16 %v2086, %v2082
    %v2699 = vpack.c.b16 %v2091, %v2087
    %v2700 = vpack.c.b16 %v2092, %v2088
    %v2701 = vpack.c.b16 %v2093, %v2089
    %v2702 = vpack.c.b16 %v2094, %v2090
    %v2703 = vpack.c.b16 %v2099, %v2095
    %v2704 = vpack.c.b16 %v2100, %v2096
    %v2705 = vpack.c.b16 %v2101, %v2097
    %v2706 = vpack.c.b16 %v2102, %v2098
    %v2707 = vpack.c.b16 %v2107, %v2103
    %v2708 = vpack.c.b16 %v2108, %v2104
    %v2709 = vpack.c.b16 %v2109, %v2105
    %v2710 = vpack.c.b16 %v2110, %v2106
    %v2711 = vpack.c.b16 %v2115, %v2111
    %v2712 = vpack.c.b16 %v2116, %v2112
    %v2713 = vpack.c.b16 %v2117, %v2113
    %v2714 = vpack.c.b16 %v2118, %v2114
    %v2715 = vpack.c.b16 %v2123, %v2119
    %v2716 = vpack.c.b16 %v2124, %v2120
    %v2717 = vpack.c.b16 %v2125, %v2121
    %v2718 = vpack.c.b16 %v2126, %v2122
    %v2719 = vpack.c.b16 %v2131, %v2127
    %v2720 = vpack.c.b16 %v2132, %v2128
    %v2721 = vpack.c.b16 %v2133, %v2129
    %v2722 = vpack.c.b16 %v2134, %v2130
    %v2723 = vpack.c.b16 %v2139, %v2135
    %v2724 = vpack.c.b16 %v2140, %v2136
    %v2725 = vpack.c.b16 %v2141, %v2137
    %v2726 = vpack.c.b16 %v2142, %v2138
    %v2727 = vpack.c.b16 %v2147, %v2143
    %v2728 = vpack.c.b16 %v2148, %v2144
    %v2729 = vpack.c.b16 %v2149, %v2145
    %v2730 = vpack.c.b16 %v2150, %v2146
    %v2731 = vpack.c.b16 %v2155, %v2151
    %v2732 = vpack.c.b16 %v2156, %v2152
    %v2733 = vpack.c.b16 %v2157, %v2153
    %v2734 = vpack.c.b16 %v2158, %v2154
    %v2735 = vpack.c.b16 %v2163, %v2159
    %v2736 = vpack.c.b16 %v2164, %v2160
    %v2737 = vpack.c.b16 %v2165, %v2161
    %v2738 = vpack.c.b16 %v2166, %v2162
    %v2739 = vpack.c.b16 %v2171, %v2167
    %v2740 = vpack.c.b16 %v2172, %v2168
    %v2741 = vpack.c.b16 %v2173, %v2169
    %v2742 = vpack.c.b16 %v2174, %v2170
    %v2743 = vpack.c.b16 %v2179, %v2175
    %v2744 = vpack.c.b16 %v2180, %v2176
    %v2745 = vpack.c.b16 %v2181, %v2177
    %v2746 = vpack.c.b16 %v2182, %v2178
    %v2747 = vpack.c.b16 %v2187, %v2183
    %v2748 = vpack.c.b16 %v2188, %v2184
    %v2749 = vpack.c.b16 %v2189, %v2185
    %v2750 = vpack.c.b16 %v2190, %v2186
    %v2751 = vpack.c.b16 %v2195, %v2191
    %v2752 = vpack.c.b16 %v2196, %v2192
    %v2753 = vpack.c.b16 %v2197, %v2193
    %v2754 = vpack.c.b16 %v2198, %v2194
    %v2755 = vpack.c.b16 %v2203, %v2199
    %v2756 = vpack.c.b16 %v2204, %v2200
    %v2757 = vpack.c.b16 %v2205, %v2201
    %v2758 = vpack.c.b16 %v2206, %v2202
    %v2759 = vpack.c.b16 %v2211, %v2207
    %v2760 = vpack.c.b16 %v2212, %v2208
    %v2761 = vpack.c.b16 %v2213, %v2209
    %v2762 = vpack.c.b16 %v2214, %v2210
    %v2763 = vpack.c.b16 %v2219, %v2215
    %v2764 = vpack.c.b16 %v2220, %v2216
    %v2765 = vpack.c.b16 %v2221, %v2217
    %v2766 = vpack.c.b16 %v2222, %v2218
    %v2767 = vpack.c.b16 %v2227, %v2223
    %v2768 = vpack.c.b16 %v2228, %v2224
    %v2769 = vpack.c.b16 %v2229, %v2225
    %v2770 = vpack.c.b16 %v2230, %v2226
    %v2771 = vpack.c.b16 %v2235, %v2231
    %v2772 = vpack.c.b16 %v2236, %v2232
    %v2773 = vpack.c.b16 %v2237, %v2233
    %v2774 = vpack.c.b16 %v2238, %v2234
    %v2775 = vpack.c.b16 %v2243, %v2239
    %v2776 = vpack.c.b16 %v2244, %v2240
    %v2777 = vpack.c.b16 %v2245, %v2241
    %v2778 = vpack.c.b16 %v2246, %v2242
    %v2779 = vpack.c.b16 %v2251, %v2247
    %v2780 = vpack.c.b16 %v2252, %v2248
    %v2781 = vpack.c.b16 %v2253, %v2249
    %v2782 = vpack.c.b16 %v2254, %v2250
    %v2783 = vpack.c.b16 %v2259, %v2255
    %v2784 = vpack.c.b16 %v2260, %v2256
    %v2785 = vpack.c.b16 %v2261, %v2257
    %v2786 = vpack.c.b16 %v2262, %v2258
    %v2787 = vpack.c.b16 %v2267, %v2263
    %v2788 = vpack.c.b16 %v2268, %v2264
    %v2789 = vpack.c.b16 %v2269, %v2265
    %v2790 = vpack.c.b16 %v2270, %v2266
    %v2791 = vpack.c.b16 %v2275, %v2271
    %v2792 = vpack.c.b16 %v2276, %v2272
    %v2793 = vpack.c.b16 %v2277, %v2273
    %v2794 = vpack.c.b16 %v2278, %v2274
    %v2795 = vpack.c.b16 %v2283, %v2279
    %v2796 = vpack.c.b16 %v2284, %v2280
    %v2797 = vpack.c.b16 %v2285, %v2281
    %v2798 = vpack.c.b16 %v2286, %v2282
    %3311 = vmatprep.subr.bf16.mxu0 %v2288
    %3312 = vmatpush1.bf16.msra.mxu0 %v2287
    %3313 = vmatprep.subr.bf16.mxu0 %v2292
    %3314 = vmatpush1.bf16.msra.mxu0 %v2291
    %3315 = vmatprep.subr.bf16.mxu0 %v2296
    %3316 = vmatpush1.bf16.msra.mxu0 %v2295
    %3317 = vmatprep.subr.bf16.mxu0 %v2300
    %3318 = vmatpush1.bf16.msra.mxu0 %v2299
    %3319 = vmatprep.subr.bf16.mxu0 %v2304
    %3320 = vmatpush1.bf16.msra.mxu0 %v2303
    %3321 = vmatprep.subr.bf16.mxu0 %v2308
    %3322 = vmatpush1.bf16.msra.mxu0 %v2307
    %3323 = vmatprep.subr.bf16.mxu0 %v2312
    %3324 = vmatpush1.bf16.msra.mxu0 %v2311
    %3325 = vmatprep.subr.bf16.mxu0 %v2316
    %3326 = vmatpush1.bf16.msra.mxu0 %v2315
    %3327 = vmatprep.subr.bf16.mxu0 %v2320
    %3328 = vmatpush1.bf16.msra.mxu0 %v2319
    %3329 = vmatprep.subr.bf16.mxu0 %v2324
    %3330 = vmatpush1.bf16.msra.mxu0 %v2323
    %3331 = vmatprep.subr.bf16.mxu0 %v2328
    %3332 = vmatpush1.bf16.msra.mxu0 %v2327
    %3333 = vmatprep.subr.bf16.mxu0 %v2332
    %3334 = vmatpush1.bf16.msra.mxu0 %v2331
    %3335 = vmatprep.subr.bf16.mxu0 %v2336
    %3336 = vmatpush1.bf16.msra.mxu0 %v2335
    %3337 = vmatprep.subr.bf16.mxu0 %v2340
    %3338 = vmatpush1.bf16.msra.mxu0 %v2339
    %3339 = vmatprep.subr.bf16.mxu0 %v2344
    %3340 = vmatpush1.bf16.msra.mxu0 %v2343
    %3341 = vmatprep.subr.bf16.mxu0 %v2348
    %3342 = vmatpush1.bf16.msra.mxu0 %v2347
    %3343 = vmatprep.mubr.bf16.mxu0 %v183
    %3344 = vmatmul.mubr.bf16.gmra.mrb[0].mxu0 %v182
    %v3345 = vpop.f32.mrb[0].mxu0
    %v3346 = vadd.f32 0.0, %v3345
    %v3347 = vpop.f32.mrb[0].mxu0
    %v3348 = vadd.f32 0.0, %v3347
    %v3349 = vpop.f32.mrb[0].mxu0
    %v3350 = vpop.f32.mrb[0].mxu0
    %3351 = vdwg.mxu0
    %3352 = vmatprep.subr.bf16.mxu0 %v2352
    %3353 = vmatpush1.bf16.msra.mxu0 %v2351
    %3354 = vmatprep.subr.bf16.mxu0 %v2356
    %3355 = vmatpush1.bf16.msra.mxu0 %v2355
    %3356 = vmatprep.subr.bf16.mxu0 %v2360
    %3357 = vmatpush1.bf16.msra.mxu0 %v2359
    %3358 = vmatprep.subr.bf16.mxu0 %v2364
    %3359 = vmatpush1.bf16.msra.mxu0 %v2363
    %3360 = vmatprep.subr.bf16.mxu0 %v2368
    %3361 = vmatpush1.bf16.msra.mxu0 %v2367
    %3362 = vmatprep.subr.bf16.mxu0 %v2372
    %3363 = vmatpush1.bf16.msra.mxu0 %v2371
    %3364 = vmatprep.subr.bf16.mxu0 %v2376
    %3365 = vmatpush1.bf16.msra.mxu0 %v2375
    %3366 = vmatprep.subr.bf16.mxu0 %v2380
    %3367 = vmatpush1.bf16.msra.mxu0 %v2379
    %3368 = vmatprep.subr.bf16.mxu0 %v2384
    %3369 = vmatpush1.bf16.msra.mxu0 %v2383
    %3370 = vmatprep.subr.bf16.mxu0 %v2388
    %3371 = vmatpush1.bf16.msra.mxu0 %v2387
    %3372 = vmatprep.subr.bf16.mxu0 %v2392
    %3373 = vmatpush1.bf16.msra.mxu0 %v2391
    %3374 = vmatprep.subr.bf16.mxu0 %v2396
    %3375 = vmatpush1.bf16.msra.mxu0 %v2395
    %3376 = vmatprep.subr.bf16.mxu0 %v2400
    %3377 = vmatpush1.bf16.msra.mxu0 %v2399
    %3378 = vmatprep.subr.bf16.mxu0 %v2404
    %3379 = vmatpush1.bf16.msra.mxu0 %v2403
    %3380 = vmatprep.subr.bf16.mxu0 %v2408
    %3381 = vmatpush1.bf16.msra.mxu0 %v2407
    %3382 = vmatprep.subr.bf16.mxu0 %v2412
    %3383 = vmatpush1.bf16.msra.mxu0 %v2411
    %3384 = vmatprep.mubr.bf16.mxu0 %v185
    %3385 = vmatmul.mubr.bf16.gmra.mrb[0].mxu0 %v184
    %v3386 = vpop.f32.mrb[0].mxu0
    %v3387 = vadd.f32 %v3346, %v3386
    %v3388 = vpop.f32.mrb[0].mxu0
    %v3389 = vadd.f32 %v3348, %v3388
    %v3390 = vpop.f32.mrb[0].mxu0
    %v3391 = vpop.f32.mrb[0].mxu0
    %3392 = vdwg.mxu0
    %3393 = vmatprep.subr.bf16.mxu0 %v2416
    %3394 = vmatpush1.bf16.msra.mxu0 %v2415
    %3395 = vmatprep.subr.bf16.mxu0 %v2420
    %3396 = vmatpush1.bf16.msra.mxu0 %v2419
    %3397 = vmatprep.subr.bf16.mxu0 %v2424
    %3398 = vmatpush1.bf16.msra.mxu0 %v2423
    %3399 = vmatprep.subr.bf16.mxu0 %v2428
    %3400 = vmatpush1.bf16.msra.mxu0 %v2427
    %3401 = vmatprep.subr.bf16.mxu0 %v2432
    %3402 = vmatpush1.bf16.msra.mxu0 %v2431
    %3403 = vmatprep.subr.bf16.mxu0 %v2436
    %3404 = vmatpush1.bf16.msra.mxu0 %v2435
    %3405 = vmatprep.subr.bf16.mxu0 %v2440
    %3406 = vmatpush1.bf16.msra.mxu0 %v2439
    %3407 = vmatprep.subr.bf16.mxu0 %v2444
    %3408 = vmatpush1.bf16.msra.mxu0 %v2443
    %3409 = vmatprep.subr.bf16.mxu0 %v2448
    %3410 = vmatpush1.bf16.msra.mxu0 %v2447
    %3411 = vmatprep.subr.bf16.mxu0 %v2452
    %3412 = vmatpush1.bf16.msra.mxu0 %v2451
    %3413 = vmatprep.subr.bf16.mxu0 %v2456
    %3414 = vmatpush1.bf16.msra.mxu0 %v2455
    %3415 = vmatprep.subr.bf16.mxu0 %v2460
    %3416 = vmatpush1.bf16.msra.mxu0 %v2459
    %3417 = vmatprep.subr.bf16.mxu0 %v2464
    %3418 = vmatpush1.bf16.msra.mxu0 %v2463
    %3419 = vmatprep.subr.bf16.mxu0 %v2468
    %3420 = vmatpush1.bf16.msra.mxu0 %v2467
    %3421 = vmatprep.subr.bf16.mxu0 %v2472
    %3422 = vmatpush1.bf16.msra.mxu0 %v2471
    %3423 = vmatprep.subr.bf16.mxu0 %v2476
    %3424 = vmatpush1.bf16.msra.mxu0 %v2475
    %3425 = vmatprep.mubr.bf16.mxu0 %v187
    %3426 = vmatmul.mubr.bf16.gmra.mrb[0].mxu0 %v186
    %v3427 = vpop.f32.mrb[0].mxu0
    %v3428 = vadd.f32 %v3387, %v3427
    %v3429 = vpop.f32.mrb[0].mxu0
    %v3430 = vadd.f32 %v3389, %v3429
    %v3431 = vpop.f32.mrb[0].mxu0
    %v3432 = vpop.f32.mrb[0].mxu0
    %3433 = vdwg.mxu0
    %3434 = vmatprep.subr.bf16.mxu0 %v2480
    %3435 = vmatpush1.bf16.msra.mxu0 %v2479
    %3436 = vmatprep.subr.bf16.mxu0 %v2484
    %3437 = vmatpush1.bf16.msra.mxu0 %v2483
    %3438 = vmatprep.subr.bf16.mxu0 %v2488
    %3439 = vmatpush1.bf16.msra.mxu0 %v2487
    %3440 = vmatprep.subr.bf16.mxu0 %v2492
    %3441 = vmatpush1.bf16.msra.mxu0 %v2491
    %3442 = vmatprep.subr.bf16.mxu0 %v2496
    %3443 = vmatpush1.bf16.msra.mxu0 %v2495
    %3444 = vmatprep.subr.bf16.mxu0 %v2500
    %3445 = vmatpush1.bf16.msra.mxu0 %v2499
    %3446 = vmatprep.subr.bf16.mxu0 %v2504
    %3447 = vmatpush1.bf16.msra.mxu0 %v2503
    %3448 = vmatprep.subr.bf16.mxu0 %v2508
    %3449 = vmatpush1.bf16.msra.mxu0 %v2507
    %3450 = vmatprep.subr.bf16.mxu0 %v2512
    %3451 = vmatpush1.bf16.msra.mxu0 %v2511
    %3452 = vmatprep.subr.bf16.mxu0 %v2516
    %3453 = vmatpush1.bf16.msra.mxu0 %v2515
    %3454 = vmatprep.subr.bf16.mxu0 %v2520
    %3455 = vmatpush1.bf16.msra.mxu0 %v2519
    %3456 = vmatprep.subr.bf16.mxu0 %v2524
    %3457 = vmatpush1.bf16.msra.mxu0 %v2523
    %3458 = vmatprep.subr.bf16.mxu0 %v2528
    %3459 = vmatpush1.bf16.msra.mxu0 %v2527
    %3460 = vmatprep.subr.bf16.mxu0 %v2532
    %3461 = vmatpush1.bf16.msra.mxu0 %v2531
    %3462 = vmatprep.subr.bf16.mxu0 %v2536
    %3463 = vmatpush1.bf16.msra.mxu0 %v2535
    %3464 = vmatprep.subr.bf16.mxu0 %v2540
    %3465 = vmatpush1.bf16.msra.mxu0 %v2539
    %3466 = vmatprep.mubr.bf16.mxu0 %v189
    %3467 = vmatmul.mubr.bf16.gmra.mrb[0].mxu0 %v188
    %v3468 = vpop.f32.mrb[0].mxu0
    %v3469 = vadd.f32 %v3428, %v3468
    %v3470 = vpop.f32.mrb[0].mxu0
    %v3471 = vadd.f32 %v3430, %v3470
    %v3472 = vpop.f32.mrb[0].mxu0
    %v3473 = vpop.f32.mrb[0].mxu0
    %3474 = vdwg.mxu0
    %3475 = vmatprep.subr.bf16.mxu0 %v2544
    %3476 = vmatpush1.bf16.msra.mxu0 %v2543
    %3477 = vmatprep.subr.bf16.mxu0 %v2548
    %3478 = vmatpush1.bf16.msra.mxu0 %v2547
    %3479 = vmatprep.subr.bf16.mxu0 %v2552
    %3480 = vmatpush1.bf16.msra.mxu0 %v2551
    %3481 = vmatprep.subr.bf16.mxu0 %v2556
    %3482 = vmatpush1.bf16.msra.mxu0 %v2555
    %3483 = vmatprep.subr.bf16.mxu0 %v2560
    %3484 = vmatpush1.bf16.msra.mxu0 %v2559
    %3485 = vmatprep.subr.bf16.mxu0 %v2564
    %3486 = vmatpush1.bf16.msra.mxu0 %v2563
    %3487 = vmatprep.subr.bf16.mxu0 %v2568
    %3488 = vmatpush1.bf16.msra.mxu0 %v2567
    %3489 = vmatprep.subr.bf16.mxu0 %v2572
    %3490 = vmatpush1.bf16.msra.mxu0 %v2571
    %3491 = vmatprep.subr.bf16.mxu0 %v2576
    %3492 = vmatpush1.bf16.msra.mxu0 %v2575
    %3493 = vmatprep.subr.bf16.mxu0 %v2580
    %3494 = vmatpush1.bf16.msra.mxu0 %v2579
    %3495 = vmatprep.subr.bf16.mxu0 %v2584
    %3496 = vmatpush1.bf16.msra.mxu0 %v2583
    %3497 = vmatprep.subr.bf16.mxu0 %v2588
    %3498 = vmatpush1.bf16.msra.mxu0 %v2587
    %3499 = vmatprep.subr.bf16.mxu0 %v2592
    %3500 = vmatpush1.bf16.msra.mxu0 %v2591
    %3501 = vmatprep.subr.bf16.mxu0 %v2596
    %3502 = vmatpush1.bf16.msra.mxu0 %v2595
    %3503 = vmatprep.subr.bf16.mxu0 %v2600
    %3504 = vmatpush1.bf16.msra.mxu0 %v2599
    %3505 = vmatprep.subr.bf16.mxu0 %v2604
    %3506 = vmatpush1.bf16.msra.mxu0 %v2603
    %3507 = vmatprep.mubr.bf16.mxu0 %v191
    %3508 = vmatmul.mubr.bf16.gmra.mrb[0].mxu0 %v190
    %v3509 = vpop.f32.mrb[0].mxu0
    %v3510 = vadd.f32 %v3469, %v3509
    %v3511 = vpop.f32.mrb[0].mxu0
    %v3512 = vadd.f32 %v3471, %v3511
    %v3513 = vpop.f32.mrb[0].mxu0
    %v3514 = vpop.f32.mrb[0].mxu0
    %3515 = vdwg.mxu0
    %3516 = vmatprep.subr.bf16.mxu0 %v2608
    %3517 = vmatpush1.bf16.msra.mxu0 %v2607
    %3518 = vmatprep.subr.bf16.mxu0 %v2612
    %3519 = vmatpush1.bf16.msra.mxu0 %v2611
    %3520 = vmatprep.subr.bf16.mxu0 %v2616
    %3521 = vmatpush1.bf16.msra.mxu0 %v2615
    %3522 = vmatprep.subr.bf16.mxu0 %v2620
    %3523 = vmatpush1.bf16.msra.mxu0 %v2619
    %3524 = vmatprep.subr.bf16.mxu0 %v2624
    %3525 = vmatpush1.bf16.msra.mxu0 %v2623
    %3526 = vmatprep.subr.bf16.mxu0 %v2628
    %3527 = vmatpush1.bf16.msra.mxu0 %v2627
    %3528 = vmatprep.subr.bf16.mxu0 %v2632
    %3529 = vmatpush1.bf16.msra.mxu0 %v2631
    %3530 = vmatprep.subr.bf16.mxu0 %v2636
    %3531 = vmatpush1.bf16.msra.mxu0 %v2635
    %3532 = vmatprep.subr.bf16.mxu0 %v2640
    %3533 = vmatpush1.bf16.msra.mxu0 %v2639
    %3534 = vmatprep.subr.bf16.mxu0 %v2644
    %3535 = vmatpush1.bf16.msra.mxu0 %v2643
    %3536 = vmatprep.subr.bf16.mxu0 %v2648
    %3537 = vmatpush1.bf16.msra.mxu0 %v2647
    %3538 = vmatprep.subr.bf16.mxu0 %v2652
    %3539 = vmatpush1.bf16.msra.mxu0 %v2651
    %3540 = vmatprep.subr.bf16.mxu0 %v2656
    %3541 = vmatpush1.bf16.msra.mxu0 %v2655
    %3542 = vmatprep.subr.bf16.mxu0 %v2660
    %3543 = vmatpush1.bf16.msra.mxu0 %v2659
    %3544 = vmatprep.subr.bf16.mxu0 %v2664
    %3545 = vmatpush1.bf16.msra.mxu0 %v2663
    %3546 = vmatprep.subr.bf16.mxu0 %v2668
    %3547 = vmatpush1.bf16.msra.mxu0 %v2667
    %3548 = vmatprep.mubr.bf16.mxu0 %v193
    %3549 = vmatmul.mubr.bf16.gmra.mrb[0].mxu0 %v192
    %v3550 = vpop.f32.mrb[0].mxu0
    %v3551 = vadd.f32 %v3510, %v3550
    %v3552 = vpop.f32.mrb[0].mxu0
    %v3553 = vadd.f32 %v3512, %v3552
    %v3554 = vpop.f32.mrb[0].mxu0
    %v3555 = vpop.f32.mrb[0].mxu0
    %3556 = vdwg.mxu0
    %3557 = vmatprep.subr.bf16.mxu0 %v2672
    %3558 = vmatpush1.bf16.msra.mxu0 %v2671
    %3559 = vmatprep.subr.bf16.mxu0 %v2676
    %3560 = vmatpush1.bf16.msra.mxu0 %v2675
    %3561 = vmatprep.subr.bf16.mxu0 %v2680
    %3562 = vmatpush1.bf16.msra.mxu0 %v2679
    %3563 = vmatprep.subr.bf16.mxu0 %v2684
    %3564 = vmatpush1.bf16.msra.mxu0 %v2683
    %3565 = vmatprep.subr.bf16.mxu0 %v2688
    %3566 = vmatpush1.bf16.msra.mxu0 %v2687
    %3567 = vmatprep.subr.bf16.mxu0 %v2692
    %3568 = vmatpush1.bf16.msra.mxu0 %v2691
    %3569 = vmatprep.subr.bf16.mxu0 %v2696
    %3570 = vmatpush1.bf16.msra.mxu0 %v2695
    %3571 = vmatprep.subr.bf16.mxu0 %v2700
    %3572 = vmatpush1.bf16.msra.mxu0 %v2699
    %3573 = vmatprep.subr.bf16.mxu0 %v2704
    %3574 = vmatpush1.bf16.msra.mxu0 %v2703
    %3575 = vmatprep.subr.bf16.mxu0 %v2708
    %3576 = vmatpush1.bf16.msra.mxu0 %v2707
    %3577 = vmatprep.subr.bf16.mxu0 %v2712
    %3578 = vmatpush1.bf16.msra.mxu0 %v2711
    %3579 = vmatprep.subr.bf16.mxu0 %v2716
    %3580 = vmatpush1.bf16.msra.mxu0 %v2715
    %3581 = vmatprep.subr.bf16.mxu0 %v2720
    %3582 = vmatpush1.bf16.msra.mxu0 %v2719
    %3583 = vmatprep.subr.bf16.mxu0 %v2724
    %3584 = vmatpush1.bf16.msra.mxu0 %v2723
    %3585 = vmatprep.subr.bf16.mxu0 %v2728
    %3586 = vmatpush1.bf16.msra.mxu0 %v2727
    %3587 = vmatprep.subr.bf16.mxu0 %v2732
    %3588 = vmatpush1.bf16.msra.mxu0 %v2731
    %3589 = vmatprep.mubr.bf16.mxu0 %v195
    %3590 = vmatmul.mubr.bf16.gmra.mrb[0].mxu0 %v194
    %v3591 = vpop.f32.mrb[0].mxu0
    %v3592 = vadd.f32 %v3551, %v3591
    %v3593 = vpop.f32.mrb[0].mxu0
    %v3594 = vadd.f32 %v3553, %v3593
    %v3595 = vpop.f32.mrb[0].mxu0
    %v3596 = vpop.f32.mrb[0].mxu0
    %3597 = vdwg.mxu0
    %3598 = vmatprep.subr.bf16.mxu0 %v2736
    %3599 = vmatpush1.bf16.msra.mxu0 %v2735
    %3600 = vmatprep.subr.bf16.mxu0 %v2740
    %3601 = vmatpush1.bf16.msra.mxu0 %v2739
    %3602 = vmatprep.subr.bf16.mxu0 %v2744
    %3603 = vmatpush1.bf16.msra.mxu0 %v2743
    %3604 = vmatprep.subr.bf16.mxu0 %v2748
    %3605 = vmatpush1.bf16.msra.mxu0 %v2747
    %3606 = vmatprep.subr.bf16.mxu0 %v2752
    %3607 = vmatpush1.bf16.msra.mxu0 %v2751
    %3608 = vmatprep.subr.bf16.mxu0 %v2756
    %3609 = vmatpush1.bf16.msra.mxu0 %v2755
    %3610 = vmatprep.subr.bf16.mxu0 %v2760
    %3611 = vmatpush1.bf16.msra.mxu0 %v2759
    %3612 = vmatprep.subr.bf16.mxu0 %v2764
    %3613 = vmatpush1.bf16.msra.mxu0 %v2763
    %3614 = vmatprep.subr.bf16.mxu0 %v2768
    %3615 = vmatpush1.bf16.msra.mxu0 %v2767
    %3616 = vmatprep.subr.bf16.mxu0 %v2772
    %3617 = vmatpush1.bf16.msra.mxu0 %v2771
    %3618 = vmatprep.subr.bf16.mxu0 %v2776
    %3619 = vmatpush1.bf16.msra.mxu0 %v2775
    %3620 = vmatprep.subr.bf16.mxu0 %v2780
    %3621 = vmatpush1.bf16.msra.mxu0 %v2779
    %3622 = vmatprep.subr.bf16.mxu0 %v2784
    %3623 = vmatpush1.bf16.msra.mxu0 %v2783
    %3624 = vmatprep.subr.bf16.mxu0 %v2788
    %3625 = vmatpush1.bf16.msra.mxu0 %v2787
    %3626 = vmatprep.subr.bf16.mxu0 %v2792
    %3627 = vmatpush1.bf16.msra.mxu0 %v2791
    %3628 = vmatprep.subr.bf16.mxu0 %v2796
    %3629 = vmatpush1.bf16.msra.mxu0 %v2795
    %3630 = vmatprep.mubr.bf16.mxu0 %v197
    %3631 = vmatmul.mubr.bf16.gmra.mrb[0].mxu0 %v196
    %v3632 = vpop.f32.mrb[0].mxu0
    %v3633 = vadd.f32 %v3592, %v3632
    %v3634 = vpop.f32.mrb[0].mxu0
    %v3635 = vadd.f32 %v3594, %v3634
    %v3636 = vpop.f32.mrb[0].mxu0
    %v3637 = vpop.f32.mrb[0].mxu0
    %3638 = vdwg.mxu0
    %3639 = vmatprep.subr.bf16.mxu0 %v2290
    %3640 = vmatpush1.bf16.msra.mxu0 %v2289
    %3641 = vmatprep.subr.bf16.mxu0 %v2294
    %3642 = vmatpush1.bf16.msra.mxu0 %v2293
    %3643 = vmatprep.subr.bf16.mxu0 %v2298
    %3644 = vmatpush1.bf16.msra.mxu0 %v2297
    %3645 = vmatprep.subr.bf16.mxu0 %v2302
    %3646 = vmatpush1.bf16.msra.mxu0 %v2301
    %3647 = vmatprep.subr.bf16.mxu0 %v2306
    %3648 = vmatpush1.bf16.msra.mxu0 %v2305
    %3649 = vmatprep.subr.bf16.mxu0 %v2310
    %3650 = vmatpush1.bf16.msra.mxu0 %v2309
    %3651 = vmatprep.subr.bf16.mxu0 %v2314
    %3652 = vmatpush1.bf16.msra.mxu0 %v2313
    %3653 = vmatprep.subr.bf16.mxu0 %v2318
    %3654 = vmatpush1.bf16.msra.mxu0 %v2317
    %3655 = vmatprep.subr.bf16.mxu0 %v2322
    %3656 = vmatpush1.bf16.msra.mxu0 %v2321
    %3657 = vmatprep.subr.bf16.mxu0 %v2326
    %3658 = vmatpush1.bf16.msra.mxu0 %v2325
    %3659 = vmatprep.subr.bf16.mxu0 %v2330
    %3660 = vmatpush1.bf16.msra.mxu0 %v2329
    %3661 = vmatprep.subr.bf16.mxu0 %v2334
    %3662 = vmatpush1.bf16.msra.mxu0 %v2333
    %3663 = vmatprep.subr.bf16.mxu0 %v2338
    %3664 = vmatpush1.bf16.msra.mxu0 %v2337
    %3665 = vmatprep.subr.bf16.mxu0 %v2342
    %3666 = vmatpush1.bf16.msra.mxu0 %v2341
    %3667 = vmatprep.subr.bf16.mxu0 %v2346
    %3668 = vmatpush1.bf16.msra.mxu0 %v2345
    %3669 = vmatprep.subr.bf16.mxu0 %v2350
    %3670 = vmatpush1.bf16.msra.mxu0 %v2349
    %3671 = vmatprep.mubr.bf16.mxu0 %v183
    %3672 = vmatmul.mubr.bf16.gmra.mrb[0].mxu0 %v182
    %v3673 = vpop.f32.mrb[0].mxu0
    %v3674 = vadd.f32 0.0, %v3673
    %v3675 = vpop.f32.mrb[0].mxu0
    %v3676 = vadd.f32 0.0, %v3675
    %v3677 = vpop.f32.mrb[0].mxu0
    %v3678 = vpop.f32.mrb[0].mxu0
    %3679 = vdwg.mxu0
    %3680 = vmatprep.subr.bf16.mxu0 %v2354
    %3681 = vmatpush1.bf16.msra.mxu0 %v2353
    %3682 = vmatprep.subr.bf16.mxu0 %v2358
    %3683 = vmatpush1.bf16.msra.mxu0 %v2357
    %3684 = vmatprep.subr.bf16.mxu0 %v2362
    %3685 = vmatpush1.bf16.msra.mxu0 %v2361
    %3686 = vmatprep.subr.bf16.mxu0 %v2366
    %3687 = vmatpush1.bf16.msra.mxu0 %v2365
    %3688 = vmatprep.subr.bf16.mxu0 %v2370
    %3689 = vmatpush1.bf16.msra.mxu0 %v2369
    %3690 = vmatprep.subr.bf16.mxu0 %v2374
    %3691 = vmatpush1.bf16.msra.mxu0 %v2373
    %3692 = vmatprep.subr.bf16.mxu0 %v2378
    %3693 = vmatpush1.bf16.msra.mxu0 %v2377
    %3694 = vmatprep.subr.bf16.mxu0 %v2382
    %3695 = vmatpush1.bf16.msra.mxu0 %v2381
    %3696 = vmatprep.subr.bf16.mxu0 %v2386
    %3697 = vmatpush1.bf16.msra.mxu0 %v2385
    %3698 = vmatprep.subr.bf16.mxu0 %v2390
    %3699 = vmatpush1.bf16.msra.mxu0 %v2389
    %3700 = vmatprep.subr.bf16.mxu0 %v2394
    %3701 = vmatpush1.bf16.msra.mxu0 %v2393
    %3702 = vmatprep.subr.bf16.mxu0 %v2398
    %3703 = vmatpush1.bf16.msra.mxu0 %v2397
    %3704 = vmatprep.subr.bf16.mxu0 %v2402
    %3705 = vmatpush1.bf16.msra.mxu0 %v2401
    %3706 = vmatprep.subr.bf16.mxu0 %v2406
    %3707 = vmatpush1.bf16.msra.mxu0 %v2405
    %3708 = vmatprep.subr.bf16.mxu0 %v2410
    %3709 = vmatpush1.bf16.msra.mxu0 %v2409
    %3710 = vmatprep.subr.bf16.mxu0 %v2414
    %3711 = vmatpush1.bf16.msra.mxu0 %v2413
    %3712 = vmatprep.mubr.bf16.mxu0 %v185
    %3713 = vmatmul.mubr.bf16.gmra.mrb[0].mxu0 %v184
    %v3714 = vpop.f32.mrb[0].mxu0
    %v3715 = vadd.f32 %v3674, %v3714
    %v3716 = vpop.f32.mrb[0].mxu0
    %v3717 = vadd.f32 %v3676, %v3716
    %v3718 = vpop.f32.mrb[0].mxu0
    %v3719 = vpop.f32.mrb[0].mxu0
    %3720 = vdwg.mxu0
    %3721 = vmatprep.subr.bf16.mxu0 %v2418
    %3722 = vmatpush1.bf16.msra.mxu0 %v2417
    %3723 = vmatprep.subr.bf16.mxu0 %v2422
    %3724 = vmatpush1.bf16.msra.mxu0 %v2421
    %3725 = vmatprep.subr.bf16.mxu0 %v2426
    %3726 = vmatpush1.bf16.msra.mxu0 %v2425
    %3727 = vmatprep.subr.bf16.mxu0 %v2430
    %3728 = vmatpush1.bf16.msra.mxu0 %v2429
    %3729 = vmatprep.subr.bf16.mxu0 %v2434
    %3730 = vmatpush1.bf16.msra.mxu0 %v2433
    %3731 = vmatprep.subr.bf16.mxu0 %v2438
    %3732 = vmatpush1.bf16.msra.mxu0 %v2437
    %3733 = vmatprep.subr.bf16.mxu0 %v2442
    %3734 = vmatpush1.bf16.msra.mxu0 %v2441
    %3735 = vmatprep.subr.bf16.mxu0 %v2446
    %3736 = vmatpush1.bf16.msra.mxu0 %v2445
    %3737 = vmatprep.subr.bf16.mxu0 %v2450
    %3738 = vmatpush1.bf16.msra.mxu0 %v2449
    %3739 = vmatprep.subr.bf16.mxu0 %v2454
    %3740 = vmatpush1.bf16.msra.mxu0 %v2453
    %3741 = vmatprep.subr.bf16.mxu0 %v2458
    %3742 = vmatpush1.bf16.msra.mxu0 %v2457
    %3743 = vmatprep.subr.bf16.mxu0 %v2462
    %3744 = vmatpush1.bf16.msra.mxu0 %v2461
    %3745 = vmatprep.subr.bf16.mxu0 %v2466
    %3746 = vmatpush1.bf16.msra.mxu0 %v2465
    %3747 = vmatprep.subr.bf16.mxu0 %v2470
    %3748 = vmatpush1.bf16.msra.mxu0 %v2469
    %3749 = vmatprep.subr.bf16.mxu0 %v2474
    %3750 = vmatpush1.bf16.msra.mxu0 %v2473
    %3751 = vmatprep.subr.bf16.mxu0 %v2478
    %3752 = vmatpush1.bf16.msra.mxu0 %v2477
    %3753 = vmatprep.mubr.bf16.mxu0 %v187
    %3754 = vmatmul.mubr.bf16.gmra.mrb[0].mxu0 %v186
    %v3755 = vpop.f32.mrb[0].mxu0
    %v3756 = vadd.f32 %v3715, %v3755
    %v3757 = vpop.f32.mrb[0].mxu0
    %v3758 = vadd.f32 %v3717, %v3757
    %v3759 = vpop.f32.mrb[0].mxu0
    %v3760 = vpop.f32.mrb[0].mxu0
    %3761 = vdwg.mxu0
    %3762 = vmatprep.subr.bf16.mxu0 %v2482
    %3763 = vmatpush1.bf16.msra.mxu0 %v2481
    %3764 = vmatprep.subr.bf16.mxu0 %v2486
    %3765 = vmatpush1.bf16.msra.mxu0 %v2485
    %3766 = vmatprep.subr.bf16.mxu0 %v2490
    %3767 = vmatpush1.bf16.msra.mxu0 %v2489
    %3768 = vmatprep.subr.bf16.mxu0 %v2494
    %3769 = vmatpush1.bf16.msra.mxu0 %v2493
    %3770 = vmatprep.subr.bf16.mxu0 %v2498
    %3771 = vmatpush1.bf16.msra.mxu0 %v2497
    %3772 = vmatprep.subr.bf16.mxu0 %v2502
    %3773 = vmatpush1.bf16.msra.mxu0 %v2501
    %3774 = vmatprep.subr.bf16.mxu0 %v2506
    %3775 = vmatpush1.bf16.msra.mxu0 %v2505
    %3776 = vmatprep.subr.bf16.mxu0 %v2510
    %3777 = vmatpush1.bf16.msra.mxu0 %v2509
    %3778 = vmatprep.subr.bf16.mxu0 %v2514
    %3779 = vmatpush1.bf16.msra.mxu0 %v2513
    %3780 = vmatprep.subr.bf16.mxu0 %v2518
    %3781 = vmatpush1.bf16.msra.mxu0 %v2517
    %3782 = vmatprep.subr.bf16.mxu0 %v2522
    %3783 = vmatpush1.bf16.msra.mxu0 %v2521
    %3784 = vmatprep.subr.bf16.mxu0 %v2526
    %3785 = vmatpush1.bf16.msra.mxu0 %v2525
    %3786 = vmatprep.subr.bf16.mxu0 %v2530
    %3787 = vmatpush1.bf16.msra.mxu0 %v2529
    %3788 = vmatprep.subr.bf16.mxu0 %v2534
    %3789 = vmatpush1.bf16.msra.mxu0 %v2533
    %3790 = vmatprep.subr.bf16.mxu0 %v2538
    %3791 = vmatpush1.bf16.msra.mxu0 %v2537
    %3792 = vmatprep.subr.bf16.mxu0 %v2542
    %3793 = vmatpush1.bf16.msra.mxu0 %v2541
    %3794 = vmatprep.mubr.bf16.mxu0 %v189
    %3795 = vmatmul.mubr.bf16.gmra.mrb[0].mxu0 %v188
    %v3796 = vpop.f32.mrb[0].mxu0
    %v3797 = vadd.f32 %v3756, %v3796
    %v3798 = vpop.f32.mrb[0].mxu0
    %v3799 = vadd.f32 %v3758, %v3798
    %v3800 = vpop.f32.mrb[0].mxu0
    %v3801 = vpop.f32.mrb[0].mxu0
    %3802 = vdwg.mxu0
    %3803 = vmatprep.subr.bf16.mxu0 %v2546
    %3804 = vmatpush1.bf16.msra.mxu0 %v2545
    %3805 = vmatprep.subr.bf16.mxu0 %v2550
    %3806 = vmatpush1.bf16.msra.mxu0 %v2549
    %3807 = vmatprep.subr.bf16.mxu0 %v2554
    %3808 = vmatpush1.bf16.msra.mxu0 %v2553
    %3809 = vmatprep.subr.bf16.mxu0 %v2558
    %3810 = vmatpush1.bf16.msra.mxu0 %v2557
    %3811 = vmatprep.subr.bf16.mxu0 %v2562
    %3812 = vmatpush1.bf16.msra.mxu0 %v2561
    %3813 = vmatprep.subr.bf16.mxu0 %v2566
    %3814 = vmatpush1.bf16.msra.mxu0 %v2565
    %3815 = vmatprep.subr.bf16.mxu0 %v2570
    %3816 = vmatpush1.bf16.msra.mxu0 %v2569
    %3817 = vmatprep.subr.bf16.mxu0 %v2574
    %3818 = vmatpush1.bf16.msra.mxu0 %v2573
    %3819 = vmatprep.subr.bf16.mxu0 %v2578
    %3820 = vmatpush1.bf16.msra.mxu0 %v2577
    %3821 = vmatprep.subr.bf16.mxu0 %v2582
    %3822 = vmatpush1.bf16.msra.mxu0 %v2581
    %3823 = vmatprep.subr.bf16.mxu0 %v2586
    %3824 = vmatpush1.bf16.msra.mxu0 %v2585
    %3825 = vmatprep.subr.bf16.mxu0 %v2590
    %3826 = vmatpush1.bf16.msra.mxu0 %v2589
    %3827 = vmatprep.subr.bf16.mxu0 %v2594
    %3828 = vmatpush1.bf16.msra.mxu0 %v2593
    %3829 = vmatprep.subr.bf16.mxu0 %v2598
    %3830 = vmatpush1.bf16.msra.mxu0 %v2597
    %3831 = vmatprep.subr.bf16.mxu0 %v2602
    %3832 = vmatpush1.bf16.msra.mxu0 %v2601
    %3833 = vmatprep.subr.bf16.mxu0 %v2606
    %3834 = vmatpush1.bf16.msra.mxu0 %v2605
    %3835 = vmatprep.mubr.bf16.mxu0 %v191
    %3836 = vmatmul.mubr.bf16.gmra.mrb[0].mxu0 %v190
    %v3837 = vpop.f32.mrb[0].mxu0
    %v3838 = vadd.f32 %v3797, %v3837
    %v3839 = vpop.f32.mrb[0].mxu0
    %v3840 = vadd.f32 %v3799, %v3839
    %v3841 = vpop.f32.mrb[0].mxu0
    %v3842 = vpop.f32.mrb[0].mxu0
    %3843 = vdwg.mxu0
    %3844 = vmatprep.subr.bf16.mxu0 %v2610
    %3845 = vmatpush1.bf16.msra.mxu0 %v2609
    %3846 = vmatprep.subr.bf16.mxu0 %v2614
    %3847 = vmatpush1.bf16.msra.mxu0 %v2613
    %3848 = vmatprep.subr.bf16.mxu0 %v2618
    %3849 = vmatpush1.bf16.msra.mxu0 %v2617
    %3850 = vmatprep.subr.bf16.mxu0 %v2622
    %3851 = vmatpush1.bf16.msra.mxu0 %v2621
    %3852 = vmatprep.subr.bf16.mxu0 %v2626
    %3853 = vmatpush1.bf16.msra.mxu0 %v2625
    %3854 = vmatprep.subr.bf16.mxu0 %v2630
    %3855 = vmatpush1.bf16.msra.mxu0 %v2629
    %3856 = vmatprep.subr.bf16.mxu0 %v2634
    %3857 = vmatpush1.bf16.msra.mxu0 %v2633
    %3858 = vmatprep.subr.bf16.mxu0 %v2638
    %3859 = vmatpush1.bf16.msra.mxu0 %v2637
    %3860 = vmatprep.subr.bf16.mxu0 %v2642
    %3861 = vmatpush1.bf16.msra.mxu0 %v2641
    %3862 = vmatprep.subr.bf16.mxu0 %v2646
    %3863 = vmatpush1.bf16.msra.mxu0 %v2645
    %3864 = vmatprep.subr.bf16.mxu0 %v2650
    %3865 = vmatpush1.bf16.msra.mxu0 %v2649
    %3866 = vmatprep.subr.bf16.mxu0 %v2654
    %3867 = vmatpush1.bf16.msra.mxu0 %v2653
    %3868 = vmatprep.subr.bf16.mxu0 %v2658
    %3869 = vmatpush1.bf16.msra.mxu0 %v2657
    %3870 = vmatprep.subr.bf16.mxu0 %v2662
    %3871 = vmatpush1.bf16.msra.mxu0 %v2661
    %3872 = vmatprep.subr.bf16.mxu0 %v2666
    %3873 = vmatpush1.bf16.msra.mxu0 %v2665
    %3874 = vmatprep.subr.bf16.mxu0 %v2670
    %3875 = vmatpush1.bf16.msra.mxu0 %v2669
    %3876 = vmatprep.mubr.bf16.mxu0 %v193
    %3877 = vmatmul.mubr.bf16.gmra.mrb[0].mxu0 %v192
    %v3878 = vpop.f32.mrb[0].mxu0
    %v3879 = vadd.f32 %v3838, %v3878
    %v3880 = vpop.f32.mrb[0].mxu0
    %v3881 = vadd.f32 %v3840, %v3880
    %v3882 = vpop.f32.mrb[0].mxu0
    %v3883 = vpop.f32.mrb[0].mxu0
    %3884 = vdwg.mxu0
    %3885 = vmatprep.subr.bf16.mxu0 %v2674
    %3886 = vmatpush1.bf16.msra.mxu0 %v2673
    %3887 = vmatprep.subr.bf16.mxu0 %v2678
    %3888 = vmatpush1.bf16.msra.mxu0 %v2677
    %3889 = vmatprep.subr.bf16.mxu0 %v2682
    %3890 = vmatpush1.bf16.msra.mxu0 %v2681
    %3891 = vmatprep.subr.bf16.mxu0 %v2686
    %3892 = vmatpush1.bf16.msra.mxu0 %v2685
    %3893 = vmatprep.subr.bf16.mxu0 %v2690
    %3894 = vmatpush1.bf16.msra.mxu0 %v2689
    %3895 = vmatprep.subr.bf16.mxu0 %v2694
    %3896 = vmatpush1.bf16.msra.mxu0 %v2693
    %3897 = vmatprep.subr.bf16.mxu0 %v2698
    %3898 = vmatpush1.bf16.msra.mxu0 %v2697
    %3899 = vmatprep.subr.bf16.mxu0 %v2702
    %3900 = vmatpush1.bf16.msra.mxu0 %v2701
    %3901 = vmatprep.subr.bf16.mxu0 %v2706
    %3902 = vmatpush1.bf16.msra.mxu0 %v2705
    %3903 = vmatprep.subr.bf16.mxu0 %v2710
    %3904 = vmatpush1.bf16.msra.mxu0 %v2709
    %3905 = vmatprep.subr.bf16.mxu0 %v2714
    %3906 = vmatpush1.bf16.msra.mxu0 %v2713
    %3907 = vmatprep.subr.bf16.mxu0 %v2718
    %3908 = vmatpush1.bf16.msra.mxu0 %v2717
    %3909 = vmatprep.subr.bf16.mxu0 %v2722
    %3910 = vmatpush1.bf16.msra.mxu0 %v2721
    %3911 = vmatprep.subr.bf16.mxu0 %v2726
    %3912 = vmatpush1.bf16.msra.mxu0 %v2725
    %3913 = vmatprep.subr.bf16.mxu0 %v2730
    %3914 = vmatpush1.bf16.msra.mxu0 %v2729
    %3915 = vmatprep.subr.bf16.mxu0 %v2734
    %3916 = vmatpush1.bf16.msra.mxu0 %v2733
    %3917 = vmatprep.mubr.bf16.mxu0 %v195
    %3918 = vmatmul.mubr.bf16.gmra.mrb[0].mxu0 %v194
    %v3919 = vpop.f32.mrb[0].mxu0
    %v3920 = vadd.f32 %v3879, %v3919
    %v3921 = vpop.f32.mrb[0].mxu0
    %v3922 = vadd.f32 %v3881, %v3921
    %v3923 = vpop.f32.mrb[0].mxu0
    %v3924 = vpop.f32.mrb[0].mxu0
    %3925 = vdwg.mxu0
    %3926 = vmatprep.subr.bf16.mxu0 %v2738
    %3927 = vmatpush1.bf16.msra.mxu0 %v2737
    %3928 = vmatprep.subr.bf16.mxu0 %v2742
    %3929 = vmatpush1.bf16.msra.mxu0 %v2741
    %3930 = vmatprep.subr.bf16.mxu0 %v2746
    %3931 = vmatpush1.bf16.msra.mxu0 %v2745
    %3932 = vmatprep.subr.bf16.mxu0 %v2750
    %3933 = vmatpush1.bf16.msra.mxu0 %v2749
    %3934 = vmatprep.subr.bf16.mxu0 %v2754
    %3935 = vmatpush1.bf16.msra.mxu0 %v2753
    %3936 = vmatprep.subr.bf16.mxu0 %v2758
    %3937 = vmatpush1.bf16.msra.mxu0 %v2757
    %3938 = vmatprep.subr.bf16.mxu0 %v2762
    %3939 = vmatpush1.bf16.msra.mxu0 %v2761
    %3940 = vmatprep.subr.bf16.mxu0 %v2766
    %3941 = vmatpush1.bf16.msra.mxu0 %v2765
    %3942 = vmatprep.subr.bf16.mxu0 %v2770
    %3943 = vmatpush1.bf16.msra.mxu0 %v2769
    %3944 = vmatprep.subr.bf16.mxu0 %v2774
    %3945 = vmatpush1.bf16.msra.mxu0 %v2773
    %3946 = vmatprep.subr.bf16.mxu0 %v2778
    %3947 = vmatpush1.bf16.msra.mxu0 %v2777
    %3948 = vmatprep.subr.bf16.mxu0 %v2782
    %3949 = vmatpush1.bf16.msra.mxu0 %v2781
    %3950 = vmatprep.subr.bf16.mxu0 %v2786
    %3951 = vmatpush1.bf16.msra.mxu0 %v2785
    %3952 = vmatprep.subr.bf16.mxu0 %v2790
    %3953 = vmatpush1.bf16.msra.mxu0 %v2789
    %3954 = vmatprep.subr.bf16.mxu0 %v2794
    %3955 = vmatpush1.bf16.msra.mxu0 %v2793
    %3956 = vmatprep.subr.bf16.mxu0 %v2798
    %3957 = vmatpush1.bf16.msra.mxu0 %v2797
    %3958 = vmatprep.mubr.bf16.mxu0 %v197
    %3959 = vmatmul.mubr.bf16.gmra.mrb[0].mxu0 %v196
    %v3960 = vpop.f32.mrb[0].mxu0
    %v3961 = vadd.f32 %v3920, %v3960
    %v3962 = vpop.f32.mrb[0].mxu0
    %v3963 = vadd.f32 %v3922, %v3962
    %v3964 = vpop.f32.mrb[0].mxu0
    %v3965 = vpop.f32.mrb[0].mxu0
    %3966 = vdwg.mxu0
    %v3967 = vld [vmem:[#allocation9] sm:$0xff]
    %v3968 = vld [vmem:[#allocation9 + $0x8] sm:$0xff]
    %v3969 = vld [vmem:[#allocation9 + $0x10] sm:$0xff]
    %v3970 = vld [vmem:[#allocation9 + $0x18] sm:$0xff]
    %v3971 = vld [vmem:[#allocation9 + $0x20] sm:$0xff]
    %v3972 = vld [vmem:[#allocation9 + $0x28] sm:$0xff]
    %v3973 = vld [vmem:[#allocation9 + $0x30] sm:$0xff]
    %v3974 = vld [vmem:[#allocation9 + $0x38] sm:$0xff]
    %v3975 = vld [vmem:[#allocation9 + $0x40] sm:$0xff]
    %v3976 = vld [vmem:[#allocation9 + $0x48] sm:$0xff]
    %v3977 = vld [vmem:[#allocation9 + $0x50] sm:$0xff]
    %v3978 = vld [vmem:[#allocation9 + $0x58] sm:$0xff]
    %v3979 = vld [vmem:[#allocation9 + $0x60] sm:$0xff]
    %v3980 = vld [vmem:[#allocation9 + $0x68] sm:$0xff]
    %v3981 = vld [vmem:[#allocation9 + $0x70] sm:$0xff]
    %v3982 = vld [vmem:[#allocation9 + $0x78] sm:$0xff]
    %v3983 = vld [vmem:[#allocation9 + $0x80] sm:$0xff]
    %v3984 = vld [vmem:[#allocation9 + $0x88] sm:$0xff]
    %v3985 = vld [vmem:[#allocation9 + $0x90] sm:$0xff]
    %v3986 = vld [vmem:[#allocation9 + $0x98] sm:$0xff]
    %v3987 = vld [vmem:[#allocation9 + $0xa0] sm:$0xff]
    %v3988 = vld [vmem:[#allocation9 + $0xa8] sm:$0xff]
    %v3989 = vld [vmem:[#allocation9 + $0xb0] sm:$0xff]
    %v3990 = vld [vmem:[#allocation9 + $0xb8] sm:$0xff]
    %v3991 = vld [vmem:[#allocation9 + $0xc0] sm:$0xff]
    %v3992 = vld [vmem:[#allocation9 + $0xc8] sm:$0xff]
    %v3993 = vld [vmem:[#allocation9 + $0xd0] sm:$0xff]
    %v3994 = vld [vmem:[#allocation9 + $0xd8] sm:$0xff]
    %v3995 = vld [vmem:[#allocation9 + $0xe0] sm:$0xff]
    %v3996 = vld [vmem:[#allocation9 + $0xe8] sm:$0xff]
    %v3997 = vld [vmem:[#allocation9 + $0xf0] sm:$0xff]
    %v3998 = vld [vmem:[#allocation9 + $0xf8] sm:$0xff]
    %v3999 = vld [vmem:[#allocation9 + $0x100] sm:$0xff]
    %v4000 = vld [vmem:[#allocation9 + $0x108] sm:$0xff]
    %v4001 = vld [vmem:[#allocation9 + $0x110] sm:$0xff]
    %v4002 = vld [vmem:[#allocation9 + $0x118] sm:$0xff]
    %v4003 = vld [vmem:[#allocation9 + $0x120] sm:$0xff]
    %v4004 = vld [vmem:[#allocation9 + $0x128] sm:$0xff]
    %v4005 = vld [vmem:[#allocation9 + $0x130] sm:$0xff]
    %v4006 = vld [vmem:[#allocation9 + $0x138] sm:$0xff]
    %v4007 = vld [vmem:[#allocation9 + $0x140] sm:$0xff]
    %v4008 = vld [vmem:[#allocation9 + $0x148] sm:$0xff]
    %v4009 = vld [vmem:[#allocation9 + $0x150] sm:$0xff]
    %v4010 = vld [vmem:[#allocation9 + $0x158] sm:$0xff]
    %v4011 = vld [vmem:[#allocation9 + $0x160] sm:$0xff]
    %v4012 = vld [vmem:[#allocation9 + $0x168] sm:$0xff]
    %v4013 = vld [vmem:[#allocation9 + $0x170] sm:$0xff]
    %v4014 = vld [vmem:[#allocation9 + $0x178] sm:$0xff]
    %v4015 = vld [vmem:[#allocation9 + $0x180] sm:$0xff]
    %v4016 = vld [vmem:[#allocation9 + $0x188] sm:$0xff]
    %v4017 = vld [vmem:[#allocation9 + $0x190] sm:$0xff]
    %v4018 = vld [vmem:[#allocation9 + $0x198] sm:$0xff]
    %v4019 = vld [vmem:[#allocation9 + $0x1a0] sm:$0xff]
    %v4020 = vld [vmem:[#allocation9 + $0x1a8] sm:$0xff]
    %v4021 = vld [vmem:[#allocation9 + $0x1b0] sm:$0xff]
    %v4022 = vld [vmem:[#allocation9 + $0x1b8] sm:$0xff]
    %v4023 = vld [vmem:[#allocation9 + $0x1c0] sm:$0xff]
    %v4024 = vld [vmem:[#allocation9 + $0x1c8] sm:$0xff]
    %v4025 = vld [vmem:[#allocation9 + $0x1d0] sm:$0xff]
    %v4026 = vld [vmem:[#allocation9 + $0x1d8] sm:$0xff]
    %v4027 = vld [vmem:[#allocation9 + $0x1e0] sm:$0xff]
    %v4028 = vld [vmem:[#allocation9 + $0x1e8] sm:$0xff]
    %v4029 = vld [vmem:[#allocation9 + $0x1f0] sm:$0xff]
    %v4030 = vld [vmem:[#allocation9 + $0x1f8] sm:$0xff]
    %v4031 = vld [vmem:[#allocation9 + $0x200] sm:$0xff]
    %v4032 = vld [vmem:[#allocation9 + $0x208] sm:$0xff]
    %v4033 = vld [vmem:[#allocation9 + $0x210] sm:$0xff]
    %v4034 = vld [vmem:[#allocation9 + $0x218] sm:$0xff]
    %v4035 = vld [vmem:[#allocation9 + $0x220] sm:$0xff]
    %v4036 = vld [vmem:[#allocation9 + $0x228] sm:$0xff]
    %v4037 = vld [vmem:[#allocation9 + $0x230] sm:$0xff]
    %v4038 = vld [vmem:[#allocation9 + $0x238] sm:$0xff]
    %v4039 = vld [vmem:[#allocation9 + $0x240] sm:$0xff]
    %v4040 = vld [vmem:[#allocation9 + $0x248] sm:$0xff]
    %v4041 = vld [vmem:[#allocation9 + $0x250] sm:$0xff]
    %v4042 = vld [vmem:[#allocation9 + $0x258] sm:$0xff]
    %v4043 = vld [vmem:[#allocation9 + $0x260] sm:$0xff]
    %v4044 = vld [vmem:[#allocation9 + $0x268] sm:$0xff]
    %v4045 = vld [vmem:[#allocation9 + $0x270] sm:$0xff]
    %v4046 = vld [vmem:[#allocation9 + $0x278] sm:$0xff]
    %v4047 = vld [vmem:[#allocation9 + $0x280] sm:$0xff]
    %v4048 = vld [vmem:[#allocation9 + $0x288] sm:$0xff]
    %v4049 = vld [vmem:[#allocation9 + $0x290] sm:$0xff]
    %v4050 = vld [vmem:[#allocation9 + $0x298] sm:$0xff]
    %v4051 = vld [vmem:[#allocation9 + $0x2a0] sm:$0xff]
    %v4052 = vld [vmem:[#allocation9 + $0x2a8] sm:$0xff]
    %v4053 = vld [vmem:[#allocation9 + $0x2b0] sm:$0xff]
    %v4054 = vld [vmem:[#allocation9 + $0x2b8] sm:$0xff]
    %v4055 = vld [vmem:[#allocation9 + $0x2c0] sm:$0xff]
    %v4056 = vld [vmem:[#allocation9 + $0x2c8] sm:$0xff]
    %v4057 = vld [vmem:[#allocation9 + $0x2d0] sm:$0xff]
    %v4058 = vld [vmem:[#allocation9 + $0x2d8] sm:$0xff]
    %v4059 = vld [vmem:[#allocation9 + $0x2e0] sm:$0xff]
    %v4060 = vld [vmem:[#allocation9 + $0x2e8] sm:$0xff]
    %v4061 = vld [vmem:[#allocation9 + $0x2f0] sm:$0xff]
    %v4062 = vld [vmem:[#allocation9 + $0x2f8] sm:$0xff]
    %v4063 = vld [vmem:[#allocation9 + $0x300] sm:$0xff]
    %v4064 = vld [vmem:[#allocation9 + $0x308] sm:$0xff]
    %v4065 = vld [vmem:[#allocation9 + $0x310] sm:$0xff]
    %v4066 = vld [vmem:[#allocation9 + $0x318] sm:$0xff]
    %v4067 = vld [vmem:[#allocation9 + $0x320] sm:$0xff]
    %v4068 = vld [vmem:[#allocation9 + $0x328] sm:$0xff]
    %v4069 = vld [vmem:[#allocation9 + $0x330] sm:$0xff]
    %v4070 = vld [vmem:[#allocation9 + $0x338] sm:$0xff]
    %v4071 = vld [vmem:[#allocation9 + $0x340] sm:$0xff]
    %v4072 = vld [vmem:[#allocation9 + $0x348] sm:$0xff]
    %v4073 = vld [vmem:[#allocation9 + $0x350] sm:$0xff]
    %v4074 = vld [vmem:[#allocation9 + $0x358] sm:$0xff]
    %v4075 = vld [vmem:[#allocation9 + $0x360] sm:$0xff]
    %v4076 = vld [vmem:[#allocation9 + $0x368] sm:$0xff]
    %v4077 = vld [vmem:[#allocation9 + $0x370] sm:$0xff]
    %v4078 = vld [vmem:[#allocation9 + $0x378] sm:$0xff]
    %v4079 = vld [vmem:[#allocation9 + $0x380] sm:$0xff]
    %v4080 = vld [vmem:[#allocation9 + $0x388] sm:$0xff]
    %v4081 = vld [vmem:[#allocation9 + $0x390] sm:$0xff]
    %v4082 = vld [vmem:[#allocation9 + $0x398] sm:$0xff]
    %v4083 = vld [vmem:[#allocation9 + $0x3a0] sm:$0xff]
    %v4084 = vld [vmem:[#allocation9 + $0x3a8] sm:$0xff]
    %v4085 = vld [vmem:[#allocation9 + $0x3b0] sm:$0xff]
    %v4086 = vld [vmem:[#allocation9 + $0x3b8] sm:$0xff]
    %v4087 = vld [vmem:[#allocation9 + $0x3c0] sm:$0xff]
    %v4088 = vld [vmem:[#allocation9 + $0x3c8] sm:$0xff]
    %v4089 = vld [vmem:[#allocation9 + $0x3d0] sm:$0xff]
    %v4090 = vld [vmem:[#allocation9 + $0x3d8] sm:$0xff]
    %v4091 = vld [vmem:[#allocation9 + $0x3e0] sm:$0xff]
    %v4092 = vld [vmem:[#allocation9 + $0x3e8] sm:$0xff]
    %v4093 = vld [vmem:[#allocation9 + $0x3f0] sm:$0xff]
    %v4094 = vld [vmem:[#allocation9 + $0x3f8] sm:$0xff]
    %v4095 = vld [vmem:[#allocation9 + $0x400] sm:$0xff]
    %v4096 = vld [vmem:[#allocation9 + $0x408] sm:$0xff]
    %v4097 = vld [vmem:[#allocation9 + $0x410] sm:$0xff]
    %v4098 = vld [vmem:[#allocation9 + $0x418] sm:$0xff]
    %v4099 = vld [vmem:[#allocation9 + $0x420] sm:$0xff]
    %v4100 = vld [vmem:[#allocation9 + $0x428] sm:$0xff]
    %v4101 = vld [vmem:[#allocation9 + $0x430] sm:$0xff]
    %v4102 = vld [vmem:[#allocation9 + $0x438] sm:$0xff]
    %v4103 = vld [vmem:[#allocation9 + $0x440] sm:$0xff]
    %v4104 = vld [vmem:[#allocation9 + $0x448] sm:$0xff]
    %v4105 = vld [vmem:[#allocation9 + $0x450] sm:$0xff]
    %v4106 = vld [vmem:[#allocation9 + $0x458] sm:$0xff]
    %v4107 = vld [vmem:[#allocation9 + $0x460] sm:$0xff]
    %v4108 = vld [vmem:[#allocation9 + $0x468] sm:$0xff]
    %v4109 = vld [vmem:[#allocation9 + $0x470] sm:$0xff]
    %v4110 = vld [vmem:[#allocation9 + $0x478] sm:$0xff]
    %v4111 = vld [vmem:[#allocation9 + $0x480] sm:$0xff]
    %v4112 = vld [vmem:[#allocation9 + $0x488] sm:$0xff]
    %v4113 = vld [vmem:[#allocation9 + $0x490] sm:$0xff]
    %v4114 = vld [vmem:[#allocation9 + $0x498] sm:$0xff]
    %v4115 = vld [vmem:[#allocation9 + $0x4a0] sm:$0xff]
    %v4116 = vld [vmem:[#allocation9 + $0x4a8] sm:$0xff]
    %v4117 = vld [vmem:[#allocation9 + $0x4b0] sm:$0xff]
    %v4118 = vld [vmem:[#allocation9 + $0x4b8] sm:$0xff]
    %v4119 = vld [vmem:[#allocation9 + $0x4c0] sm:$0xff]
    %v4120 = vld [vmem:[#allocation9 + $0x4c8] sm:$0xff]
    %v4121 = vld [vmem:[#allocation9 + $0x4d0] sm:$0xff]
    %v4122 = vld [vmem:[#allocation9 + $0x4d8] sm:$0xff]
    %v4123 = vld [vmem:[#allocation9 + $0x4e0] sm:$0xff]
    %v4124 = vld [vmem:[#allocation9 + $0x4e8] sm:$0xff]
    %v4125 = vld [vmem:[#allocation9 + $0x4f0] sm:$0xff]
    %v4126 = vld [vmem:[#allocation9 + $0x4f8] sm:$0xff]
    %v4127 = vld [vmem:[#allocation9 + $0x500] sm:$0xff]
    %v4128 = vld [vmem:[#allocation9 + $0x508] sm:$0xff]
    %v4129 = vld [vmem:[#allocation9 + $0x510] sm:$0xff]
    %v4130 = vld [vmem:[#allocation9 + $0x518] sm:$0xff]
    %v4131 = vld [vmem:[#allocation9 + $0x520] sm:$0xff]
    %v4132 = vld [vmem:[#allocation9 + $0x528] sm:$0xff]
    %v4133 = vld [vmem:[#allocation9 + $0x530] sm:$0xff]
    %v4134 = vld [vmem:[#allocation9 + $0x538] sm:$0xff]
    %v4135 = vld [vmem:[#allocation9 + $0x540] sm:$0xff]
    %v4136 = vld [vmem:[#allocation9 + $0x548] sm:$0xff]
    %v4137 = vld [vmem:[#allocation9 + $0x550] sm:$0xff]
    %v4138 = vld [vmem:[#allocation9 + $0x558] sm:$0xff]
    %v4139 = vld [vmem:[#allocation9 + $0x560] sm:$0xff]
    %v4140 = vld [vmem:[#allocation9 + $0x568] sm:$0xff]
    %v4141 = vld [vmem:[#allocation9 + $0x570] sm:$0xff]
    %v4142 = vld [vmem:[#allocation9 + $0x578] sm:$0xff]
    %v4143 = vld [vmem:[#allocation9 + $0x580] sm:$0xff]
    %v4144 = vld [vmem:[#allocation9 + $0x588] sm:$0xff]
    %v4145 = vld [vmem:[#allocation9 + $0x590] sm:$0xff]
    %v4146 = vld [vmem:[#allocation9 + $0x598] sm:$0xff]
    %v4147 = vld [vmem:[#allocation9 + $0x5a0] sm:$0xff]
    %v4148 = vld [vmem:[#allocation9 + $0x5a8] sm:$0xff]
    %v4149 = vld [vmem:[#allocation9 + $0x5b0] sm:$0xff]
    %v4150 = vld [vmem:[#allocation9 + $0x5b8] sm:$0xff]
    %v4151 = vld [vmem:[#allocation9 + $0x5c0] sm:$0xff]
    %v4152 = vld [vmem:[#allocation9 + $0x5c8] sm:$0xff]
    %v4153 = vld [vmem:[#allocation9 + $0x5d0] sm:$0xff]
    %v4154 = vld [vmem:[#allocation9 + $0x5d8] sm:$0xff]
    %v4155 = vld [vmem:[#allocation9 + $0x5e0] sm:$0xff]
    %v4156 = vld [vmem:[#allocation9 + $0x5e8] sm:$0xff]
    %v4157 = vld [vmem:[#allocation9 + $0x5f0] sm:$0xff]
    %v4158 = vld [vmem:[#allocation9 + $0x5f8] sm:$0xff]
    %v4351 = vunpack.c.l.b16 %v3967
    %v4352 = vunpack.c.h.b16 %v3967
    %v4353 = vunpack.c.l.b16 %v3968
    %v4354 = vunpack.c.h.b16 %v3968
    %v4355 = vunpack.c.l.b16 %v3969
    %v4356 = vunpack.c.h.b16 %v3969
    %v4357 = vunpack.c.l.b16 %v3970
    %v4358 = vunpack.c.h.b16 %v3970
    %v4359 = vunpack.c.l.b16 %v3971
    %v4360 = vunpack.c.h.b16 %v3971
    %v4361 = vunpack.c.l.b16 %v3972
    %v4362 = vunpack.c.h.b16 %v3972
    %v4363 = vunpack.c.l.b16 %v3973
    %v4364 = vunpack.c.h.b16 %v3973
    %v4365 = vunpack.c.l.b16 %v3974
    %v4366 = vunpack.c.h.b16 %v3974
    %v4367 = vunpack.c.l.b16 %v3975
    %v4368 = vunpack.c.h.b16 %v3975
    %v4369 = vunpack.c.l.b16 %v3976
    %v4370 = vunpack.c.h.b16 %v3976
    %v4371 = vunpack.c.l.b16 %v3977
    %v4372 = vunpack.c.h.b16 %v3977
    %v4373 = vunpack.c.l.b16 %v3978
    %v4374 = vunpack.c.h.b16 %v3978
    %v4375 = vunpack.c.l.b16 %v3979
    %v4376 = vunpack.c.h.b16 %v3979
    %v4377 = vunpack.c.l.b16 %v3980
    %v4378 = vunpack.c.h.b16 %v3980
    %v4379 = vunpack.c.l.b16 %v3981
    %v4380 = vunpack.c.h.b16 %v3981
    %v4381 = vunpack.c.l.b16 %v3982
    %v4382 = vunpack.c.h.b16 %v3982
    %v4383 = vunpack.c.l.b16 %v3983
    %v4384 = vunpack.c.h.b16 %v3983
    %v4385 = vunpack.c.l.b16 %v3984
    %v4386 = vunpack.c.h.b16 %v3984
    %v4387 = vunpack.c.l.b16 %v3985
    %v4388 = vunpack.c.h.b16 %v3985
    %v4389 = vunpack.c.l.b16 %v3986
    %v4390 = vunpack.c.h.b16 %v3986
    %v4391 = vunpack.c.l.b16 %v3987
    %v4392 = vunpack.c.h.b16 %v3987
    %v4393 = vunpack.c.l.b16 %v3988
    %v4394 = vunpack.c.h.b16 %v3988
    %v4395 = vunpack.c.l.b16 %v3989
    %v4396 = vunpack.c.h.b16 %v3989
    %v4397 = vunpack.c.l.b16 %v3990
    %v4398 = vunpack.c.h.b16 %v3990
    %v4399 = vunpack.c.l.b16 %v3991
    %v4400 = vunpack.c.h.b16 %v3991
    %v4401 = vunpack.c.l.b16 %v3992
    %v4402 = vunpack.c.h.b16 %v3992
    %v4403 = vunpack.c.l.b16 %v3993
    %v4404 = vunpack.c.h.b16 %v3993
    %v4405 = vunpack.c.l.b16 %v3994
    %v4406 = vunpack.c.h.b16 %v3994
    %v4407 = vunpack.c.l.b16 %v3995
    %v4408 = vunpack.c.h.b16 %v3995
    %v4409 = vunpack.c.l.b16 %v3996
    %v4410 = vunpack.c.h.b16 %v3996
    %v4411 = vunpack.c.l.b16 %v3997
    %v4412 = vunpack.c.h.b16 %v3997
    %v4413 = vunpack.c.l.b16 %v3998
    %v4414 = vunpack.c.h.b16 %v3998
    %v4415 = vunpack.c.l.b16 %v3999
    %v4416 = vunpack.c.h.b16 %v3999
    %v4417 = vunpack.c.l.b16 %v4000
    %v4418 = vunpack.c.h.b16 %v4000
    %v4419 = vunpack.c.l.b16 %v4001
    %v4420 = vunpack.c.h.b16 %v4001
    %v4421 = vunpack.c.l.b16 %v4002
    %v4422 = vunpack.c.h.b16 %v4002
    %v4423 = vunpack.c.l.b16 %v4003
    %v4424 = vunpack.c.h.b16 %v4003
    %v4425 = vunpack.c.l.b16 %v4004
    %v4426 = vunpack.c.h.b16 %v4004
    %v4427 = vunpack.c.l.b16 %v4005
    %v4428 = vunpack.c.h.b16 %v4005
    %v4429 = vunpack.c.l.b16 %v4006
    %v4430 = vunpack.c.h.b16 %v4006
    %v4431 = vunpack.c.l.b16 %v4007
    %v4432 = vunpack.c.h.b16 %v4007
    %v4433 = vunpack.c.l.b16 %v4008
    %v4434 = vunpack.c.h.b16 %v4008
    %v4435 = vunpack.c.l.b16 %v4009
    %v4436 = vunpack.c.h.b16 %v4009
    %v4437 = vunpack.c.l.b16 %v4010
    %v4438 = vunpack.c.h.b16 %v4010
    %v4439 = vunpack.c.l.b16 %v4011
    %v4440 = vunpack.c.h.b16 %v4011
    %v4441 = vunpack.c.l.b16 %v4012
    %v4442 = vunpack.c.h.b16 %v4012
    %v4443 = vunpack.c.l.b16 %v4013
    %v4444 = vunpack.c.h.b16 %v4013
    %v4445 = vunpack.c.l.b16 %v4014
    %v4446 = vunpack.c.h.b16 %v4014
    %v4447 = vunpack.c.l.b16 %v4015
    %v4448 = vunpack.c.h.b16 %v4015
    %v4449 = vunpack.c.l.b16 %v4016
    %v4450 = vunpack.c.h.b16 %v4016
    %v4451 = vunpack.c.l.b16 %v4017
    %v4452 = vunpack.c.h.b16 %v4017
    %v4453 = vunpack.c.l.b16 %v4018
    %v4454 = vunpack.c.h.b16 %v4018
    %v4455 = vunpack.c.l.b16 %v4019
    %v4456 = vunpack.c.h.b16 %v4019
    %v4457 = vunpack.c.l.b16 %v4020
    %v4458 = vunpack.c.h.b16 %v4020
    %v4459 = vunpack.c.l.b16 %v4021
    %v4460 = vunpack.c.h.b16 %v4021
    %v4461 = vunpack.c.l.b16 %v4022
    %v4462 = vunpack.c.h.b16 %v4022
    %v4463 = vunpack.c.l.b16 %v4023
    %v4464 = vunpack.c.h.b16 %v4023
    %v4465 = vunpack.c.l.b16 %v4024
    %v4466 = vunpack.c.h.b16 %v4024
    %v4467 = vunpack.c.l.b16 %v4025
    %v4468 = vunpack.c.h.b16 %v4025
    %v4469 = vunpack.c.l.b16 %v4026
    %v4470 = vunpack.c.h.b16 %v4026
    %v4471 = vunpack.c.l.b16 %v4027
    %v4472 = vunpack.c.h.b16 %v4027
    %v4473 = vunpack.c.l.b16 %v4028
    %v4474 = vunpack.c.h.b16 %v4028
    %v4475 = vunpack.c.l.b16 %v4029
    %v4476 = vunpack.c.h.b16 %v4029
    %v4477 = vunpack.c.l.b16 %v4030
    %v4478 = vunpack.c.h.b16 %v4030
    %v4479 = vunpack.c.l.b16 %v4031
    %v4480 = vunpack.c.h.b16 %v4031
    %v4481 = vunpack.c.l.b16 %v4032
    %v4482 = vunpack.c.h.b16 %v4032
    %v4483 = vunpack.c.l.b16 %v4033
    %v4484 = vunpack.c.h.b16 %v4033
    %v4485 = vunpack.c.l.b16 %v4034
    %v4486 = vunpack.c.h.b16 %v4034
    %v4487 = vunpack.c.l.b16 %v4035
    %v4488 = vunpack.c.h.b16 %v4035
    %v4489 = vunpack.c.l.b16 %v4036
    %v4490 = vunpack.c.h.b16 %v4036
    %v4491 = vunpack.c.l.b16 %v4037
    %v4492 = vunpack.c.h.b16 %v4037
    %v4493 = vunpack.c.l.b16 %v4038
    %v4494 = vunpack.c.h.b16 %v4038
    %v4495 = vunpack.c.l.b16 %v4039
    %v4496 = vunpack.c.h.b16 %v4039
    %v4497 = vunpack.c.l.b16 %v4040
    %v4498 = vunpack.c.h.b16 %v4040
    %v4499 = vunpack.c.l.b16 %v4041
    %v4500 = vunpack.c.h.b16 %v4041
    %v4501 = vunpack.c.l.b16 %v4042
    %v4502 = vunpack.c.h.b16 %v4042
    %v4503 = vunpack.c.l.b16 %v4043
    %v4504 = vunpack.c.h.b16 %v4043
    %v4505 = vunpack.c.l.b16 %v4044
    %v4506 = vunpack.c.h.b16 %v4044
    %v4507 = vunpack.c.l.b16 %v4045
    %v4508 = vunpack.c.h.b16 %v4045
    %v4509 = vunpack.c.l.b16 %v4046
    %v4510 = vunpack.c.h.b16 %v4046
    %v4511 = vunpack.c.l.b16 %v4047
    %v4512 = vunpack.c.h.b16 %v4047
    %v4513 = vunpack.c.l.b16 %v4048
    %v4514 = vunpack.c.h.b16 %v4048
    %v4515 = vunpack.c.l.b16 %v4049
    %v4516 = vunpack.c.h.b16 %v4049
    %v4517 = vunpack.c.l.b16 %v4050
    %v4518 = vunpack.c.h.b16 %v4050
    %v4519 = vunpack.c.l.b16 %v4051
    %v4520 = vunpack.c.h.b16 %v4051
    %v4521 = vunpack.c.l.b16 %v4052
    %v4522 = vunpack.c.h.b16 %v4052
    %v4523 = vunpack.c.l.b16 %v4053
    %v4524 = vunpack.c.h.b16 %v4053
    %v4525 = vunpack.c.l.b16 %v4054
    %v4526 = vunpack.c.h.b16 %v4054
    %v4527 = vunpack.c.l.b16 %v4055
    %v4528 = vunpack.c.h.b16 %v4055
    %v4529 = vunpack.c.l.b16 %v4056
    %v4530 = vunpack.c.h.b16 %v4056
    %v4531 = vunpack.c.l.b16 %v4057
    %v4532 = vunpack.c.h.b16 %v4057
    %v4533 = vunpack.c.l.b16 %v4058
    %v4534 = vunpack.c.h.b16 %v4058
    %v4535 = vunpack.c.l.b16 %v4059
    %v4536 = vunpack.c.h.b16 %v4059
    %v4537 = vunpack.c.l.b16 %v4060
    %v4538 = vunpack.c.h.b16 %v4060
    %v4539 = vunpack.c.l.b16 %v4061
    %v4540 = vunpack.c.h.b16 %v4061
    %v4541 = vunpack.c.l.b16 %v4062
    %v4542 = vunpack.c.h.b16 %v4062
    %v4543 = vunpack.c.l.b16 %v4063
    %v4544 = vunpack.c.h.b16 %v4063
    %v4545 = vunpack.c.l.b16 %v4064
    %v4546 = vunpack.c.h.b16 %v4064
    %v4547 = vunpack.c.l.b16 %v4065
    %v4548 = vunpack.c.h.b16 %v4065
    %v4549 = vunpack.c.l.b16 %v4066
    %v4550 = vunpack.c.h.b16 %v4066
    %v4551 = vunpack.c.l.b16 %v4067
    %v4552 = vunpack.c.h.b16 %v4067
    %v4553 = vunpack.c.l.b16 %v4068
    %v4554 = vunpack.c.h.b16 %v4068
    %v4555 = vunpack.c.l.b16 %v4069
    %v4556 = vunpack.c.h.b16 %v4069
    %v4557 = vunpack.c.l.b16 %v4070
    %v4558 = vunpack.c.h.b16 %v4070
    %v4559 = vunpack.c.l.b16 %v4071
    %v4560 = vunpack.c.h.b16 %v4071
    %v4561 = vunpack.c.l.b16 %v4072
    %v4562 = vunpack.c.h.b16 %v4072
    %v4563 = vunpack.c.l.b16 %v4073
    %v4564 = vunpack.c.h.b16 %v4073
    %v4565 = vunpack.c.l.b16 %v4074
    %v4566 = vunpack.c.h.b16 %v4074
    %v4567 = vunpack.c.l.b16 %v4075
    %v4568 = vunpack.c.h.b16 %v4075
    %v4569 = vunpack.c.l.b16 %v4076
    %v4570 = vunpack.c.h.b16 %v4076
    %v4571 = vunpack.c.l.b16 %v4077
    %v4572 = vunpack.c.h.b16 %v4077
    %v4573 = vunpack.c.l.b16 %v4078
    %v4574 = vunpack.c.h.b16 %v4078
    %v4575 = vunpack.c.l.b16 %v4079
    %v4576 = vunpack.c.h.b16 %v4079
    %v4577 = vunpack.c.l.b16 %v4080
    %v4578 = vunpack.c.h.b16 %v4080
    %v4579 = vunpack.c.l.b16 %v4081
    %v4580 = vunpack.c.h.b16 %v4081
    %v4581 = vunpack.c.l.b16 %v4082
    %v4582 = vunpack.c.h.b16 %v4082
    %v4583 = vunpack.c.l.b16 %v4083
    %v4584 = vunpack.c.h.b16 %v4083
    %v4585 = vunpack.c.l.b16 %v4084
    %v4586 = vunpack.c.h.b16 %v4084
    %v4587 = vunpack.c.l.b16 %v4085
    %v4588 = vunpack.c.h.b16 %v4085
    %v4589 = vunpack.c.l.b16 %v4086
    %v4590 = vunpack.c.h.b16 %v4086
    %v4591 = vunpack.c.l.b16 %v4087
    %v4592 = vunpack.c.h.b16 %v4087
    %v4593 = vunpack.c.l.b16 %v4088
    %v4594 = vunpack.c.h.b16 %v4088
    %v4595 = vunpack.c.l.b16 %v4089
    %v4596 = vunpack.c.h.b16 %v4089
    %v4597 = vunpack.c.l.b16 %v4090
    %v4598 = vunpack.c.h.b16 %v4090
    %v4599 = vunpack.c.l.b16 %v4091
    %v4600 = vunpack.c.h.b16 %v4091
    %v4601 = vunpack.c.l.b16 %v4092
    %v4602 = vunpack.c.h.b16 %v4092
    %v4603 = vunpack.c.l.b16 %v4093
    %v4604 = vunpack.c.h.b16 %v4093
    %v4605 = vunpack.c.l.b16 %v4094
    %v4606 = vunpack.c.h.b16 %v4094
    %v4607 = vunpack.c.l.b16 %v4095
    %v4608 = vunpack.c.h.b16 %v4095
    %v4609 = vunpack.c.l.b16 %v4096
    %v4610 = vunpack.c.h.b16 %v4096
    %v4611 = vunpack.c.l.b16 %v4097
    %v4612 = vunpack.c.h.b16 %v4097
    %v4613 = vunpack.c.l.b16 %v4098
    %v4614 = vunpack.c.h.b16 %v4098
    %v4615 = vunpack.c.l.b16 %v4099
    %v4616 = vunpack.c.h.b16 %v4099
    %v4617 = vunpack.c.l.b16 %v4100
    %v4618 = vunpack.c.h.b16 %v4100
    %v4619 = vunpack.c.l.b16 %v4101
    %v4620 = vunpack.c.h.b16 %v4101
    %v4621 = vunpack.c.l.b16 %v4102
    %v4622 = vunpack.c.h.b16 %v4102
    %v4623 = vunpack.c.l.b16 %v4103
    %v4624 = vunpack.c.h.b16 %v4103
    %v4625 = vunpack.c.l.b16 %v4104
    %v4626 = vunpack.c.h.b16 %v4104
    %v4627 = vunpack.c.l.b16 %v4105
    %v4628 = vunpack.c.h.b16 %v4105
    %v4629 = vunpack.c.l.b16 %v4106
    %v4630 = vunpack.c.h.b16 %v4106
    %v4631 = vunpack.c.l.b16 %v4107
    %v4632 = vunpack.c.h.b16 %v4107
    %v4633 = vunpack.c.l.b16 %v4108
    %v4634 = vunpack.c.h.b16 %v4108
    %v4635 = vunpack.c.l.b16 %v4109
    %v4636 = vunpack.c.h.b16 %v4109
    %v4637 = vunpack.c.l.b16 %v4110
    %v4638 = vunpack.c.h.b16 %v4110
    %v4639 = vunpack.c.l.b16 %v4111
    %v4640 = vunpack.c.h.b16 %v4111
    %v4641 = vunpack.c.l.b16 %v4112
    %v4642 = vunpack.c.h.b16 %v4112
    %v4643 = vunpack.c.l.b16 %v4113
    %v4644 = vunpack.c.h.b16 %v4113
    %v4645 = vunpack.c.l.b16 %v4114
    %v4646 = vunpack.c.h.b16 %v4114
    %v4647 = vunpack.c.l.b16 %v4115
    %v4648 = vunpack.c.h.b16 %v4115
    %v4649 = vunpack.c.l.b16 %v4116
    %v4650 = vunpack.c.h.b16 %v4116
    %v4651 = vunpack.c.l.b16 %v4117
    %v4652 = vunpack.c.h.b16 %v4117
    %v4653 = vunpack.c.l.b16 %v4118
    %v4654 = vunpack.c.h.b16 %v4118
    %v4655 = vunpack.c.l.b16 %v4119
    %v4656 = vunpack.c.h.b16 %v4119
    %v4657 = vunpack.c.l.b16 %v4120
    %v4658 = vunpack.c.h.b16 %v4120
    %v4659 = vunpack.c.l.b16 %v4121
    %v4660 = vunpack.c.h.b16 %v4121
    %v4661 = vunpack.c.l.b16 %v4122
    %v4662 = vunpack.c.h.b16 %v4122
    %v4663 = vunpack.c.l.b16 %v4123
    %v4664 = vunpack.c.h.b16 %v4123
    %v4665 = vunpack.c.l.b16 %v4124
    %v4666 = vunpack.c.h.b16 %v4124
    %v4667 = vunpack.c.l.b16 %v4125
    %v4668 = vunpack.c.h.b16 %v4125
    %v4669 = vunpack.c.l.b16 %v4126
    %v4670 = vunpack.c.h.b16 %v4126
    %v4671 = vunpack.c.l.b16 %v4127
    %v4672 = vunpack.c.h.b16 %v4127
    %v4673 = vunpack.c.l.b16 %v4128
    %v4674 = vunpack.c.h.b16 %v4128
    %v4675 = vunpack.c.l.b16 %v4129
    %v4676 = vunpack.c.h.b16 %v4129
    %v4677 = vunpack.c.l.b16 %v4130
    %v4678 = vunpack.c.h.b16 %v4130
    %v4679 = vunpack.c.l.b16 %v4131
    %v4680 = vunpack.c.h.b16 %v4131
    %v4681 = vunpack.c.l.b16 %v4132
    %v4682 = vunpack.c.h.b16 %v4132
    %v4683 = vunpack.c.l.b16 %v4133
    %v4684 = vunpack.c.h.b16 %v4133
    %v4685 = vunpack.c.l.b16 %v4134
    %v4686 = vunpack.c.h.b16 %v4134
    %v4687 = vunpack.c.l.b16 %v4135
    %v4688 = vunpack.c.h.b16 %v4135
    %v4689 = vunpack.c.l.b16 %v4136
    %v4690 = vunpack.c.h.b16 %v4136
    %v4691 = vunpack.c.l.b16 %v4137
    %v4692 = vunpack.c.h.b16 %v4137
    %v4693 = vunpack.c.l.b16 %v4138
    %v4694 = vunpack.c.h.b16 %v4138
    %v4695 = vunpack.c.l.b16 %v4139
    %v4696 = vunpack.c.h.b16 %v4139
    %v4697 = vunpack.c.l.b16 %v4140
    %v4698 = vunpack.c.h.b16 %v4140
    %v4699 = vunpack.c.l.b16 %v4141
    %v4700 = vunpack.c.h.b16 %v4141
    %v4701 = vunpack.c.l.b16 %v4142
    %v4702 = vunpack.c.h.b16 %v4142
    %v4703 = vunpack.c.l.b16 %v4143
    %v4704 = vunpack.c.h.b16 %v4143
    %v4705 = vunpack.c.l.b16 %v4144
    %v4706 = vunpack.c.h.b16 %v4144
    %v4707 = vunpack.c.l.b16 %v4145
    %v4708 = vunpack.c.h.b16 %v4145
    %v4709 = vunpack.c.l.b16 %v4146
    %v4710 = vunpack.c.h.b16 %v4146
    %v4711 = vunpack.c.l.b16 %v4147
    %v4712 = vunpack.c.h.b16 %v4147
    %v4713 = vunpack.c.l.b16 %v4148
    %v4714 = vunpack.c.h.b16 %v4148
    %v4715 = vunpack.c.l.b16 %v4149
    %v4716 = vunpack.c.h.b16 %v4149
    %v4717 = vunpack.c.l.b16 %v4150
    %v4718 = vunpack.c.h.b16 %v4150
    %v4719 = vunpack.c.l.b16 %v4151
    %v4720 = vunpack.c.h.b16 %v4151
    %v4721 = vunpack.c.l.b16 %v4152
    %v4722 = vunpack.c.h.b16 %v4152
    %v4723 = vunpack.c.l.b16 %v4153
    %v4724 = vunpack.c.h.b16 %v4153
    %v4725 = vunpack.c.l.b16 %v4154
    %v4726 = vunpack.c.h.b16 %v4154
    %v4727 = vunpack.c.l.b16 %v4155
    %v4728 = vunpack.c.h.b16 %v4155
    %v4729 = vunpack.c.l.b16 %v4156
    %v4730 = vunpack.c.h.b16 %v4156
    %v4731 = vunpack.c.l.b16 %v4157
    %v4732 = vunpack.c.h.b16 %v4157
    %v4733 = vunpack.c.l.b16 %v4158
    %v4734 = vunpack.c.h.b16 %v4158
    %v4735 = vpack.c.b16 %v4355, %v4351
    %v4736 = vpack.c.b16 %v4356, %v4352
    %v4737 = vpack.c.b16 %v4357, %v4353
    %v4738 = vpack.c.b16 %v4358, %v4354
    %v4739 = vpack.c.b16 %v4363, %v4359
    %v4740 = vpack.c.b16 %v4364, %v4360
    %v4741 = vpack.c.b16 %v4365, %v4361
    %v4742 = vpack.c.b16 %v4366, %v4362
    %v4743 = vpack.c.b16 %v4371, %v4367
    %v4744 = vpack.c.b16 %v4372, %v4368
    %v4745 = vpack.c.b16 %v4373, %v4369
    %v4746 = vpack.c.b16 %v4374, %v4370
    %v4747 = vpack.c.b16 %v4379, %v4375
    %v4748 = vpack.c.b16 %v4380, %v4376
    %v4749 = vpack.c.b16 %v4381, %v4377
    %v4750 = vpack.c.b16 %v4382, %v4378
    %v4751 = vpack.c.b16 %v4387, %v4383
    %v4752 = vpack.c.b16 %v4388, %v4384
    %v4753 = vpack.c.b16 %v4389, %v4385
    %v4754 = vpack.c.b16 %v4390, %v4386
    %v4755 = vpack.c.b16 %v4395, %v4391
    %v4756 = vpack.c.b16 %v4396, %v4392
    %v4757 = vpack.c.b16 %v4397, %v4393
    %v4758 = vpack.c.b16 %v4398, %v4394
    %v4759 = vpack.c.b16 %v4403, %v4399
    %v4760 = vpack.c.b16 %v4404, %v4400
    %v4761 = vpack.c.b16 %v4405, %v4401
    %v4762 = vpack.c.b16 %v4406, %v4402
    %v4763 = vpack.c.b16 %v4411, %v4407
    %v4764 = vpack.c.b16 %v4412, %v4408
    %v4765 = vpack.c.b16 %v4413, %v4409
    %v4766 = vpack.c.b16 %v4414, %v4410
    %v4767 = vpack.c.b16 %v4419, %v4415
    %v4768 = vpack.c.b16 %v4420, %v4416
    %v4769 = vpack.c.b16 %v4421, %v4417
    %v4770 = vpack.c.b16 %v4422, %v4418
    %v4771 = vpack.c.b16 %v4427, %v4423
    %v4772 = vpack.c.b16 %v4428, %v4424
    %v4773 = vpack.c.b16 %v4429, %v4425
    %v4774 = vpack.c.b16 %v4430, %v4426
    %v4775 = vpack.c.b16 %v4435, %v4431
    %v4776 = vpack.c.b16 %v4436, %v4432
    %v4777 = vpack.c.b16 %v4437, %v4433
    %v4778 = vpack.c.b16 %v4438, %v4434
    %v4779 = vpack.c.b16 %v4443, %v4439
    %v4780 = vpack.c.b16 %v4444, %v4440
    %v4781 = vpack.c.b16 %v4445, %v4441
    %v4782 = vpack.c.b16 %v4446, %v4442
    %v4783 = vpack.c.b16 %v4451, %v4447
    %v4784 = vpack.c.b16 %v4452, %v4448
    %v4785 = vpack.c.b16 %v4453, %v4449
    %v4786 = vpack.c.b16 %v4454, %v4450
    %v4787 = vpack.c.b16 %v4459, %v4455
    %v4788 = vpack.c.b16 %v4460, %v4456
    %v4789 = vpack.c.b16 %v4461, %v4457
    %v4790 = vpack.c.b16 %v4462, %v4458
    %v4791 = vpack.c.b16 %v4467, %v4463
    %v4792 = vpack.c.b16 %v4468, %v4464
    %v4793 = vpack.c.b16 %v4469, %v4465
    %v4794 = vpack.c.b16 %v4470, %v4466
    %v4795 = vpack.c.b16 %v4475, %v4471
    %v4796 = vpack.c.b16 %v4476, %v4472
    %v4797 = vpack.c.b16 %v4477, %v4473
    %v4798 = vpack.c.b16 %v4478, %v4474
    %v4799 = vpack.c.b16 %v4483, %v4479
    %v4800 = vpack.c.b16 %v4484, %v4480
    %v4801 = vpack.c.b16 %v4485, %v4481
    %v4802 = vpack.c.b16 %v4486, %v4482
    %v4803 = vpack.c.b16 %v4491, %v4487
    %v4804 = vpack.c.b16 %v4492, %v4488
    %v4805 = vpack.c.b16 %v4493, %v4489
    %v4806 = vpack.c.b16 %v4494, %v4490
    %v4807 = vpack.c.b16 %v4499, %v4495
    %v4808 = vpack.c.b16 %v4500, %v4496
    %v4809 = vpack.c.b16 %v4501, %v4497
    %v4810 = vpack.c.b16 %v4502, %v4498
    %v4811 = vpack.c.b16 %v4507, %v4503
    %v4812 = vpack.c.b16 %v4508, %v4504
    %v4813 = vpack.c.b16 %v4509, %v4505
    %v4814 = vpack.c.b16 %v4510, %v4506
    %v4815 = vpack.c.b16 %v4515, %v4511
    %v4816 = vpack.c.b16 %v4516, %v4512
    %v4817 = vpack.c.b16 %v4517, %v4513
    %v4818 = vpack.c.b16 %v4518, %v4514
    %v4819 = vpack.c.b16 %v4523, %v4519
    %v4820 = vpack.c.b16 %v4524, %v4520
    %v4821 = vpack.c.b16 %v4525, %v4521
    %v4822 = vpack.c.b16 %v4526, %v4522
    %v4823 = vpack.c.b16 %v4531, %v4527
    %v4824 = vpack.c.b16 %v4532, %v4528
    %v4825 = vpack.c.b16 %v4533, %v4529
    %v4826 = vpack.c.b16 %v4534, %v4530
    %v4827 = vpack.c.b16 %v4539, %v4535
    %v4828 = vpack.c.b16 %v4540, %v4536
    %v4829 = vpack.c.b16 %v4541, %v4537
    %v4830 = vpack.c.b16 %v4542, %v4538
    %v4831 = vpack.c.b16 %v4547, %v4543
    %v4832 = vpack.c.b16 %v4548, %v4544
    %v4833 = vpack.c.b16 %v4549, %v4545
    %v4834 = vpack.c.b16 %v4550, %v4546
    %v4835 = vpack.c.b16 %v4555, %v4551
    %v4836 = vpack.c.b16 %v4556, %v4552
    %v4837 = vpack.c.b16 %v4557, %v4553
    %v4838 = vpack.c.b16 %v4558, %v4554
    %v4839 = vpack.c.b16 %v4563, %v4559
    %v4840 = vpack.c.b16 %v4564, %v4560
    %v4841 = vpack.c.b16 %v4565, %v4561
    %v4842 = vpack.c.b16 %v4566, %v4562
    %v4843 = vpack.c.b16 %v4571, %v4567
    %v4844 = vpack.c.b16 %v4572, %v4568
    %v4845 = vpack.c.b16 %v4573, %v4569
    %v4846 = vpack.c.b16 %v4574, %v4570
    %v4847 = vpack.c.b16 %v4579, %v4575
    %v4848 = vpack.c.b16 %v4580, %v4576
    %v4849 = vpack.c.b16 %v4581, %v4577
    %v4850 = vpack.c.b16 %v4582, %v4578
    %v4851 = vpack.c.b16 %v4587, %v4583
    %v4852 = vpack.c.b16 %v4588, %v4584
    %v4853 = vpack.c.b16 %v4589, %v4585
    %v4854 = vpack.c.b16 %v4590, %v4586
    %v4855 = vpack.c.b16 %v4595, %v4591
    %v4856 = vpack.c.b16 %v4596, %v4592
    %v4857 = vpack.c.b16 %v4597, %v4593
    %v4858 = vpack.c.b16 %v4598, %v4594
    %v4859 = vpack.c.b16 %v4603, %v4599
    %v4860 = vpack.c.b16 %v4604, %v4600
    %v4861 = vpack.c.b16 %v4605, %v4601
    %v4862 = vpack.c.b16 %v4606, %v4602
    %v4863 = vpack.c.b16 %v4611, %v4607
    %v4864 = vpack.c.b16 %v4612, %v4608
    %v4865 = vpack.c.b16 %v4613, %v4609
    %v4866 = vpack.c.b16 %v4614, %v4610
    %v4867 = vpack.c.b16 %v4619, %v4615
    %v4868 = vpack.c.b16 %v4620, %v4616
    %v4869 = vpack.c.b16 %v4621, %v4617
    %v4870 = vpack.c.b16 %v4622, %v4618
    %v4871 = vpack.c.b16 %v4627, %v4623
    %v4872 = vpack.c.b16 %v4628, %v4624
    %v4873 = vpack.c.b16 %v4629, %v4625
    %v4874 = vpack.c.b16 %v4630, %v4626
    %v4875 = vpack.c.b16 %v4635, %v4631
    %v4876 = vpack.c.b16 %v4636, %v4632
    %v4877 = vpack.c.b16 %v4637, %v4633
    %v4878 = vpack.c.b16 %v4638, %v4634
    %v4879 = vpack.c.b16 %v4643, %v4639
    %v4880 = vpack.c.b16 %v4644, %v4640
    %v4881 = vpack.c.b16 %v4645, %v4641
    %v4882 = vpack.c.b16 %v4646, %v4642
    %v4883 = vpack.c.b16 %v4651, %v4647
    %v4884 = vpack.c.b16 %v4652, %v4648
    %v4885 = vpack.c.b16 %v4653, %v4649
    %v4886 = vpack.c.b16 %v4654, %v4650
    %v4887 = vpack.c.b16 %v4659, %v4655
    %v4888 = vpack.c.b16 %v4660, %v4656
    %v4889 = vpack.c.b16 %v4661, %v4657
    %v4890 = vpack.c.b16 %v4662, %v4658
    %v4891 = vpack.c.b16 %v4667, %v4663
    %v4892 = vpack.c.b16 %v4668, %v4664
    %v4893 = vpack.c.b16 %v4669, %v4665
    %v4894 = vpack.c.b16 %v4670, %v4666
    %v4895 = vpack.c.b16 %v4675, %v4671
    %v4896 = vpack.c.b16 %v4676, %v4672
    %v4897 = vpack.c.b16 %v4677, %v4673
    %v4898 = vpack.c.b16 %v4678, %v4674
    %v4899 = vpack.c.b16 %v4683, %v4679
    %v4900 = vpack.c.b16 %v4684, %v4680
    %v4901 = vpack.c.b16 %v4685, %v4681
    %v4902 = vpack.c.b16 %v4686, %v4682
    %v4903 = vpack.c.b16 %v4691, %v4687
    %v4904 = vpack.c.b16 %v4692, %v4688
    %v4905 = vpack.c.b16 %v4693, %v4689
    %v4906 = vpack.c.b16 %v4694, %v4690
    %v4907 = vpack.c.b16 %v4699, %v4695
    %v4908 = vpack.c.b16 %v4700, %v4696
    %v4909 = vpack.c.b16 %v4701, %v4697
    %v4910 = vpack.c.b16 %v4702, %v4698
    %v4911 = vpack.c.b16 %v4707, %v4703
    %v4912 = vpack.c.b16 %v4708, %v4704
    %v4913 = vpack.c.b16 %v4709, %v4705
    %v4914 = vpack.c.b16 %v4710, %v4706
    %v4915 = vpack.c.b16 %v4715, %v4711
    %v4916 = vpack.c.b16 %v4716, %v4712
    %v4917 = vpack.c.b16 %v4717, %v4713
    %v4918 = vpack.c.b16 %v4718, %v4714
    %v4919 = vpack.c.b16 %v4723, %v4719
    %v4920 = vpack.c.b16 %v4724, %v4720
    %v4921 = vpack.c.b16 %v4725, %v4721
    %v4922 = vpack.c.b16 %v4726, %v4722
    %v4923 = vpack.c.b16 %v4731, %v4727
    %v4924 = vpack.c.b16 %v4732, %v4728
    %v4925 = vpack.c.b16 %v4733, %v4729
    %v4926 = vpack.c.b16 %v4734, %v4730
    %5119 = vmatprep.subr.bf16.mxu0 %v4736
    %5120 = vmatpush1.bf16.msra.mxu0 %v4735
    %5121 = vmatprep.subr.bf16.mxu0 %v4740
    %5122 = vmatpush1.bf16.msra.mxu0 %v4739
    %5123 = vmatprep.subr.bf16.mxu0 %v4744
    %5124 = vmatpush1.bf16.msra.mxu0 %v4743
    %5125 = vmatprep.subr.bf16.mxu0 %v4748
    %5126 = vmatpush1.bf16.msra.mxu0 %v4747
    %5127 = vmatprep.subr.bf16.mxu0 %v4752
    %5128 = vmatpush1.bf16.msra.mxu0 %v4751
    %5129 = vmatprep.subr.bf16.mxu0 %v4756
    %5130 = vmatpush1.bf16.msra.mxu0 %v4755
    %5131 = vmatprep.subr.bf16.mxu0 %v4760
    %5132 = vmatpush1.bf16.msra.mxu0 %v4759
    %5133 = vmatprep.subr.bf16.mxu0 %v4764
    %5134 = vmatpush1.bf16.msra.mxu0 %v4763
    %5135 = vmatprep.subr.bf16.mxu0 %v4768
    %5136 = vmatpush1.bf16.msra.mxu0 %v4767
    %5137 = vmatprep.subr.bf16.mxu0 %v4772
    %5138 = vmatpush1.bf16.msra.mxu0 %v4771
    %5139 = vmatprep.subr.bf16.mxu0 %v4776
    %5140 = vmatpush1.bf16.msra.mxu0 %v4775
    %5141 = vmatprep.subr.bf16.mxu0 %v4780
    %5142 = vmatpush1.bf16.msra.mxu0 %v4779
    %5143 = vmatprep.subr.bf16.mxu0 %v4784
    %5144 = vmatpush1.bf16.msra.mxu0 %v4783
    %5145 = vmatprep.subr.bf16.mxu0 %v4788
    %5146 = vmatpush1.bf16.msra.mxu0 %v4787
    %5147 = vmatprep.subr.bf16.mxu0 %v4792
    %5148 = vmatpush1.bf16.msra.mxu0 %v4791
    %5149 = vmatprep.subr.bf16.mxu0 %v4796
    %5150 = vmatpush1.bf16.msra.mxu0 %v4795
    %5151 = vmatprep.mubr.bf16.mxu0 %v234
    %5152 = vmatmul.mubr.bf16.gmra.mrb[0].mxu0 %v233
    %v5153 = vpop.f32.mrb[0].mxu0
    %v5154 = vadd.f32 0.0, %v5153
    %v5155 = vpop.f32.mrb[0].mxu0
    %v5156 = vadd.f32 0.0, %v5155
    %v5157 = vpop.f32.mrb[0].mxu0
    %v5158 = vpop.f32.mrb[0].mxu0
    %5159 = vdwg.mxu0
    %5160 = vmatprep.subr.bf16.mxu0 %v4800
    %5161 = vmatpush1.bf16.msra.mxu0 %v4799
    %5162 = vmatprep.subr.bf16.mxu0 %v4804
    %5163 = vmatpush1.bf16.msra.mxu0 %v4803
    %5164 = vmatprep.subr.bf16.mxu0 %v4808
    %5165 = vmatpush1.bf16.msra.mxu0 %v4807
    %5166 = vmatprep.subr.bf16.mxu0 %v4812
    %5167 = vmatpush1.bf16.msra.mxu0 %v4811
    %5168 = vmatprep.subr.bf16.mxu0 %v4816
    %5169 = vmatpush1.bf16.msra.mxu0 %v4815
    %5170 = vmatprep.subr.bf16.mxu0 %v4820
    %5171 = vmatpush1.bf16.msra.mxu0 %v4819
    %5172 = vmatprep.subr.bf16.mxu0 %v4824
    %5173 = vmatpush1.bf16.msra.mxu0 %v4823
    %5174 = vmatprep.subr.bf16.mxu0 %v4828
    %5175 = vmatpush1.bf16.msra.mxu0 %v4827
    %5176 = vmatprep.subr.bf16.mxu0 %v4832
    %5177 = vmatpush1.bf16.msra.mxu0 %v4831
    %5178 = vmatprep.subr.bf16.mxu0 %v4836
    %5179 = vmatpush1.bf16.msra.mxu0 %v4835
    %5180 = vmatprep.subr.bf16.mxu0 %v4840
    %5181 = vmatpush1.bf16.msra.mxu0 %v4839
    %5182 = vmatprep.subr.bf16.mxu0 %v4844
    %5183 = vmatpush1.bf16.msra.mxu0 %v4843
    %5184 = vmatprep.subr.bf16.mxu0 %v4848
    %5185 = vmatpush1.bf16.msra.mxu0 %v4847
    %5186 = vmatprep.subr.bf16.mxu0 %v4852
    %5187 = vmatpush1.bf16.msra.mxu0 %v4851
    %5188 = vmatprep.subr.bf16.mxu0 %v4856
    %5189 = vmatpush1.bf16.msra.mxu0 %v4855
    %5190 = vmatprep.subr.bf16.mxu0 %v4860
    %5191 = vmatpush1.bf16.msra.mxu0 %v4859
    %5192 = vmatprep.mubr.bf16.mxu0 %v236
    %5193 = vmatmul.mubr.bf16.gmra.mrb[0].mxu0 %v235
    %v5194 = vpop.f32.mrb[0].mxu0
    %v5195 = vadd.f32 %v5154, %v5194
    %v5196 = vpop.f32.mrb[0].mxu0
    %v5197 = vadd.f32 %v5156, %v5196
    %v5198 = vpop.f32.mrb[0].mxu0
    %v5199 = vpop.f32.mrb[0].mxu0
    %5200 = vdwg.mxu0
    %5201 = vmatprep.subr.bf16.mxu0 %v4864
    %5202 = vmatpush1.bf16.msra.mxu0 %v4863
    %5203 = vmatprep.subr.bf16.mxu0 %v4868
    %5204 = vmatpush1.bf16.msra.mxu0 %v4867
    %5205 = vmatprep.subr.bf16.mxu0 %v4872
    %5206 = vmatpush1.bf16.msra.mxu0 %v4871
    %5207 = vmatprep.subr.bf16.mxu0 %v4876
    %5208 = vmatpush1.bf16.msra.mxu0 %v4875
    %5209 = vmatprep.subr.bf16.mxu0 %v4880
    %5210 = vmatpush1.bf16.msra.mxu0 %v4879
    %5211 = vmatprep.subr.bf16.mxu0 %v4884
    %5212 = vmatpush1.bf16.msra.mxu0 %v4883
    %5213 = vmatprep.subr.bf16.mxu0 %v4888
    %5214 = vmatpush1.bf16.msra.mxu0 %v4887
    %5215 = vmatprep.subr.bf16.mxu0 %v4892
    %5216 = vmatpush1.bf16.msra.mxu0 %v4891
    %5217 = vmatprep.subr.bf16.mxu0 %v4896
    %5218 = vmatpush1.bf16.msra.mxu0 %v4895
    %5219 = vmatprep.subr.bf16.mxu0 %v4900
    %5220 = vmatpush1.bf16.msra.mxu0 %v4899
    %5221 = vmatprep.subr.bf16.mxu0 %v4904
    %5222 = vmatpush1.bf16.msra.mxu0 %v4903
    %5223 = vmatprep.subr.bf16.mxu0 %v4908
    %5224 = vmatpush1.bf16.msra.mxu0 %v4907
    %5225 = vmatprep.subr.bf16.mxu0 %v4912
    %5226 = vmatpush1.bf16.msra.mxu0 %v4911
    %5227 = vmatprep.subr.bf16.mxu0 %v4916
    %5228 = vmatpush1.bf16.msra.mxu0 %v4915
    %5229 = vmatprep.subr.bf16.mxu0 %v4920
    %5230 = vmatpush1.bf16.msra.mxu0 %v4919
    %5231 = vmatprep.subr.bf16.mxu0 %v4924
    %5232 = vmatpush1.bf16.msra.mxu0 %v4923
    %5233 = vmatprep.mubr.bf16.mxu0 %v238
    %5234 = vmatmul.mubr.bf16.gmra.mrb[0].mxu0 %v237
    %v5235 = vpop.f32.mrb[0].mxu0
    %v5236 = vadd.f32 %v5195, %v5235
    %v5237 = vpop.f32.mrb[0].mxu0
    %v5238 = vadd.f32 %v5197, %v5237
    %v5239 = vpop.f32.mrb[0].mxu0
    %v5240 = vpop.f32.mrb[0].mxu0
    %5241 = vdwg.mxu0
    %5242 = vmatprep.subr.bf16.mxu0 %v4738
    %5243 = vmatpush1.bf16.msra.mxu0 %v4737
    %5244 = vmatprep.subr.bf16.mxu0 %v4742
    %5245 = vmatpush1.bf16.msra.mxu0 %v4741
    %5246 = vmatprep.subr.bf16.mxu0 %v4746
    %5247 = vmatpush1.bf16.msra.mxu0 %v4745
    %5248 = vmatprep.subr.bf16.mxu0 %v4750
    %5249 = vmatpush1.bf16.msra.mxu0 %v4749
    %5250 = vmatprep.subr.bf16.mxu0 %v4754
    %5251 = vmatpush1.bf16.msra.mxu0 %v4753
    %5252 = vmatprep.subr.bf16.mxu0 %v4758
    %5253 = vmatpush1.bf16.msra.mxu0 %v4757
    %5254 = vmatprep.subr.bf16.mxu0 %v4762
    %5255 = vmatpush1.bf16.msra.mxu0 %v4761
    %5256 = vmatprep.subr.bf16.mxu0 %v4766
    %5257 = vmatpush1.bf16.msra.mxu0 %v4765
    %5258 = vmatprep.subr.bf16.mxu0 %v4770
    %5259 = vmatpush1.bf16.msra.mxu0 %v4769
    %5260 = vmatprep.subr.bf16.mxu0 %v4774
    %5261 = vmatpush1.bf16.msra.mxu0 %v4773
    %5262 = vmatprep.subr.bf16.mxu0 %v4778
    %5263 = vmatpush1.bf16.msra.mxu0 %v4777
    %5264 = vmatprep.subr.bf16.mxu0 %v4782
    %5265 = vmatpush1.bf16.msra.mxu0 %v4781
    %5266 = vmatprep.subr.bf16.mxu0 %v4786
    %5267 = vmatpush1.bf16.msra.mxu0 %v4785
    %5268 = vmatprep.subr.bf16.mxu0 %v4790
    %5269 = vmatpush1.bf16.msra.mxu0 %v4789
    %5270 = vmatprep.subr.bf16.mxu0 %v4794
    %5271 = vmatpush1.bf16.msra.mxu0 %v4793
    %5272 = vmatprep.subr.bf16.mxu0 %v4798
    %5273 = vmatpush1.bf16.msra.mxu0 %v4797
    %5274 = vmatprep.mubr.bf16.mxu0 %v234
    %5275 = vmatmul.mubr.bf16.gmra.mrb[0].mxu0 %v233
    %v5276 = vpop.f32.mrb[0].mxu0
    %v5277 = vadd.f32 0.0, %v5276
    %v5278 = vpop.f32.mrb[0].mxu0
    %v5279 = vadd.f32 0.0, %v5278
    %v5280 = vpop.f32.mrb[0].mxu0
    %v5281 = vpop.f32.mrb[0].mxu0
    %5282 = vdwg.mxu0
    %5283 = vmatprep.subr.bf16.mxu0 %v4802
    %5284 = vmatpush1.bf16.msra.mxu0 %v4801
    %5285 = vmatprep.subr.bf16.mxu0 %v4806
    %5286 = vmatpush1.bf16.msra.mxu0 %v4805
    %5287 = vmatprep.subr.bf16.mxu0 %v4810
    %5288 = vmatpush1.bf16.msra.mxu0 %v4809
    %5289 = vmatprep.subr.bf16.mxu0 %v4814
    %5290 = vmatpush1.bf16.msra.mxu0 %v4813
    %5291 = vmatprep.subr.bf16.mxu0 %v4818
    %5292 = vmatpush1.bf16.msra.mxu0 %v4817
    %5293 = vmatprep.subr.bf16.mxu0 %v4822
    %5294 = vmatpush1.bf16.msra.mxu0 %v4821
    %5295 = vmatprep.subr.bf16.mxu0 %v4826
    %5296 = vmatpush1.bf16.msra.mxu0 %v4825
    %5297 = vmatprep.subr.bf16.mxu0 %v4830
    %5298 = vmatpush1.bf16.msra.mxu0 %v4829
    %5299 = vmatprep.subr.bf16.mxu0 %v4834
    %5300 = vmatpush1.bf16.msra.mxu0 %v4833
    %5301 = vmatprep.subr.bf16.mxu0 %v4838
    %5302 = vmatpush1.bf16.msra.mxu0 %v4837
    %5303 = vmatprep.subr.bf16.mxu0 %v4842
    %5304 = vmatpush1.bf16.msra.mxu0 %v4841
    %5305 = vmatprep.subr.bf16.mxu0 %v4846
    %5306 = vmatpush1.bf16.msra.mxu0 %v4845
    %5307 = vmatprep.subr.bf16.mxu0 %v4850
    %5308 = vmatpush1.bf16.msra.mxu0 %v4849
    %5309 = vmatprep.subr.bf16.mxu0 %v4854
    %5310 = vmatpush1.bf16.msra.mxu0 %v4853
    %5311 = vmatprep.subr.bf16.mxu0 %v4858
    %5312 = vmatpush1.bf16.msra.mxu0 %v4857
    %5313 = vmatprep.subr.bf16.mxu0 %v4862
    %5314 = vmatpush1.bf16.msra.mxu0 %v4861
    %5315 = vmatprep.mubr.bf16.mxu0 %v236
    %5316 = vmatmul.mubr.bf16.gmra.mrb[0].mxu0 %v235
    %v5317 = vpop.f32.mrb[0].mxu0
    %v5318 = vadd.f32 %v5277, %v5317
    %v5319 = vpop.f32.mrb[0].mxu0
    %v5320 = vadd.f32 %v5279, %v5319
    %v5321 = vpop.f32.mrb[0].mxu0
    %v5322 = vpop.f32.mrb[0].mxu0
    %5323 = vdwg.mxu0
    %5324 = vmatprep.subr.bf16.mxu0 %v4866
    %5325 = vmatpush1.bf16.msra.mxu0 %v4865
    %5326 = vmatprep.subr.bf16.mxu0 %v4870
    %5327 = vmatpush1.bf16.msra.mxu0 %v4869
    %5328 = vmatprep.subr.bf16.mxu0 %v4874
    %5329 = vmatpush1.bf16.msra.mxu0 %v4873
    %5330 = vmatprep.subr.bf16.mxu0 %v4878
    %5331 = vmatpush1.bf16.msra.mxu0 %v4877
    %5332 = vmatprep.subr.bf16.mxu0 %v4882
    %5333 = vmatpush1.bf16.msra.mxu0 %v4881
    %5334 = vmatprep.subr.bf16.mxu0 %v4886
    %5335 = vmatpush1.bf16.msra.mxu0 %v4885
    %5336 = vmatprep.subr.bf16.mxu0 %v4890
    %5337 = vmatpush1.bf16.msra.mxu0 %v4889
    %5338 = vmatprep.subr.bf16.mxu0 %v4894
    %5339 = vmatpush1.bf16.msra.mxu0 %v4893
    %5340 = vmatprep.subr.bf16.mxu0 %v4898
    %5341 = vmatpush1.bf16.msra.mxu0 %v4897
    %5342 = vmatprep.subr.bf16.mxu0 %v4902
    %5343 = vmatpush1.bf16.msra.mxu0 %v4901
    %5344 = vmatprep.subr.bf16.mxu0 %v4906
    %5345 = vmatpush1.bf16.msra.mxu0 %v4905
    %5346 = vmatprep.subr.bf16.mxu0 %v4910
    %5347 = vmatpush1.bf16.msra.mxu0 %v4909
    %5348 = vmatprep.subr.bf16.mxu0 %v4914
    %5349 = vmatpush1.bf16.msra.mxu0 %v4913
    %5350 = vmatprep.subr.bf16.mxu0 %v4918
    %5351 = vmatpush1.bf16.msra.mxu0 %v4917
    %5352 = vmatprep.subr.bf16.mxu0 %v4922
    %5353 = vmatpush1.bf16.msra.mxu0 %v4921
    %5354 = vmatprep.subr.bf16.mxu0 %v4926
    %5355 = vmatpush1.bf16.msra.mxu0 %v4925
    %5356 = vmatprep.mubr.bf16.mxu0 %v238
    %5357 = vmatmul.mubr.bf16.gmra.mrb[0].mxu0 %v237
    %v5358 = vpop.f32.mrb[0].mxu0
    %v5359 = vadd.f32 %v5318, %v5358
    %v5360 = vpop.f32.mrb[0].mxu0
    %v5361 = vadd.f32 %v5320, %v5360
    %v5362 = vpop.f32.mrb[0].mxu0
    %v5363 = vpop.f32.mrb[0].mxu0
    %5364 = vdwg.mxu0
    %v5365 = vmul.f32 %v3633, %v5236
    %v5366 = vmul.f32 %v3635, %v5238
    %v5367 = vmul.f32 %v3961, %v5359
    %v5368 = vmul.f32 %v3963, %v5361
    %vm5369 = vcmask 1041408
    %v5370 = vsel %vm5369, %v5365, 0.0
    %v5371 = vsel %vm5369, %v5366, 0.0
    %v5372 = vadd.f32 %v5370, %v5371
    %v5373 = vsel %vm5369, %v5367, 0.0
    %v5374 = vadd.f32 %v5372, %v5373
    %v5375 = vsel %vm5369, %v5368, 0.0
    %v5376 = vadd.f32 %v5374, %v5375
    %5377 = vadd.xlane.f32.xlu0 %v5376
    %v5378 = vpop.xlane.xlu0 %5377
    %v5379 = vmul.f32 %v3633, %v3633
    %v5380 = vmul.f32 %v3635, %v3635
    %v5381 = vmul.f32 %v3961, %v3961
    %v5382 = vmul.f32 %v3963, %v3963
    %v5383 = vsel %vm5369, %v5379, 0.0
    %v5384 = vsel %vm5369, %v5380, 0.0
    %v5385 = vadd.f32 %v5383, %v5384
    %v5386 = vsel %vm5369, %v5381, 0.0
    %v5387 = vadd.f32 %v5385, %v5386
    %v5388 = vsel %vm5369, %v5382, 0.0
    %v5389 = vadd.f32 %v5387, %v5388
    %5390 = vadd.xlane.f32.xlu0 %v5389
    %v5391 = vpop.xlane.xlu0 %5390
    %v5392 = vmul.f32 %v5236, %v5236
    %v5393 = vmul.f32 %v5238, %v5238
    %v5394 = vmul.f32 %v5359, %v5359
    %v5395 = vmul.f32 %v5361, %v5361
    %v5396 = vsel %vm5369, %v5392, 0.0
    %v5397 = vsel %vm5369, %v5393, 0.0
    %v5398 = vadd.f32 %v5396, %v5397
    %v5399 = vsel %vm5369, %v5394, 0.0
    %v5400 = vadd.f32 %v5398, %v5399
    %v5401 = vsel %vm5369, %v5395, 0.0
    %v5402 = vadd.f32 %v5400, %v5401
    %5403 = vadd.xlane.f32.xlu0 %v5402
    %v5404 = vpop.xlane.xlu0 %5403
    %v5405 = vand.u32 2147483647, %v5378
    %v5406 = vmul.f32 %v5391, %v5404
    %v5407 = vrsqrt.pop %v5406
    %v5408 = vmul.f32 %v5405, %v5407
    %vm5409 = vcmask 1024
    %v5410 = vsel %vm5409, %v5408, 0.0
    %5411 = vadd.xlane.f32.xlu0 %v5410
    %v5412 = vpop.xlane.xlu0 %5411
    %v5413 = vrot.slane %v5412, 4
    %v5414 = vadd.f32 %v5412, %v5413
    %v5415 = vrot.slane %v5414, 2
    %v5416 = vadd.f32 %v5414, %v5415
    %v5417 = vrot.slane %v5416, 1
    %v5418 = vadd.f32 %v5416, %v5417
    %s5419 = vtos %v5418
    %s5420 = scalar_lea.smem [#allocation13], 0
    %5421 = sst [smem:[%s5420]] %s5419
    %v5422 = vpack.c.bf16 %v5236, %v5236
    %v5423 = vpack.c.bf16 %v5238, %v5238
    %v5424 = vpack.c.bf16 %v5359, %v5359
    %v5425 = vpack.c.bf16 %v5361, %v5361
    %v5426 = vpack.c.bf16 %v3633, %v3633
    %v5427 = vpack.c.bf16 %v3635, %v3635
    %v5428 = vpack.c.bf16 %v3961, %v3961
    %v5429 = vpack.c.bf16 %v3963, %v3963
    %v5430 = vld [vmem:[%s4] sm:$0xf]
    %v5431 = vld [vmem:[%s4 + $0x4] sm:$0xf]
    %v5432 = vld [vmem:[%s4 + $0x8] sm:$0xf]
    %v5433 = vld [vmem:[%s4 + $0xc] sm:$0xf]
    %v5434 = vld [vmem:[%s4 + $0x10] sm:$0xf]
    %v5435 = vld [vmem:[%s4 + $0x14] sm:$0xf]
    %v5436 = vld [vmem:[%s4 + $0x18] sm:$0xf]
    %v5437 = vld [vmem:[%s4 + $0x1c] sm:$0xf]
    %v5438 = vld [vmem:[%s4 + $0x20] sm:$0xf]
    %v5439 = vld [vmem:[%s4 + $0x24] sm:$0xf]
    %v5440 = vld [vmem:[%s4 + $0x28] sm:$0xf]
    %v5441 = vld [vmem:[%s4 + $0x2c] sm:$0xf]
    %v5442 = vld [vmem:[%s4 + $0x30] sm:$0xf]
    %v5443 = vld [vmem:[%s4 + $0x34] sm:$0xf]
    %v5444 = vld [vmem:[%s4 + $0x38] sm:$0xf]
    %v5445 = vld [vmem:[%s4 + $0x3c] sm:$0xf]
    %v5446 = vld [vmem:[%s4 + $0x40] sm:$0xf]
    %v5447 = vld [vmem:[%s4 + $0x44] sm:$0xf]
    %v5448 = vld [vmem:[%s4 + $0x48] sm:$0xf]
    %v5449 = vld [vmem:[%s4 + $0x4c] sm:$0xf]
    %v5450 = vld [vmem:[%s4 + $0x50] sm:$0xf]
    %v5451 = vld [vmem:[%s4 + $0x54] sm:$0xf]
    %v5452 = vld [vmem:[%s4 + $0x58] sm:$0xf]
    %v5453 = vld [vmem:[%s4 + $0x5c] sm:$0xf]
    %v5454 = vld [vmem:[%s4 + $0x60] sm:$0xf]
    %v5455 = vld [vmem:[%s4 + $0x64] sm:$0xf]
    %v5456 = vld [vmem:[%s4 + $0x68] sm:$0xf]
    %v5457 = vld [vmem:[%s4 + $0x6c] sm:$0xf]
    %v5458 = vld [vmem:[%s4 + $0x70] sm:$0xf]
    %v5459 = vld [vmem:[%s4 + $0x74] sm:$0xf]
    %v5460 = vld [vmem:[%s4 + $0x78] sm:$0xf]
    %v5461 = vld [vmem:[%s4 + $0x7c] sm:$0xf]
    %v5462 = vld [vmem:[%s4 + $0x80] sm:$0xf]
    %v5463 = vld [vmem:[%s4 + $0x84] sm:$0xf]
    %v5464 = vld [vmem:[%s4 + $0x88] sm:$0xf]
    %v5465 = vld [vmem:[%s4 + $0x8c] sm:$0xf]
    %v5466 = vld [vmem:[%s4 + $0x90] sm:$0xf]
    %v5467 = vld [vmem:[%s4 + $0x94] sm:$0xf]
    %v5468 = vld [vmem:[%s4 + $0x98] sm:$0xf]
    %v5469 = vld [vmem:[%s4 + $0x9c] sm:$0xf]
    %v5470 = vld [vmem:[%s4 + $0xa0] sm:$0xf]
    %v5471 = vld [vmem:[%s4 + $0xa4] sm:$0xf]
    %v5472 = vld [vmem:[%s4 + $0xa8] sm:$0xf]
    %v5473 = vld [vmem:[%s4 + $0xac] sm:$0xf]
    %v5474 = vld [vmem:[%s4 + $0xb0] sm:$0xf]
    %v5475 = vld [vmem:[%s4 + $0xb4] sm:$0xf]
    %v5476 = vld [vmem:[%s4 + $0xb8] sm:$0xf]
    %v5477 = vld [vmem:[%s4 + $0xbc] sm:$0xf]
    %v5478 = vld [vmem:[%s4 + $0xc0] sm:$0xf]
    %v5479 = vld [vmem:[%s4 + $0xc4] sm:$0xf]
    %v5480 = vld [vmem:[%s4 + $0xc8] sm:$0xf]
    %v5481 = vld [vmem:[%s4 + $0xcc] sm:$0xf]
    %v5482 = vld [vmem:[%s4 + $0xd0] sm:$0xf]
    %v5483 = vld [vmem:[%s4 + $0xd4] sm:$0xf]
    %v5484 = vld [vmem:[%s4 + $0xd8] sm:$0xf]
    %v5485 = vld [vmem:[%s4 + $0xdc] sm:$0xf]
    %v5486 = vld [vmem:[%s4 + $0xe0] sm:$0xf]
    %v5487 = vld [vmem:[%s4 + $0xe4] sm:$0xf]
    %v5488 = vld [vmem:[%s4 + $0xe8] sm:$0xf]
    %v5489 = vld [vmem:[%s4 + $0xec] sm:$0xf]
    %v5490 = vld [vmem:[%s4 + $0xf0] sm:$0xf]
    %v5491 = vld [vmem:[%s4 + $0xf4] sm:$0xf]
    %v5492 = vld [vmem:[%s4 + $0xf8] sm:$0xf]
    %v5493 = vld [vmem:[%s4 + $0xfc] sm:$0xf]
    %v5494 = vld [vmem:[%s4 + $0x100] sm:$0xf]
    %v5495 = vld [vmem:[%s4 + $0x104] sm:$0xf]
    %v5496 = vld [vmem:[%s4 + $0x108] sm:$0xf]
    %v5497 = vld [vmem:[%s4 + $0x10c] sm:$0xf]
    %v5498 = vld [vmem:[%s4 + $0x110] sm:$0xf]
    %v5499 = vld [vmem:[%s4 + $0x114] sm:$0xf]
    %v5500 = vld [vmem:[%s4 + $0x118] sm:$0xf]
    %v5501 = vld [vmem:[%s4 + $0x11c] sm:$0xf]
    %v5502 = vld [vmem:[%s4 + $0x120] sm:$0xf]
    %v5503 = vld [vmem:[%s4 + $0x124] sm:$0xf]
    %v5504 = vld [vmem:[%s4 + $0x128] sm:$0xf]
    %v5505 = vld [vmem:[%s4 + $0x12c] sm:$0xf]
    %v5506 = vld [vmem:[%s4 + $0x130] sm:$0xf]
    %v5507 = vld [vmem:[%s4 + $0x134] sm:$0xf]
    %v5508 = vld [vmem:[%s4 + $0x138] sm:$0xf]
    %v5509 = vld [vmem:[%s4 + $0x13c] sm:$0xf]
    %v5510 = vld [vmem:[%s4 + $0x140] sm:$0xf]
    %v5511 = vld [vmem:[%s4 + $0x144] sm:$0xf]
    %v5512 = vld [vmem:[%s4 + $0x148] sm:$0xf]
    %v5513 = vld [vmem:[%s4 + $0x14c] sm:$0xf]
    %v5514 = vld [vmem:[%s4 + $0x150] sm:$0xf]
    %v5515 = vld [vmem:[%s4 + $0x154] sm:$0xf]
    %v5516 = vld [vmem:[%s4 + $0x158] sm:$0xf]
    %v5517 = vld [vmem:[%s4 + $0x15c] sm:$0xf]
    %v5518 = vld [vmem:[%s4 + $0x160] sm:$0xf]
    %v5519 = vld [vmem:[%s4 + $0x164] sm:$0xf]
    %v5520 = vld [vmem:[%s4 + $0x168] sm:$0xf]
    %v5521 = vld [vmem:[%s4 + $0x16c] sm:$0xf]
    %v5522 = vld [vmem:[%s4 + $0x170] sm:$0xf]
    %v5523 = vld [vmem:[%s4 + $0x174] sm:$0xf]
    %v5524 = vld [vmem:[%s4 + $0x178] sm:$0xf]
    %v5525 = vld [vmem:[%s4 + $0x17c] sm:$0xf]
    %v5526 = vld [vmem:[%s4 + $0x180] sm:$0xf]
    %v5527 = vld [vmem:[%s4 + $0x184] sm:$0xf]
    %v5528 = vld [vmem:[%s4 + $0x188] sm:$0xf]
    %v5529 = vld [vmem:[%s4 + $0x18c] sm:$0xf]
    %v5530 = vld [vmem:[%s4 + $0x190] sm:$0xf]
    %v5531 = vld [vmem:[%s4 + $0x194] sm:$0xf]
    %v5532 = vld [vmem:[%s4 + $0x198] sm:$0xf]
    %v5533 = vld [vmem:[%s4 + $0x19c] sm:$0xf]
    %v5534 = vld [vmem:[%s4 + $0x1a0] sm:$0xf]
    %v5535 = vld [vmem:[%s4 + $0x1a4] sm:$0xf]
    %v5536 = vld [vmem:[%s4 + $0x1a8] sm:$0xf]
    %v5537 = vld [vmem:[%s4 + $0x1ac] sm:$0xf]
    %v5538 = vld [vmem:[%s4 + $0x1b0] sm:$0xf]
    %v5539 = vld [vmem:[%s4 + $0x1b4] sm:$0xf]
    %v5540 = vld [vmem:[%s4 + $0x1b8] sm:$0xf]
    %v5541 = vld [vmem:[%s4 + $0x1bc] sm:$0xf]
    %v5542 = vld [vmem:[%s4 + $0x1c0] sm:$0xf]
    %v5543 = vld [vmem:[%s4 + $0x1c4] sm:$0xf]
    %v5544 = vld [vmem:[%s4 + $0x1c8] sm:$0xf]
    %v5545 = vld [vmem:[%s4 + $0x1cc] sm:$0xf]
    %v5546 = vld [vmem:[%s4 + $0x1d0] sm:$0xf]
    %v5547 = vld [vmem:[%s4 + $0x1d4] sm:$0xf]
    %v5548 = vld [vmem:[%s4 + $0x1d8] sm:$0xf]
    %v5549 = vld [vmem:[%s4 + $0x1dc] sm:$0xf]
    %v5550 = vld [vmem:[%s4 + $0x1e0] sm:$0xf]
    %v5551 = vld [vmem:[%s4 + $0x1e4] sm:$0xf]
    %v5552 = vld [vmem:[%s4 + $0x1e8] sm:$0xf]
    %v5553 = vld [vmem:[%s4 + $0x1ec] sm:$0xf]
    %v5554 = vld [vmem:[%s4 + $0x1f0] sm:$0xf]
    %v5555 = vld [vmem:[%s4 + $0x1f4] sm:$0xf]
    %v5556 = vld [vmem:[%s4 + $0x1f8] sm:$0xf]
    %v5557 = vld [vmem:[%s4 + $0x1fc] sm:$0xf]
    %v5622 = vunpack.c.l.b16 %v5494
    %v5623 = vunpack.c.l.b16 %v5495
    %v5624 = vunpack.c.l.b16 %v5496
    %v5625 = vunpack.c.l.b16 %v5497
    %v5626 = vunpack.c.l.b16 %v5498
    %v5627 = vunpack.c.l.b16 %v5499
    %v5628 = vunpack.c.l.b16 %v5500
    %v5629 = vunpack.c.l.b16 %v5501
    %v5630 = vunpack.c.l.b16 %v5502
    %v5631 = vunpack.c.l.b16 %v5503
    %v5632 = vunpack.c.l.b16 %v5504
    %v5633 = vunpack.c.l.b16 %v5505
    %v5634 = vunpack.c.l.b16 %v5506
    %v5635 = vunpack.c.l.b16 %v5507
    %v5636 = vunpack.c.l.b16 %v5508
    %v5637 = vunpack.c.l.b16 %v5509
    %v5638 = vunpack.c.l.b16 %v5510
    %v5639 = vunpack.c.l.b16 %v5511
    %v5640 = vunpack.c.l.b16 %v5512
    %v5641 = vunpack.c.l.b16 %v5513
    %v5642 = vunpack.c.l.b16 %v5514
    %v5643 = vunpack.c.l.b16 %v5515
    %v5644 = vunpack.c.l.b16 %v5516
    %v5645 = vunpack.c.l.b16 %v5517
    %v5646 = vunpack.c.l.b16 %v5518
    %v5647 = vunpack.c.l.b16 %v5519
    %v5648 = vunpack.c.l.b16 %v5520
    %v5649 = vunpack.c.l.b16 %v5521
    %v5650 = vunpack.c.l.b16 %v5522
    %v5651 = vunpack.c.l.b16 %v5523
    %v5652 = vunpack.c.l.b16 %v5524
    %v5653 = vunpack.c.l.b16 %v5525
    %v5654 = vunpack.c.l.b16 %v5526
    %v5655 = vunpack.c.l.b16 %v5527
    %v5656 = vunpack.c.l.b16 %v5528
    %v5657 = vunpack.c.l.b16 %v5529
    %v5658 = vunpack.c.l.b16 %v5530
    %v5659 = vunpack.c.l.b16 %v5531
    %v5660 = vunpack.c.l.b16 %v5532
    %v5661 = vunpack.c.l.b16 %v5533
    %v5662 = vunpack.c.l.b16 %v5534
    %v5663 = vunpack.c.l.b16 %v5535
    %v5664 = vunpack.c.l.b16 %v5536
    %v5665 = vunpack.c.l.b16 %v5537
    %v5666 = vunpack.c.l.b16 %v5538
    %v5667 = vunpack.c.l.b16 %v5539
    %v5668 = vunpack.c.l.b16 %v5540
    %v5669 = vunpack.c.l.b16 %v5541
    %v5670 = vunpack.c.l.b16 %v5542
    %v5671 = vunpack.c.l.b16 %v5543
    %v5672 = vunpack.c.l.b16 %v5544
    %v5673 = vunpack.c.l.b16 %v5545
    %v5674 = vunpack.c.l.b16 %v5546
    %v5675 = vunpack.c.l.b16 %v5547
    %v5676 = vunpack.c.l.b16 %v5548
    %v5677 = vunpack.c.l.b16 %v5549
    %v5678 = vunpack.c.l.b16 %v5550
    %v5679 = vunpack.c.l.b16 %v5551
    %v5680 = vunpack.c.l.b16 %v5552
    %v5681 = vunpack.c.l.b16 %v5553
    %v5682 = vunpack.c.l.b16 %v5554
    %v5683 = vunpack.c.l.b16 %v5555
    %v5684 = vunpack.c.l.b16 %v5556
    %v5685 = vunpack.c.l.b16 %v5557
    %v5686 = vpack.c.b16 %v5623, %v5622
    %v5687 = vpack.c.b16 %v5625, %v5624
    %v5688 = vpack.c.b16 %v5627, %v5626
    %v5689 = vpack.c.b16 %v5629, %v5628
    %v5690 = vpack.c.b16 %v5631, %v5630
    %v5691 = vpack.c.b16 %v5633, %v5632
    %v5692 = vpack.c.b16 %v5635, %v5634
    %v5693 = vpack.c.b16 %v5637, %v5636
    %v5694 = vpack.c.b16 %v5639, %v5638
    %v5695 = vpack.c.b16 %v5641, %v5640
    %v5696 = vpack.c.b16 %v5643, %v5642
    %v5697 = vpack.c.b16 %v5645, %v5644
    %v5698 = vpack.c.b16 %v5647, %v5646
    %v5699 = vpack.c.b16 %v5649, %v5648
    %v5700 = vpack.c.b16 %v5651, %v5650
    %v5701 = vpack.c.b16 %v5653, %v5652
    %v5702 = vpack.c.b16 %v5655, %v5654
    %v5703 = vpack.c.b16 %v5657, %v5656
    %v5704 = vpack.c.b16 %v5659, %v5658
    %v5705 = vpack.c.b16 %v5661, %v5660
    %v5706 = vpack.c.b16 %v5663, %v5662
    %v5707 = vpack.c.b16 %v5665, %v5664
    %v5708 = vpack.c.b16 %v5667, %v5666
    %v5709 = vpack.c.b16 %v5669, %v5668
    %v5710 = vpack.c.b16 %v5671, %v5670
    %v5711 = vpack.c.b16 %v5673, %v5672
    %v5712 = vpack.c.b16 %v5675, %v5674
    %v5713 = vpack.c.b16 %v5677, %v5676
    %v5714 = vpack.c.b16 %v5679, %v5678
    %v5715 = vpack.c.b16 %v5681, %v5680
    %v5716 = vpack.c.b16 %v5683, %v5682
    %v5717 = vpack.c.b16 %v5685, %v5684
    %5750 = vmatprep.subr.bf16.mxu0 0
    %5751 = vmatpush1.bf16.msra.mxu0 %v5686
    %5752 = vmatprep.subr.bf16.mxu0 0
    %5753 = vmatpush1.bf16.msra.mxu0 %v5687
    %5754 = vmatprep.subr.bf16.mxu0 0
    %5755 = vmatpush1.bf16.msra.mxu0 %v5688
    %5756 = vmatprep.subr.bf16.mxu0 0
    %5757 = vmatpush1.bf16.msra.mxu0 %v5689
    %5758 = vmatprep.subr.bf16.mxu0 0
    %5759 = vmatpush1.bf16.msra.mxu0 %v5690
    %5760 = vmatprep.subr.bf16.mxu0 0
    %5761 = vmatpush1.bf16.msra.mxu0 %v5691
    %5762 = vmatprep.subr.bf16.mxu0 0
    %5763 = vmatpush1.bf16.msra.mxu0 %v5692
    %5764 = vmatprep.subr.bf16.mxu0 0
    %5765 = vmatpush1.bf16.msra.mxu0 %v5693
    %5766 = vmatprep.subr.bf16.mxu0 0
    %5767 = vmatpush1.bf16.msra.mxu0 %v5694
    %5768 = vmatprep.subr.bf16.mxu0 0
    %5769 = vmatpush1.bf16.msra.mxu0 %v5695
    %5770 = vmatprep.subr.bf16.mxu0 0
    %5771 = vmatpush1.bf16.msra.mxu0 %v5696
    %5772 = vmatprep.subr.bf16.mxu0 0
    %5773 = vmatpush1.bf16.msra.mxu0 %v5697
    %5774 = vmatprep.subr.bf16.mxu0 0
    %5775 = vmatpush1.bf16.msra.mxu0 %v5698
    %5776 = vmatprep.subr.bf16.mxu0 0
    %5777 = vmatpush1.bf16.msra.mxu0 %v5699
    %5778 = vmatprep.subr.bf16.mxu0 0
    %5779 = vmatpush1.bf16.msra.mxu0 %v5700
    %5780 = vmatprep.subr.bf16.mxu0 0
    %5781 = vmatpush1.bf16.msra.mxu0 %v5701
    %5782 = vmatprep.mubr.bf16.mxu0 %v5427
    %5783 = vmatmul.mubr.bf16.gmra.mrb[0].mxu0 %v5426
    %v5784 = vpop.f32.mrb[0].mxu0
    %v5785 = vadd.f32 0.0, %v5784
    %v5786 = vpop.f32.mrb[0].mxu0
    %v5787 = vpop.f32.mrb[0].mxu0
    %v5788 = vpop.f32.mrb[0].mxu0
    %5789 = vdwg.mxu0
    %5790 = vmatprep.subr.bf16.mxu0 0
    %5791 = vmatpush1.bf16.msra.mxu0 %v5702
    %5792 = vmatprep.subr.bf16.mxu0 0
    %5793 = vmatpush1.bf16.msra.mxu0 %v5703
    %5794 = vmatprep.subr.bf16.mxu0 0
    %5795 = vmatpush1.bf16.msra.mxu0 %v5704
    %5796 = vmatprep.subr.bf16.mxu0 0
    %5797 = vmatpush1.bf16.msra.mxu0 %v5705
    %5798 = vmatprep.subr.bf16.mxu0 0
    %5799 = vmatpush1.bf16.msra.mxu0 %v5706
    %5800 = vmatprep.subr.bf16.mxu0 0
    %5801 = vmatpush1.bf16.msra.mxu0 %v5707
    %5802 = vmatprep.subr.bf16.mxu0 0
    %5803 = vmatpush1.bf16.msra.mxu0 %v5708
    %5804 = vmatprep.subr.bf16.mxu0 0
    %5805 = vmatpush1.bf16.msra.mxu0 %v5709
    %5806 = vmatprep.subr.bf16.mxu0 0
    %5807 = vmatpush1.bf16.msra.mxu0 %v5710
    %5808 = vmatprep.subr.bf16.mxu0 0
    %5809 = vmatpush1.bf16.msra.mxu0 %v5711
    %5810 = vmatprep.subr.bf16.mxu0 0
    %5811 = vmatpush1.bf16.msra.mxu0 %v5712
    %5812 = vmatprep.subr.bf16.mxu0 0
    %5813 = vmatpush1.bf16.msra.mxu0 %v5713
    %5814 = vmatprep.subr.bf16.mxu0 0
    %5815 = vmatpush1.bf16.msra.mxu0 %v5714
    %5816 = vmatprep.subr.bf16.mxu0 0
    %5817 = vmatpush1.bf16.msra.mxu0 %v5715
    %5818 = vmatprep.subr.bf16.mxu0 0
    %5819 = vmatpush1.bf16.msra.mxu0 %v5716
    %5820 = vmatprep.subr.bf16.mxu0 0
    %5821 = vmatpush1.bf16.msra.mxu0 %v5717
    %5822 = vmatprep.mubr.bf16.mxu0 %v5429
    %5823 = vmatmul.mubr.bf16.gmra.mrb[0].mxu0 %v5428
    %v5824 = vpop.f32.mrb[0].mxu0
    %v5825 = vadd.f32 %v5785, %v5824
    %v5826 = vpop.f32.mrb[0].mxu0
    %v5827 = vpop.f32.mrb[0].mxu0
    %v5828 = vpop.f32.mrb[0].mxu0
    %5829 = vdwg.mxu0
    %v5894 = vunpack.c.l.b16 %v5430
    %v5895 = vunpack.c.l.b16 %v5431
    %v5896 = vunpack.c.l.b16 %v5432
    %v5897 = vunpack.c.l.b16 %v5433
    %v5898 = vunpack.c.l.b16 %v5434
    %v5899 = vunpack.c.l.b16 %v5435
    %v5900 = vunpack.c.l.b16 %v5436
    %v5901 = vunpack.c.l.b16 %v5437
    %v5902 = vunpack.c.l.b16 %v5438
    %v5903 = vunpack.c.l.b16 %v5439
    %v5904 = vunpack.c.l.b16 %v5440
    %v5905 = vunpack.c.l.b16 %v5441
    %v5906 = vunpack.c.l.b16 %v5442
    %v5907 = vunpack.c.l.b16 %v5443
    %v5908 = vunpack.c.l.b16 %v5444
    %v5909 = vunpack.c.l.b16 %v5445
    %v5910 = vunpack.c.l.b16 %v5446
    %v5911 = vunpack.c.l.b16 %v5447
    %v5912 = vunpack.c.l.b16 %v5448
    %v5913 = vunpack.c.l.b16 %v5449
    %v5914 = vunpack.c.l.b16 %v5450
    %v5915 = vunpack.c.l.b16 %v5451
    %v5916 = vunpack.c.l.b16 %v5452
    %v5917 = vunpack.c.l.b16 %v5453
    %v5918 = vunpack.c.l.b16 %v5454
    %v5919 = vunpack.c.l.b16 %v5455
    %v5920 = vunpack.c.l.b16 %v5456
    %v5921 = vunpack.c.l.b16 %v5457
    %v5922 = vunpack.c.l.b16 %v5458
    %v5923 = vunpack.c.l.b16 %v5459
    %v5924 = vunpack.c.l.b16 %v5460
    %v5925 = vunpack.c.l.b16 %v5461
    %v5926 = vunpack.c.l.b16 %v5462
    %v5927 = vunpack.c.l.b16 %v5463
    %v5928 = vunpack.c.l.b16 %v5464
    %v5929 = vunpack.c.l.b16 %v5465
    %v5930 = vunpack.c.l.b16 %v5466
    %v5931 = vunpack.c.l.b16 %v5467
    %v5932 = vunpack.c.l.b16 %v5468
    %v5933 = vunpack.c.l.b16 %v5469
    %v5934 = vunpack.c.l.b16 %v5470
    %v5935 = vunpack.c.l.b16 %v5471
    %v5936 = vunpack.c.l.b16 %v5472
    %v5937 = vunpack.c.l.b16 %v5473
    %v5938 = vunpack.c.l.b16 %v5474
    %v5939 = vunpack.c.l.b16 %v5475
    %v5940 = vunpack.c.l.b16 %v5476
    %v5941 = vunpack.c.l.b16 %v5477
    %v5942 = vunpack.c.l.b16 %v5478
    %v5943 = vunpack.c.l.b16 %v5479
    %v5944 = vunpack.c.l.b16 %v5480
    %v5945 = vunpack.c.l.b16 %v5481
    %v5946 = vunpack.c.l.b16 %v5482
    %v5947 = vunpack.c.l.b16 %v5483
    %v5948 = vunpack.c.l.b16 %v5484
    %v5949 = vunpack.c.l.b16 %v5485
    %v5950 = vunpack.c.l.b16 %v5486
    %v5951 = vunpack.c.l.b16 %v5487
    %v5952 = vunpack.c.l.b16 %v5488
    %v5953 = vunpack.c.l.b16 %v5489
    %v5954 = vunpack.c.l.b16 %v5490
    %v5955 = vunpack.c.l.b16 %v5491
    %v5956 = vunpack.c.l.b16 %v5492
    %v5957 = vunpack.c.l.b16 %v5493
    %v5958 = vpack.c.b16 %v5895, %v5894
    %v5959 = vpack.c.b16 %v5897, %v5896
    %v5960 = vpack.c.b16 %v5899, %v5898
    %v5961 = vpack.c.b16 %v5901, %v5900
    %v5962 = vpack.c.b16 %v5903, %v5902
    %v5963 = vpack.c.b16 %v5905, %v5904
    %v5964 = vpack.c.b16 %v5907, %v5906
    %v5965 = vpack.c.b16 %v5909, %v5908
    %v5966 = vpack.c.b16 %v5911, %v5910
    %v5967 = vpack.c.b16 %v5913, %v5912
    %v5968 = vpack.c.b16 %v5915, %v5914
    %v5969 = vpack.c.b16 %v5917, %v5916
    %v5970 = vpack.c.b16 %v5919, %v5918
    %v5971 = vpack.c.b16 %v5921, %v5920
    %v5972 = vpack.c.b16 %v5923, %v5922
    %v5973 = vpack.c.b16 %v5925, %v5924
    %v5974 = vpack.c.b16 %v5927, %v5926
    %v5975 = vpack.c.b16 %v5929, %v5928
    %v5976 = vpack.c.b16 %v5931, %v5930
    %v5977 = vpack.c.b16 %v5933, %v5932
    %v5978 = vpack.c.b16 %v5935, %v5934
    %v5979 = vpack.c.b16 %v5937, %v5936
    %v5980 = vpack.c.b16 %v5939, %v5938
    %v5981 = vpack.c.b16 %v5941, %v5940
    %v5982 = vpack.c.b16 %v5943, %v5942
    %v5983 = vpack.c.b16 %v5945, %v5944
    %v5984 = vpack.c.b16 %v5947, %v5946
    %v5985 = vpack.c.b16 %v5949, %v5948
    %v5986 = vpack.c.b16 %v5951, %v5950
    %v5987 = vpack.c.b16 %v5953, %v5952
    %v5988 = vpack.c.b16 %v5955, %v5954
    %v5989 = vpack.c.b16 %v5957, %v5956
    %6022 = vmatprep.subr.bf16.mxu0 0
    %6023 = vmatpush1.bf16.msra.mxu0 %v5958
    %6024 = vmatprep.subr.bf16.mxu0 0
    %6025 = vmatpush1.bf16.msra.mxu0 %v5959
    %6026 = vmatprep.subr.bf16.mxu0 0
    %6027 = vmatpush1.bf16.msra.mxu0 %v5960
    %6028 = vmatprep.subr.bf16.mxu0 0
    %6029 = vmatpush1.bf16.msra.mxu0 %v5961
    %6030 = vmatprep.subr.bf16.mxu0 0
    %6031 = vmatpush1.bf16.msra.mxu0 %v5962
    %6032 = vmatprep.subr.bf16.mxu0 0
    %6033 = vmatpush1.bf16.msra.mxu0 %v5963
    %6034 = vmatprep.subr.bf16.mxu0 0
    %6035 = vmatpush1.bf16.msra.mxu0 %v5964
    %6036 = vmatprep.subr.bf16.mxu0 0
    %6037 = vmatpush1.bf16.msra.mxu0 %v5965
    %6038 = vmatprep.subr.bf16.mxu0 0
    %6039 = vmatpush1.bf16.msra.mxu0 %v5966
    %6040 = vmatprep.subr.bf16.mxu0 0
    %6041 = vmatpush1.bf16.msra.mxu0 %v5967
    %6042 = vmatprep.subr.bf16.mxu0 0
    %6043 = vmatpush1.bf16.msra.mxu0 %v5968
    %6044 = vmatprep.subr.bf16.mxu0 0
    %6045 = vmatpush1.bf16.msra.mxu0 %v5969
    %6046 = vmatprep.subr.bf16.mxu0 0
    %6047 = vmatpush1.bf16.msra.mxu0 %v5970
    %6048 = vmatprep.subr.bf16.mxu0 0
    %6049 = vmatpush1.bf16.msra.mxu0 %v5971
    %6050 = vmatprep.subr.bf16.mxu0 0
    %6051 = vmatpush1.bf16.msra.mxu0 %v5972
    %6052 = vmatprep.subr.bf16.mxu0 0
    %6053 = vmatpush1.bf16.msra.mxu0 %v5973
    %6054 = vmatprep.mubr.bf16.mxu0 %v5423
    %6055 = vmatmul.mubr.bf16.gmra.mrb[0].mxu0 %v5422
    %v6056 = vpop.f32.mrb[0].mxu0
    %v6057 = vadd.f32 %v5825, %v6056
    %v6058 = vpop.f32.mrb[0].mxu0
    %v6059 = vpop.f32.mrb[0].mxu0
    %v6060 = vpop.f32.mrb[0].mxu0
    %6061 = vdwg.mxu0
    %6062 = vmatprep.subr.bf16.mxu0 0
    %6063 = vmatpush1.bf16.msra.mxu0 %v5974
    %6064 = vmatprep.subr.bf16.mxu0 0
    %6065 = vmatpush1.bf16.msra.mxu0 %v5975
    %6066 = vmatprep.subr.bf16.mxu0 0
    %6067 = vmatpush1.bf16.msra.mxu0 %v5976
    %6068 = vmatprep.subr.bf16.mxu0 0
    %6069 = vmatpush1.bf16.msra.mxu0 %v5977
    %6070 = vmatprep.subr.bf16.mxu0 0
    %6071 = vmatpush1.bf16.msra.mxu0 %v5978
    %6072 = vmatprep.subr.bf16.mxu0 0
    %6073 = vmatpush1.bf16.msra.mxu0 %v5979
    %6074 = vmatprep.subr.bf16.mxu0 0
    %6075 = vmatpush1.bf16.msra.mxu0 %v5980
    %6076 = vmatprep.subr.bf16.mxu0 0
    %6077 = vmatpush1.bf16.msra.mxu0 %v5981
    %6078 = vmatprep.subr.bf16.mxu0 0
    %6079 = vmatpush1.bf16.msra.mxu0 %v5982
    %6080 = vmatprep.subr.bf16.mxu0 0
    %6081 = vmatpush1.bf16.msra.mxu0 %v5983
    %6082 = vmatprep.subr.bf16.mxu0 0
    %6083 = vmatpush1.bf16.msra.mxu0 %v5984
    %6084 = vmatprep.subr.bf16.mxu0 0
    %6085 = vmatpush1.bf16.msra.mxu0 %v5985
    %6086 = vmatprep.subr.bf16.mxu0 0
    %6087 = vmatpush1.bf16.msra.mxu0 %v5986
    %6088 = vmatprep.subr.bf16.mxu0 0
    %6089 = vmatpush1.bf16.msra.mxu0 %v5987
    %6090 = vmatprep.subr.bf16.mxu0 0
    %6091 = vmatpush1.bf16.msra.mxu0 %v5988
    %6092 = vmatprep.subr.bf16.mxu0 0
    %6093 = vmatpush1.bf16.msra.mxu0 %v5989
    %6094 = vmatprep.mubr.bf16.mxu0 %v5425
    %6095 = vmatmul.mubr.bf16.gmra.mrb[0].mxu0 %v5424
    %v6096 = vpop.f32.mrb[0].mxu0
    %v6097 = vadd.f32 %v6057, %v6096
    %v6098 = vpop.f32.mrb[0].mxu0
    %v6099 = vpop.f32.mrb[0].mxu0
    %v6100 = vpop.f32.mrb[0].mxu0
    %6101 = vdwg.mxu0
    %v6102 = vld [vmem:[#allocation11] sm:$0x1]
    %v6104 = vlaneseq
    %v6105 = vshrl.u32 %v6104, 7
    %v6106 = vsub.s32 0, %v6105
    %v6107 = vrot.slane %v6102, %v6106
    %v6109 = vadd.f32 %v6097, %v6107
    %vm6110 = vcmask 9216
    %6111 = vst.msk [vmem:[#allocation12] sm:$0x3] %vm6110, %v6109
    // Predicated region
    $region46: #{tpu_custom_call.1} parent=1 // pred_check
      _
    $region47: #{tpu_custom_call.1} parent=1 // pred_check_branch
      %6113 = sbr.rel (0) target = $region49
    $region48: #{tpu_custom_call.1} parent=1 // pred_region
      %s6115 = ssub.s32 32, 32
      %6116 = vsyncadd [#allocation4], %s6115
      %s6118 = sshll.u32 [#allocation12], 4
      %s6119 = int_to_ptr.vmem [resolvable:$true] %s6118
      %6121 = dma.vmem_to_hbm [thread:$0]  %s6119, 32, %s6, [#allocation4]
    $region49: #{tpu_custom_call.1} parent=1 // pred_fallthru
      _
    // Predicated region
    $region50: #{tpu_custom_call.1} parent=1 // pred_check
      _
    $region51: #{tpu_custom_call.1} parent=1 // pred_check_branch
      %6123 = sbr.rel (0) target = $region53
    $region52: #{tpu_custom_call.1} parent=1 // pred_region
      %s6125 = ssub.s32 16, 16
      %6126 = vsyncadd [#allocation5], %s6125
      %6129 = dma.smem_to_hbm [#allocation13], 16, %s7, [#allocation5]
    $region53: #{tpu_custom_call.1} parent=1 // pred_fallthru
      _
    // Predicated region
    $region54: #{tpu_custom_call.1} parent=1 // pred_check
      _
    $region55: #{tpu_custom_call.1} parent=1 // pred_check_branch
      %6131 = sbr.rel (0) target = $region57
    $region56: #{tpu_custom_call.1} parent=1 // pred_region
      %6132 = dma.done [#allocation4], 32
    $region57: #{tpu_custom_call.1} parent=1 // pred_fallthru
      _
    // Predicated region
    $region58: #{tpu_custom_call.1} parent=1 // pred_check
      _
    $region59: #{tpu_custom_call.1} parent=1 // pred_check_branch
      %6134 = sbr.rel (0) target = $region61
    $region60: #{tpu_custom_call.1} parent=1 // pred_region
      %6135 = dma.done [#allocation5], 16
    $region61: #{tpu_custom_call.1} parent=1 // pred_fallthru
      _
    %6136 = sfence
    %6137 = vsyncpa [#allocation3], 1
    %6138 = vsyncpa [#allocation7], 1
    %6139 = vsyncpa [#allocation10], 1
    %6140 = vsyncpa [#allocation4], 1
    %6141 = vsyncpa [#allocation5], 1

</llo_original>
